<compile_context>
chip_gen: v6e
topology: v6e:2x2x1
jax: 0.10.0
libtpu: 0.0.40
codegen_flags: <defaults>
</compile_context>

<pallas_src>
import jax
import jax.numpy as jnp
from jax import lax
from jax.experimental import pallas as pl
from jax.experimental.pallas import tpu as pltpu

FEAT = 128            # perceptual feature width
PERC_W = 1.0          # perceptual_loss_weight
KL_W = 5e-4           # kl_loss_weight
_EPS = 1e-10
_TILE_TARGET = 8192   # lanes per grid step (compute-bound kernel -> big tiles)
_KL_ROW_TILE = 1024   # sublane rows per KL grid step


def _ceil_to(a, m):
    return -(-a // m) * m


def _feature_dtype():
    """bf16 feature pipeline on v6e/v7x (bf16 VPU), f32 elsewhere (v5e)."""
    try:
        kind = jax.devices()[0].device_kind.lower()
    except Exception:
        return jnp.float32
    if ("v6" in kind) or ("v7" in kind) or ("7x" in kind):
        return jnp.bfloat16
    return jnp.float32


_CDT = _feature_dtype()


def _pick_tile(thw, target=_TILE_TARGET):
    """Multiple-of-128 tile <= target; prefer an exact divisor of thw."""
    if thw % 128 == 0:
        if thw <= target:
            return thw
        for cand in range(target, 127, -128):
            if thw % cand == 0:
                return cand
    return min(_ceil_to(thw, 128), target)


# ---------------- fused L1 + LPIPS-style perceptual sums ----------------
def _fused_sums(video, recon, wf, wl, cdt):
    """Returns (sum |v-r|, sum over all positions of per-position LPIPS lin)."""
    B, C, T, H, W = video.shape
    thw = T * H * W

    # Free contiguous reshape; every reduction is a global sum so no
    # 'b c t h w -> (b t) c h w' transpose is needed.
    v = video.reshape(B, C, thw)
    r = recon.reshape(B, C, thw)

    tile = _pick_tile(thw)
    n_tiles = -(-thw // tile)
    # Feed v7x's second TensorCore when B == 1 by splitting the tile axis into
    # an outer "parallel" dim (no effect on single-TC v5e/v6e).
    n_outer = 2 if (B == 1 and n_tiles >= 2) else 1
    n_inner = -(-n_tiles // n_outer)
    thw_pad = n_outer * n_inner * tile
    if thw_pad != thw:
        pad = thw_pad - thw
        # Zero padding contributes exactly 0 to the L1 sum and to the
        # perceptual sum (relu(wf @ 0) = 0 -> all weighted products are 0).
        v = jnp.pad(v, ((0, 0), (0, 0), (0, pad)))
        r = jnp.pad(r, ((0, 0), (0, 0), (0, pad)))

    chunk = 256 if (cdt == jnp.bfloat16 and tile % 256 == 0) else 128
    chunk = min(chunk, tile)
    n_chunks = tile // chunk

    # Tiny constant weights, pre-transposed so the kernel never relayouts them.
    wf_t = jnp.asarray(wf, jnp.float32).T                                # (FEAT, C)
    aw = jnp.concatenate(
        [jnp.ones((1, FEAT), jnp.float32),
         jnp.asarray(wl, jnp.float32).reshape(1, FEAT)], axis=0)        # (2, FEAT)

    def kernel(x_ref, y_ref, wf_ref, a_ref, rec_ref, lin_ref):
        s = pl.program_id(2)

        wf_c = wf_ref[...].astype(cdt)    # (FEAT, C)
        aw_c = a_ref[...].astype(cdt)     # (2, FEAT): row0 = ones, row1 = wl

        rec_row = jnp.zeros((1, chunk), jnp.float32)
        lin_row = jnp.zeros((1, chunk), jnp.float32)

        # Static chunk loop over the lane axis: intermediates stay
        # (FEAT, chunk)-sized so they fit the vreg file instead of spilling
        # (FEAT, tile) f32 slabs to VMEM.  Offsets are static & 128-aligned.
        for ci in range(n_chunks):
            c0 = ci * chunk
            xc = x_ref[:, c0:c0 + chunk]                                 # (C, chunk)
            yc = y_ref[:, c0:c0 + chunk]

            # ---- L1 reconstruction partial (f32 on raw values) ----
            diff = xc.astype(jnp.float32) - yc.astype(jnp.float32)
            rec_row = rec_row + jnp.sum(jnp.abs(diff), axis=0, keepdims=True)

            # ---- LPIPS-style perceptual partial ----
            # Feature projection on the MXU: (FEAT,C)@(C,chunk).
            fx = jnp.maximum(
                jnp.dot(wf_c, xc.astype(cdt), preferred_element_type=cdt), 0)
            fy = jnp.maximum(
                jnp.dot(wf_c, yc.astype(cdt), preferred_element_type=cdt), 0)
            # All FEAT-axis reductions as (2,FEAT)@(FEAT,chunk) MXU dots:
            #   row0 -> sum_f (.)        row1 -> sum_f wl * (.)
            mx = jnp.dot(aw_c, fx * fx, preferred_element_type=jnp.float32)
            my = jnp.dot(aw_c, fy * fy, preferred_element_type=jnp.float32)
            mxy = jnp.dot(aw_c, fx * fy, preferred_element_type=jnp.float32)
            inv_nx = lax.rsqrt(mx[0:1, :] + _EPS)                        # (1, chunk)
            inv_ny = lax.rsqrt(my[0:1, :] + _EPS)
            # sum_f wl * (fx/||fx|| - fy/||fy||)^2, algebraically expanded so
            # the FEAT reduction is exactly the three dots above.
            lin_c = (mx[1:2, :] * (inv_nx * inv_nx)
                     + my[1:2, :] * (inv_ny * inv_ny)
                     - 2.0 * (mxy[1:2, :] * (inv_nx * inv_ny)))
            lin_row = lin_row + lin_c

        rec_part = jnp.sum(rec_row, axis=1, keepdims=True)               # (1, 1)
        lin_part = jnp.sum(lin_row, axis=1, keepdims=True)               # (1, 1)

        @pl.when(s == 0)
        def _():
            rec_ref[...] = jnp.zeros_like(rec_ref)
            lin_ref[...] = jnp.zeros_like(lin_ref)

        rec_ref[...] += rec_part
        lin_ref[...] += lin_part

    rec_p, lin_p = pl.pallas_call(
        kernel,
        out_shape=(jax.ShapeDtypeStruct((B, n_outer, 1, 1), jnp.float32),
                   jax.ShapeDtypeStruct((B, n_outer, 1, 1), jnp.float32)),
        grid=(B, n_outer, n_inner),
        in_specs=[
            pl.BlockSpec((None, C, tile), lambda b, p, s: (b, 0, p * n_inner + s)),
            pl.BlockSpec((None, C, tile), lambda b, p, s: (b, 0, p * n_inner + s)),
            pl.BlockSpec((FEAT, C), lambda b, p, s: (0, 0)),
            pl.BlockSpec((2, FEAT), lambda b, p, s: (0, 0)),
        ],
        out_specs=(
            pl.BlockSpec((None, None, 1, 1), lambda b, p, s: (b, p, 0, 0)),
            pl.BlockSpec((None, None, 1, 1), lambda b, p, s: (b, p, 0, 0)),
        ),
        compiler_params=pltpu.CompilerParams(
            dimension_semantics=("parallel", "parallel", "arbitrary")),
    )(v, r, wf_t, aw)

    return jnp.sum(rec_p), jnp.sum(lin_p)


# ---------------- KL (diagonal Gaussian posterior) kernel ----------------
def _kl_kernel(mu_ref, lv_ref, out_ref):
    s = pl.program_id(0)
    mu = mu_ref[...].astype(jnp.float32)
    lv = lv_ref[...].astype(jnp.float32)
    # 2*KL summand: mu^2 + var - 1 - logvar.  Zero padding (mu=0, lv=0)
    # contributes exactly 0, so no masking is needed.
    part = jnp.sum(mu * mu + jnp.exp(lv) - lv - 1.0, keepdims=True)      # (1, 1)

    @pl.when(s == 0)
    def _():
        out_ref[...] = jnp.zeros_like(out_ref)

    out_ref[...] += part


def _kl_sum(post_mean, post_logvar):
    mu = jnp.asarray(post_mean, jnp.float32).reshape(-1)
    lv = jnp.asarray(post_logvar, jnp.float32).reshape(-1)
    n = mu.shape[0]

    # Sublane/lane-dense layout: rows a multiple of 8, 128 lanes.
    lp = _ceil_to(n, 8 * 128)
    rows = lp // 128
    rtile = min(rows, _KL_ROW_TILE)
    rows = _ceil_to(rows, rtile)
    lp = rows * 128
    if lp != n:
        mu = jnp.pad(mu, (0, lp - n))
        lv = jnp.pad(lv, (0, lp - n))
    mu2 = mu.reshape(rows, 128)
    lv2 = lv.reshape(rows, 128)

    out = pl.pallas_call(
        _kl_kernel,
        out_shape=jax.ShapeDtypeStruct((1, 1), jnp.float32),
        grid=(rows // rtile,),
        in_specs=[pl.BlockSpec((rtile, 128), lambda s: (s, 0)),
                  pl.BlockSpec((rtile, 128), lambda s: (s, 0))],
        out_specs=pl.BlockSpec((1, 1), lambda s: (0, 0)),
        compiler_params=pltpu.CompilerParams(
            dimension_semantics=("arbitrary",)),
    )(mu2, lv2)
    return out[0, 0]


# ---------------- wrapper (module forward) ----------------
def vae_loss(video, recon_video, post_mean, post_logvar, logvar_param, wf, wl):
    B, C, T, H, W = video.shape
    N = B * T
    HW = H * W
    CHW = C * H * W

    rec_sum, lin_sum = _fused_sums(video, recon_video, wf, wl, _CDT)
    # per-sample LPIPS = spatial mean over (h, w); summed over the (b t) batch.
    perc_sum = lin_sum / HW

    lv = jnp.reshape(jnp.asarray(logvar_param, jnp.float32), ())
    inv_elv = jnp.exp(-lv)
    # nll = (|v-r| + perc_n * w) / exp(lv) + lv, summed over (n,c,h,w), then /N
    nll_loss = (rec_sum + PERC_W * CHW * perc_sum) * inv_elv / N + CHW * lv
    recon_loss = rec_sum / N                      # batch_mean over (b t)
    perceptual_loss = (perc_sum / N) * CHW        # batch_mean(perc) * numel_elements

    # KL of the diagonal Gaussian posterior, batch_mean over the latent batch.
    Bz = post_mean.shape[0]
    kl_loss = 0.5 * _kl_sum(post_mean, post_logvar) / Bz
    weighted_kl_loss = kl_loss * KL_W

    return {
        'nll_loss': nll_loss,
        'kl_loss': weighted_kl_loss,
        'recon_loss': recon_loss,
        'perceptual_loss': perceptual_loss,
    }


if __name__ == "__main__":
    key = jax.random.PRNGKey(0)
    loss_fn = jax.jit(vae_loss)

    # (B, C, T, H, W): single-tile path / multi-tile + parallel-split +
    # s-accumulation path / non-128-divisible THW (zero-pad) path.
    configs = [
        (2, 3, 2, 16, 16),
        (1, 3, 8, 64, 64),
        (2, 3, 2, 12, 12),
    ]
    for (B, C, T, H, W) in configs:
        key, kv, kr, km, klv, kwf, kwl = jax.random.split(key, 7)
        video = jax.random.normal(kv, (B, C, T, H, W), jnp.float32)
        recon_video = video + 0.1 * jax.random.normal(kr, (B, C, T, H, W),
                                                      jnp.float32)
        # posterior (diagonal Gaussian) parameters on a small latent
        Cz, Hz, Wz = 4, max(H // 4, 1), max(W // 4, 1)
        post_mean = jax.random.normal(km, (B, Cz, T, Hz, Wz), jnp.float32)
        post_logvar = 0.1 * jax.random.normal(klv, (B, Cz, T, Hz, Wz),
                                              jnp.float32)
        # deterministic parameter init (logvar_init = 0.0; synthetic LPIPS weights)
        logvar_param = jnp.zeros((), jnp.float32)
        wf = 0.1 * jax.random.normal(kwf, (C, FEAT), jnp.float32)
        wl = 0.05 * jnp.abs(jax.random.normal(kwl, (1, FEAT), jnp.float32))

        out = loss_fn(video, recon_video, post_mean, post_logvar,
                      logvar_param, wf, wl)
        jax.block_until_ready(out)

    print("KERNEL_OK")
</pallas_src>

<mosaic_0001>
module attributes {stable_mosaic.version = 11 : i64} {
  func.func @kernel(%arg0: i32, %arg1: i32, %arg2: i32, %arg3: memref<1x3x512xf32, #tpu.memory_space<vmem>>, %arg4: memref<1x3x512xf32, #tpu.memory_space<vmem>>, %arg5: memref<128x3xf32, #tpu.memory_space<vmem>>, %arg6: memref<2x128xf32, #tpu.memory_space<vmem>>, %arg7: memref<1x1x1x1xf32, #tpu.memory_space<vmem>>, %arg8: memref<1x1x1x1xf32, #tpu.memory_space<vmem>>) attributes {dimension_semantics = [#tpu.dimension_semantics<parallel>, #tpu.dimension_semantics<parallel>, #tpu.dimension_semantics<arbitrary>], iteration_bounds = array<i64: 2, 1, 1>, scalar_prefetch = 0 : i64, scratch_operands = 0 : i64, tpu.core_type = #tpu.core_type<tc>, window_params = [{transform_indices = @transform_0, window_bounds = array<i64: 1, 3, 512>}, {transform_indices = @transform_1, window_bounds = array<i64: 1, 3, 512>}, {pipeline_mode = #tpu.pipeline_mode<synchronous>, transform_indices = @transform_2, window_bounds = array<i64: 128, 3>}, {pipeline_mode = #tpu.pipeline_mode<synchronous>, transform_indices = @transform_3, window_bounds = array<i64: 2, 128>}, {transform_indices = @transform_4, window_bounds = array<i64: 1, 1, 1, 1>}, {transform_indices = @transform_5, window_bounds = array<i64: 1, 1, 1, 1>}]} {
    %c0 = arith.constant 0 : index
    %c0_0 = arith.constant 0 : index
    %0 = vector.load %arg5[%c0, %c0_0] : memref<128x3xf32, #tpu.memory_space<vmem>>, vector<128x3xf32>
    %c0_1 = arith.constant 0 : index
    %c0_2 = arith.constant 0 : index
    %1 = vector.load %arg6[%c0_1, %c0_2] : memref<2x128xf32, #tpu.memory_space<vmem>>, vector<2x128xf32>
    %cst = arith.constant 0.000000e+00 : f32
    %2 = vector.broadcast %cst : f32 to vector<1x128xf32>
    %cst_3 = arith.constant 0.000000e+00 : f32
    %3 = vector.broadcast %cst_3 : f32 to vector<1x128xf32>
    %c0_4 = arith.constant 0 : index
    %c0_5 = arith.constant 0 : index
    %c0_6 = arith.constant 0 : index
    %4 = vector.load %arg3[%c0_4, %c0_5, %c0_6] : memref<1x3x512xf32, #tpu.memory_space<vmem>>, vector<1x3x128xf32>
    %5 = vector.shape_cast %4 : vector<1x3x128xf32> to vector<3x128xf32>
    %c0_7 = arith.constant 0 : index
    %c0_8 = arith.constant 0 : index
    %c0_9 = arith.constant 0 : index
    %6 = vector.load %arg4[%c0_7, %c0_8, %c0_9] : memref<1x3x512xf32, #tpu.memory_space<vmem>>, vector<1x3x128xf32>
    %7 = vector.shape_cast %6 : vector<1x3x128xf32> to vector<3x128xf32>
    %8 = arith.subf %5, %7 : vector<3x128xf32>
    %9 = math.absf %8 : vector<3x128xf32>
    %cst_10 = arith.constant dense<0.000000e+00> : vector<128xf32>
    %10 = vector.multi_reduction <add>, %9, %cst_10 [0] : vector<3x128xf32> to vector<128xf32>
    %11 = vector.shape_cast %10 : vector<128xf32> to vector<1x128xf32>
    %12 = arith.addf %2, %11 : vector<1x128xf32>
    %cst_11 = arith.constant dense<0.000000e+00> : vector<128x128xf32>
    %13 = tpu.matmul %0, %5, %cst_11 {dimension_numbers = #tpu.dot_dimension_numbers<[1], [0], [0], [1], [0, 0, 1, 1], [], []>} : vector<128x3xf32>, vector<3x128xf32>, vector<128x128xf32> -> vector<128x128xf32>
    %cst_12 = arith.constant 0.000000e+00 : f32
    %14 = vector.broadcast %cst_12 : f32 to vector<128x128xf32>
    %15 = arith.maximumf %13, %14 : vector<128x128xf32>
    %cst_13 = arith.constant dense<0.000000e+00> : vector<128x128xf32>
    %16 = tpu.matmul %0, %7, %cst_13 {dimension_numbers = #tpu.dot_dimension_numbers<[1], [0], [0], [1], [0, 0, 1, 1], [], []>} : vector<128x3xf32>, vector<3x128xf32>, vector<128x128xf32> -> vector<128x128xf32>
    %cst_14 = arith.constant 0.000000e+00 : f32
    %17 = vector.broadcast %cst_14 : f32 to vector<128x128xf32>
    %18 = arith.maximumf %16, %17 : vector<128x128xf32>
    %19 = arith.mulf %15, %15 : vector<128x128xf32>
    %cst_15 = arith.constant dense<0.000000e+00> : vector<2x128xf32>
    %20 = tpu.matmul %1, %19, %cst_15 {dimension_numbers = #tpu.dot_dimension_numbers<[1], [0], [0], [1], [0, 0, 1, 1], [], []>} : vector<2x128xf32>, vector<128x128xf32>, vector<2x128xf32> -> vector<2x128xf32>
    %21 = arith.mulf %18, %18 : vector<128x128xf32>
    %cst_16 = arith.constant dense<0.000000e+00> : vector<2x128xf32>
    %22 = tpu.matmul %1, %21, %cst_16 {dimension_numbers = #tpu.dot_dimension_numbers<[1], [0], [0], [1], [0, 0, 1, 1], [], []>} : vector<2x128xf32>, vector<128x128xf32>, vector<2x128xf32> -> vector<2x128xf32>
    %23 = arith.mulf %15, %18 : vector<128x128xf32>
    %cst_17 = arith.constant dense<0.000000e+00> : vector<2x128xf32>
    %24 = tpu.matmul %1, %23, %cst_17 {dimension_numbers = #tpu.dot_dimension_numbers<[1], [0], [0], [1], [0, 0, 1, 1], [], []>} : vector<2x128xf32>, vector<128x128xf32>, vector<2x128xf32> -> vector<2x128xf32>
    %25 = vector.extract_strided_slice %20 {offsets = [0, 0], sizes = [1, 128], strides = [1, 1]} : vector<2x128xf32> to vector<1x128xf32>
    %cst_18 = arith.constant 1.000000e-10 : f32
    %26 = vector.broadcast %cst_18 : f32 to vector<1x128xf32>
    %27 = arith.addf %25, %26 : vector<1x128xf32>
    %28 = math.rsqrt %27 : vector<1x128xf32>
    %29 = vector.extract_strided_slice %22 {offsets = [0, 0], sizes = [1, 128], strides = [1, 1]} : vector<2x128xf32> to vector<1x128xf32>
    %cst_19 = arith.constant 1.000000e-10 : f32
    %30 = vector.broadcast %cst_19 : f32 to vector<1x128xf32>
    %31 = arith.addf %29, %30 : vector<1x128xf32>
    %32 = math.rsqrt %31 : vector<1x128xf32>
    %33 = vector.extract_strided_slice %20 {offsets = [1, 0], sizes = [1, 128], strides = [1, 1]} : vector<2x128xf32> to vector<1x128xf32>
    %34 = arith.mulf %28, %28 : vector<1x128xf32>
    %35 = arith.mulf %33, %34 : vector<1x128xf32>
    %36 = vector.extract_strided_slice %22 {offsets = [1, 0], sizes = [1, 128], strides = [1, 1]} : vector<2x128xf32> to vector<1x128xf32>
    %37 = arith.mulf %32, %32 : vector<1x128xf32>
    %38 = arith.mulf %36, %37 : vector<1x128xf32>
    %39 = arith.addf %35, %38 : vector<1x128xf32>
    %40 = vector.extract_strided_slice %24 {offsets = [1, 0], sizes = [1, 128], strides = [1, 1]} : vector<2x128xf32> to vector<1x128xf32>
    %41 = arith.mulf %28, %32 : vector<1x128xf32>
    %42 = arith.mulf %40, %41 : vector<1x128xf32>
    %cst_20 = arith.constant 2.000000e+00 : f32
    %43 = vector.broadcast %cst_20 : f32 to vector<1x128xf32>
    %44 = arith.mulf %43, %42 : vector<1x128xf32>
    %45 = arith.subf %39, %44 : vector<1x128xf32>
    %46 = arith.addf %3, %45 : vector<1x128xf32>
    %c0_21 = arith.constant 0 : index
    %c0_22 = arith.constant 0 : index
    %c128 = arith.constant 128 : index
    %47 = vector.load %arg3[%c0_21, %c0_22, %c128] : memref<1x3x512xf32, #tpu.memory_space<vmem>>, vector<1x3x128xf32>
    %48 = vector.shape_cast %47 : vector<1x3x128xf32> to vector<3x128xf32>
    %c0_23 = arith.constant 0 : index
    %c0_24 = arith.constant 0 : index
    %c128_25 = arith.constant 128 : index
    %49 = vector.load %arg4[%c0_23, %c0_24, %c128_25] : memref<1x3x512xf32, #tpu.memory_space<vmem>>, vector<1x3x128xf32>
    %50 = vector.shape_cast %49 : vector<1x3x128xf32> to vector<3x128xf32>
    %51 = arith.subf %48, %50 : vector<3x128xf32>
    %52 = math.absf %51 : vector<3x128xf32>
    %cst_26 = arith.constant dense<0.000000e+00> : vector<128xf32>
    %53 = vector.multi_reduction <add>, %52, %cst_26 [0] : vector<3x128xf32> to vector<128xf32>
    %54 = vector.shape_cast %53 : vector<128xf32> to vector<1x128xf32>
    %55 = arith.addf %12, %54 : vector<1x128xf32>
    %cst_27 = arith.constant dense<0.000000e+00> : vector<128x128xf32>
    %56 = tpu.matmul %0, %48, %cst_27 {dimension_numbers = #tpu.dot_dimension_numbers<[1], [0], [0], [1], [0, 0, 1, 1], [], []>} : vector<128x3xf32>, vector<3x128xf32>, vector<128x128xf32> -> vector<128x128xf32>
    %cst_28 = arith.constant 0.000000e+00 : f32
    %57 = vector.broadcast %cst_28 : f32 to vector<128x128xf32>
    %58 = arith.maximumf %56, %57 : vector<128x128xf32>
    %cst_29 = arith.constant dense<0.000000e+00> : vector<128x128xf32>
    %59 = tpu.matmul %0, %50, %cst_29 {dimension_numbers = #tpu.dot_dimension_numbers<[1], [0], [0], [1], [0, 0, 1, 1], [], []>} : vector<128x3xf32>, vector<3x128xf32>, vector<128x128xf32> -> vector<128x128xf32>
    %cst_30 = arith.constant 0.000000e+00 : f32
    %60 = vector.broadcast %cst_30 : f32 to vector<128x128xf32>
    %61 = arith.maximumf %59, %60 : vector<128x128xf32>
    %62 = arith.mulf %58, %58 : vector<128x128xf32>
    %cst_31 = arith.constant dense<0.000000e+00> : vector<2x128xf32>
    %63 = tpu.matmul %1, %62, %cst_31 {dimension_numbers = #tpu.dot_dimension_numbers<[1], [0], [0], [1], [0, 0, 1, 1], [], []>} : vector<2x128xf32>, vector<128x128xf32>, vector<2x128xf32> -> vector<2x128xf32>
    %64 = arith.mulf %61, %61 : vector<128x128xf32>
    %cst_32 = arith.constant dense<0.000000e+00> : vector<2x128xf32>
    %65 = tpu.matmul %1, %64, %cst_32 {dimension_numbers = #tpu.dot_dimension_numbers<[1], [0], [0], [1], [0, 0, 1, 1], [], []>} : vector<2x128xf32>, vector<128x128xf32>, vector<2x128xf32> -> vector<2x128xf32>
    %66 = arith.mulf %58, %61 : vector<128x128xf32>
    %cst_33 = arith.constant dense<0.000000e+00> : vector<2x128xf32>
    %67 = tpu.matmul %1, %66, %cst_33 {dimension_numbers = #tpu.dot_dimension_numbers<[1], [0], [0], [1], [0, 0, 1, 1], [], []>} : vector<2x128xf32>, vector<128x128xf32>, vector<2x128xf32> -> vector<2x128xf32>
    %68 = vector.extract_strided_slice %63 {offsets = [0, 0], sizes = [1, 128], strides = [1, 1]} : vector<2x128xf32> to vector<1x128xf32>
    %cst_34 = arith.constant 1.000000e-10 : f32
    %69 = vector.broadcast %cst_34 : f32 to vector<1x128xf32>
    %70 = arith.addf %68, %69 : vector<1x128xf32>
    %71 = math.rsqrt %70 : vector<1x128xf32>
    %72 = vector.extract_strided_slice %65 {offsets = [0, 0], sizes = [1, 128], strides = [1, 1]} : vector<2x128xf32> to vector<1x128xf32>
    %cst_35 = arith.constant 1.000000e-10 : f32
    %73 = vector.broadcast %cst_35 : f32 to vector<1x128xf32>
    %74 = arith.addf %72, %73 : vector<1x128xf32>
    %75 = math.rsqrt %74 : vector<1x128xf32>
    %76 = vector.extract_strided_slice %63 {offsets = [1, 0], sizes = [1, 128], strides = [1, 1]} : vector<2x128xf32> to vector<1x128xf32>
    %77 = arith.mulf %71, %71 : vector<1x128xf32>
    %78 = arith.mulf %76, %77 : vector<1x128xf32>
    %79 = vector.extract_strided_slice %65 {offsets = [1, 0], sizes = [1, 128], strides = [1, 1]} : vector<2x128xf32> to vector<1x128xf32>
    %80 = arith.mulf %75, %75 : vector<1x128xf32>
    %81 = arith.mulf %79, %80 : vector<1x128xf32>
    %82 = arith.addf %78, %81 : vector<1x128xf32>
    %83 = vector.extract_strided_slice %67 {offsets = [1, 0], sizes = [1, 128], strides = [1, 1]} : vector<2x128xf32> to vector<1x128xf32>
    %84 = arith.mulf %71, %75 : vector<1x128xf32>
    %85 = arith.mulf %83, %84 : vector<1x128xf32>
    %cst_36 = arith.constant 2.000000e+00 : f32
    %86 = vector.broadcast %cst_36 : f32 to vector<1x128xf32>
    %87 = arith.mulf %86, %85 : vector<1x128xf32>
    %88 = arith.subf %82, %87 : vector<1x128xf32>
    %89 = arith.addf %46, %88 : vector<1x128xf32>
    %c0_37 = arith.constant 0 : index
    %c0_38 = arith.constant 0 : index
    %c256 = arith.constant 256 : index
    %90 = vector.load %arg3[%c0_37, %c0_38, %c256] : memref<1x3x512xf32, #tpu.memory_space<vmem>>, vector<1x3x128xf32>
    %91 = vector.shape_cast %90 : vector<1x3x128xf32> to vector<3x128xf32>
    %c0_39 = arith.constant 0 : index
    %c0_40 = arith.constant 0 : index
    %c256_41 = arith.constant 256 : index
    %92 = vector.load %arg4[%c0_39, %c0_40, %c256_41] : memref<1x3x512xf32, #tpu.memory_space<vmem>>, vector<1x3x128xf32>
    %93 = vector.shape_cast %92 : vector<1x3x128xf32> to vector<3x128xf32>
    %94 = arith.subf %91, %93 : vector<3x128xf32>
    %95 = math.absf %94 : vector<3x128xf32>
    %cst_42 = arith.constant dense<0.000000e+00> : vector<128xf32>
    %96 = vector.multi_reduction <add>, %95, %cst_42 [0] : vector<3x128xf32> to vector<128xf32>
    %97 = vector.shape_cast %96 : vector<128xf32> to vector<1x128xf32>
    %98 = arith.addf %55, %97 : vector<1x128xf32>
    %cst_43 = arith.constant dense<0.000000e+00> : vector<128x128xf32>
    %99 = tpu.matmul %0, %91, %cst_43 {dimension_numbers = #tpu.dot_dimension_numbers<[1], [0], [0], [1], [0, 0, 1, 1], [], []>} : vector<128x3xf32>, vector<3x128xf32>, vector<128x128xf32> -> vector<128x128xf32>
    %cst_44 = arith.constant 0.000000e+00 : f32
    %100 = vector.broadcast %cst_44 : f32 to vector<128x128xf32>
    %101 = arith.maximumf %99, %100 : vector<128x128xf32>
    %cst_45 = arith.constant dense<0.000000e+00> : vector<128x128xf32>
    %102 = tpu.matmul %0, %93, %cst_45 {dimension_numbers = #tpu.dot_dimension_numbers<[1], [0], [0], [1], [0, 0, 1, 1], [], []>} : vector<128x3xf32>, vector<3x128xf32>, vector<128x128xf32> -> vector<128x128xf32>
    %cst_46 = arith.constant 0.000000e+00 : f32
    %103 = vector.broadcast %cst_46 : f32 to vector<128x128xf32>
    %104 = arith.maximumf %102, %103 : vector<128x128xf32>
    %105 = arith.mulf %101, %101 : vector<128x128xf32>
    %cst_47 = arith.constant dense<0.000000e+00> : vector<2x128xf32>
    %106 = tpu.matmul %1, %105, %cst_47 {dimension_numbers = #tpu.dot_dimension_numbers<[1], [0], [0], [1], [0, 0, 1, 1], [], []>} : vector<2x128xf32>, vector<128x128xf32>, vector<2x128xf32> -> vector<2x128xf32>
    %107 = arith.mulf %104, %104 : vector<128x128xf32>
    %cst_48 = arith.constant dense<0.000000e+00> : vector<2x128xf32>
    %108 = tpu.matmul %1, %107, %cst_48 {dimension_numbers = #tpu.dot_dimension_numbers<[1], [0], [0], [1], [0, 0, 1, 1], [], []>} : vector<2x128xf32>, vector<128x128xf32>, vector<2x128xf32> -> vector<2x128xf32>
    %109 = arith.mulf %101, %104 : vector<128x128xf32>
    %cst_49 = arith.constant dense<0.000000e+00> : vector<2x128xf32>
    %110 = tpu.matmul %1, %109, %cst_49 {dimension_numbers = #tpu.dot_dimension_numbers<[1], [0], [0], [1], [0, 0, 1, 1], [], []>} : vector<2x128xf32>, vector<128x128xf32>, vector<2x128xf32> -> vector<2x128xf32>
    %111 = vector.extract_strided_slice %106 {offsets = [0, 0], sizes = [1, 128], strides = [1, 1]} : vector<2x128xf32> to vector<1x128xf32>
    %cst_50 = arith.constant 1.000000e-10 : f32
    %112 = vector.broadcast %cst_50 : f32 to vector<1x128xf32>
    %113 = arith.addf %111, %112 : vector<1x128xf32>
    %114 = math.rsqrt %113 : vector<1x128xf32>
    %115 = vector.extract_strided_slice %108 {offsets = [0, 0], sizes = [1, 128], strides = [1, 1]} : vector<2x128xf32> to vector<1x128xf32>
    %cst_51 = arith.constant 1.000000e-10 : f32
    %116 = vector.broadcast %cst_51 : f32 to vector<1x128xf32>
    %117 = arith.addf %115, %116 : vector<1x128xf32>
    %118 = math.rsqrt %117 : vector<1x128xf32>
    %119 = vector.extract_strided_slice %106 {offsets = [1, 0], sizes = [1, 128], strides = [1, 1]} : vector<2x128xf32> to vector<1x128xf32>
    %120 = arith.mulf %114, %114 : vector<1x128xf32>
    %121 = arith.mulf %119, %120 : vector<1x128xf32>
    %122 = vector.extract_strided_slice %108 {offsets = [1, 0], sizes = [1, 128], strides = [1, 1]} : vector<2x128xf32> to vector<1x128xf32>
    %123 = arith.mulf %118, %118 : vector<1x128xf32>
    %124 = arith.mulf %122, %123 : vector<1x128xf32>
    %125 = arith.addf %121, %124 : vector<1x128xf32>
    %126 = vector.extract_strided_slice %110 {offsets = [1, 0], sizes = [1, 128], strides = [1, 1]} : vector<2x128xf32> to vector<1x128xf32>
    %127 = arith.mulf %114, %118 : vector<1x128xf32>
    %128 = arith.mulf %126, %127 : vector<1x128xf32>
    %cst_52 = arith.constant 2.000000e+00 : f32
    %129 = vector.broadcast %cst_52 : f32 to vector<1x128xf32>
    %130 = arith.mulf %129, %128 : vector<1x128xf32>
    %131 = arith.subf %125, %130 : vector<1x128xf32>
    %132 = arith.addf %89, %131 : vector<1x128xf32>
    %c0_53 = arith.constant 0 : index
    %c0_54 = arith.constant 0 : index
    %c384 = arith.constant 384 : index
    %133 = vector.load %arg3[%c0_53, %c0_54, %c384] : memref<1x3x512xf32, #tpu.memory_space<vmem>>, vector<1x3x128xf32>
    %134 = vector.shape_cast %133 : vector<1x3x128xf32> to vector<3x128xf32>
    %c0_55 = arith.constant 0 : index
    %c0_56 = arith.constant 0 : index
    %c384_57 = arith.constant 384 : index
    %135 = vector.load %arg4[%c0_55, %c0_56, %c384_57] : memref<1x3x512xf32, #tpu.memory_space<vmem>>, vector<1x3x128xf32>
    %136 = vector.shape_cast %135 : vector<1x3x128xf32> to vector<3x128xf32>
    %137 = arith.subf %134, %136 : vector<3x128xf32>
    %138 = math.absf %137 : vector<3x128xf32>
    %cst_58 = arith.constant dense<0.000000e+00> : vector<128xf32>
    %139 = vector.multi_reduction <add>, %138, %cst_58 [0] : vector<3x128xf32> to vector<128xf32>
    %140 = vector.shape_cast %139 : vector<128xf32> to vector<1x128xf32>
    %141 = arith.addf %98, %140 : vector<1x128xf32>
    %cst_59 = arith.constant dense<0.000000e+00> : vector<128x128xf32>
    %142 = tpu.matmul %0, %134, %cst_59 {dimension_numbers = #tpu.dot_dimension_numbers<[1], [0], [0], [1], [0, 0, 1, 1], [], []>} : vector<128x3xf32>, vector<3x128xf32>, vector<128x128xf32> -> vector<128x128xf32>
    %cst_60 = arith.constant 0.000000e+00 : f32
    %143 = vector.broadcast %cst_60 : f32 to vector<128x128xf32>
    %144 = arith.maximumf %142, %143 : vector<128x128xf32>
    %cst_61 = arith.constant dense<0.000000e+00> : vector<128x128xf32>
    %145 = tpu.matmul %0, %136, %cst_61 {dimension_numbers = #tpu.dot_dimension_numbers<[1], [0], [0], [1], [0, 0, 1, 1], [], []>} : vector<128x3xf32>, vector<3x128xf32>, vector<128x128xf32> -> vector<128x128xf32>
    %cst_62 = arith.constant 0.000000e+00 : f32
    %146 = vector.broadcast %cst_62 : f32 to vector<128x128xf32>
    %147 = arith.maximumf %145, %146 : vector<128x128xf32>
    %148 = arith.mulf %144, %144 : vector<128x128xf32>
    %cst_63 = arith.constant dense<0.000000e+00> : vector<2x128xf32>
    %149 = tpu.matmul %1, %148, %cst_63 {dimension_numbers = #tpu.dot_dimension_numbers<[1], [0], [0], [1], [0, 0, 1, 1], [], []>} : vector<2x128xf32>, vector<128x128xf32>, vector<2x128xf32> -> vector<2x128xf32>
    %150 = arith.mulf %147, %147 : vector<128x128xf32>
    %cst_64 = arith.constant dense<0.000000e+00> : vector<2x128xf32>
    %151 = tpu.matmul %1, %150, %cst_64 {dimension_numbers = #tpu.dot_dimension_numbers<[1], [0], [0], [1], [0, 0, 1, 1], [], []>} : vector<2x128xf32>, vector<128x128xf32>, vector<2x128xf32> -> vector<2x128xf32>
    %152 = arith.mulf %144, %147 : vector<128x128xf32>
    %cst_65 = arith.constant dense<0.000000e+00> : vector<2x128xf32>
    %153 = tpu.matmul %1, %152, %cst_65 {dimension_numbers = #tpu.dot_dimension_numbers<[1], [0], [0], [1], [0, 0, 1, 1], [], []>} : vector<2x128xf32>, vector<128x128xf32>, vector<2x128xf32> -> vector<2x128xf32>
    %154 = vector.extract_strided_slice %149 {offsets = [0, 0], sizes = [1, 128], strides = [1, 1]} : vector<2x128xf32> to vector<1x128xf32>
    %cst_66 = arith.constant 1.000000e-10 : f32
    %155 = vector.broadcast %cst_66 : f32 to vector<1x128xf32>
    %156 = arith.addf %154, %155 : vector<1x128xf32>
    %157 = math.rsqrt %156 : vector<1x128xf32>
    %158 = vector.extract_strided_slice %151 {offsets = [0, 0], sizes = [1, 128], strides = [1, 1]} : vector<2x128xf32> to vector<1x128xf32>
    %cst_67 = arith.constant 1.000000e-10 : f32
    %159 = vector.broadcast %cst_67 : f32 to vector<1x128xf32>
    %160 = arith.addf %158, %159 : vector<1x128xf32>
    %161 = math.rsqrt %160 : vector<1x128xf32>
    %162 = vector.extract_strided_slice %149 {offsets = [1, 0], sizes = [1, 128], strides = [1, 1]} : vector<2x128xf32> to vector<1x128xf32>
    %163 = arith.mulf %157, %157 : vector<1x128xf32>
    %164 = arith.mulf %162, %163 : vector<1x128xf32>
    %165 = vector.extract_strided_slice %151 {offsets = [1, 0], sizes = [1, 128], strides = [1, 1]} : vector<2x128xf32> to vector<1x128xf32>
    %166 = arith.mulf %161, %161 : vector<1x128xf32>
    %167 = arith.mulf %165, %166 : vector<1x128xf32>
    %168 = arith.addf %164, %167 : vector<1x128xf32>
    %169 = vector.extract_strided_slice %153 {offsets = [1, 0], sizes = [1, 128], strides = [1, 1]} : vector<2x128xf32> to vector<1x128xf32>
    %170 = arith.mulf %157, %161 : vector<1x128xf32>
    %171 = arith.mulf %169, %170 : vector<1x128xf32>
    %cst_68 = arith.constant 2.000000e+00 : f32
    %172 = vector.broadcast %cst_68 : f32 to vector<1x128xf32>
    %173 = arith.mulf %172, %171 : vector<1x128xf32>
    %174 = arith.subf %168, %173 : vector<1x128xf32>
    %175 = arith.addf %132, %174 : vector<1x128xf32>
    %cst_69 = arith.constant dense<0.000000e+00> : vector<1xf32>
    %176 = vector.multi_reduction <add>, %141, %cst_69 [1] : vector<1x128xf32> to vector<1xf32>
    %177 = vector.shape_cast %176 : vector<1xf32> to vector<1x1xf32>
    %cst_70 = arith.constant dense<0.000000e+00> : vector<1xf32>
    %178 = vector.multi_reduction <add>, %175, %cst_70 [1] : vector<1x128xf32> to vector<1xf32>
    %179 = vector.shape_cast %178 : vector<1xf32> to vector<1x1xf32>
    %c0_i32 = arith.constant 0 : i32
    %180 = arith.cmpi eq, %arg2, %c0_i32 : i32
    %181 = arith.extui %180 : i1 to i32
    %c0_i32_71 = arith.constant 0 : i32
    %182 = arith.cmpi ne, %181, %c0_i32_71 : i32
    scf.if %182 {
      %cst_88 = arith.constant 0.000000e+00 : f32
      %195 = vector.broadcast %cst_88 : f32 to vector<1x1xf32>
      %c0_89 = arith.constant 0 : index
      %c0_90 = arith.constant 0 : index
      %c0_91 = arith.constant 0 : index
      %c0_92 = arith.constant 0 : index
      %196 = vector.load %arg7[%c0_89, %c0_90, %c0_91, %c0_92] : memref<1x1x1x1xf32, #tpu.memory_space<vmem>>, vector<1x1x1x1xf32>
      %197 = vector.shape_cast %196 : vector<1x1x1x1xf32> to vector<1x1xf32>
      %198 = vector.shape_cast %195 : vector<1x1xf32> to vector<1x1x1x1xf32>
      tpu.vector_store %arg7[%c0_89, %c0_90, %c0_91, %c0_92], %198 {strides = array<i32>} : memref<1x1x1x1xf32, #tpu.memory_space<vmem>>, vector<1x1x1x1xf32>,
      %cst_93 = arith.constant 0.000000e+00 : f32
      %199 = vector.broadcast %cst_93 : f32 to vector<1x1xf32>
      %c0_94 = arith.constant 0 : index
      %c0_95 = arith.constant 0 : index
      %c0_96 = arith.constant 0 : index
      %c0_97 = arith.constant 0 : index
      %200 = vector.load %arg8[%c0_94, %c0_95, %c0_96, %c0_97] : memref<1x1x1x1xf32, #tpu.memory_space<vmem>>, vector<1x1x1x1xf32>
      %201 = vector.shape_cast %200 : vector<1x1x1x1xf32> to vector<1x1xf32>
      %202 = vector.shape_cast %199 : vector<1x1xf32> to vector<1x1x1x1xf32>
      tpu.vector_store %arg8[%c0_94, %c0_95, %c0_96, %c0_97], %202 {strides = array<i32>} : memref<1x1x1x1xf32, #tpu.memory_space<vmem>>, vector<1x1x1x1xf32>,
    } else {
    }
    %c0_72 = arith.constant 0 : index
    %c0_73 = arith.constant 0 : index
    %c0_74 = arith.constant 0 : index
    %c0_75 = arith.constant 0 : index
    %183 = vector.load %arg7[%c0_72, %c0_73, %c0_74, %c0_75] : memref<1x1x1x1xf32, #tpu.memory_space<vmem>>, vector<1x1x1x1xf32>
    %184 = vector.shape_cast %183 : vector<1x1x1x1xf32> to vector<1x1xf32>
    %185 = arith.addf %184, %177 : vector<1x1xf32>
    %c0_76 = arith.constant 0 : index
    %c0_77 = arith.constant 0 : index
    %c0_78 = arith.constant 0 : index
    %c0_79 = arith.constant 0 : index
    %186 = vector.load %arg7[%c0_76, %c0_77, %c0_78, %c0_79] : memref<1x1x1x1xf32, #tpu.memory_space<vmem>>, vector<1x1x1x1xf32>
    %187 = vector.shape_cast %186 : vector<1x1x1x1xf32> to vector<1x1xf32>
    %188 = vector.shape_cast %185 : vector<1x1xf32> to vector<1x1x1x1xf32>
    tpu.vector_store %arg7[%c0_76, %c0_77, %c0_78, %c0_79], %188 {strides = array<i32>} : memref<1x1x1x1xf32, #tpu.memory_space<vmem>>, vector<1x1x1x1xf32>,
    %c0_80 = arith.constant 0 : index
    %c0_81 = arith.constant 0 : index
    %c0_82 = arith.constant 0 : index
    %c0_83 = arith.constant 0 : index
    %189 = vector.load %arg8[%c0_80, %c0_81, %c0_82, %c0_83] : memref<1x1x1x1xf32, #tpu.memory_space<vmem>>, vector<1x1x1x1xf32>
    %190 = vector.shape_cast %189 : vector<1x1x1x1xf32> to vector<1x1xf32>
    %191 = arith.addf %190, %179 : vector<1x1xf32>
    %c0_84 = arith.constant 0 : index
    %c0_85 = arith.constant 0 : index
    %c0_86 = arith.constant 0 : index
    %c0_87 = arith.constant 0 : index
    %192 = vector.load %arg8[%c0_84, %c0_85, %c0_86, %c0_87] : memref<1x1x1x1xf32, #tpu.memory_space<vmem>>, vector<1x1x1x1xf32>
    %193 = vector.shape_cast %192 : vector<1x1x1x1xf32> to vector<1x1xf32>
    %194 = vector.shape_cast %191 : vector<1x1xf32> to vector<1x1x1x1xf32>
    tpu.vector_store %arg8[%c0_84, %c0_85, %c0_86, %c0_87], %194 {strides = array<i32>} : memref<1x1x1x1xf32, #tpu.memory_space<vmem>>, vector<1x1x1x1xf32>,
    return
  }
  func.func @transform_0(%arg0: i32, %arg1: i32, %arg2: i32) -> (i32, i32, i32) {
    %c1_i32 = arith.constant 1 : i32
    %0 = arith.muli %arg1, %c1_i32 : i32
    %1 = arith.addi %0, %arg2 : i32
    %c0_i32 = arith.constant 0 : i32
    %c0_i32_0 = arith.constant 0 : i32
    return %arg0, %c0_i32, %1 : i32, i32, i32
  }
  func.func @transform_1(%arg0: i32, %arg1: i32, %arg2: i32) -> (i32, i32, i32) {
    %c1_i32 = arith.constant 1 : i32
    %0 = arith.muli %arg1, %c1_i32 : i32
    %1 = arith.addi %0, %arg2 : i32
    %c0_i32 = arith.constant 0 : i32
    %c0_i32_0 = arith.constant 0 : i32
    return %arg0, %c0_i32, %1 : i32, i32, i32
  }
  func.func @transform_2(%arg0: i32, %arg1: i32, %arg2: i32) -> (i32, i32) {
    %c0_i32 = arith.constant 0 : i32
    %c0_i32_0 = arith.constant 0 : i32
    %c0_i32_1 = arith.constant 0 : i32
    return %c0_i32, %c0_i32_0 : i32, i32
  }
  func.func @transform_3(%arg0: i32, %arg1: i32, %arg2: i32) -> (i32, i32) {
    %c0_i32 = arith.constant 0 : i32
    %c0_i32_0 = arith.constant 0 : i32
    %c0_i32_1 = arith.constant 0 : i32
    return %c0_i32, %c0_i32_0 : i32, i32
  }
  func.func @transform_4(%arg0: i32, %arg1: i32, %arg2: i32) -> (i32, i32, i32, i32) {
    %c0_i32 = arith.constant 0 : i32
    %c0_i32_0 = arith.constant 0 : i32
    %c0_i32_1 = arith.constant 0 : i32
    return %arg0, %arg1, %c0_i32, %c0_i32_0 : i32, i32, i32, i32
  }
  func.func @transform_5(%arg0: i32, %arg1: i32, %arg2: i32) -> (i32, i32, i32, i32) {
    %c0_i32 = arith.constant 0 : i32
    %c0_i32_0 = arith.constant 0 : i32
    %c0_i32_1 = arith.constant 0 : i32
    return %arg0, %arg1, %c0_i32, %c0_i32_0 : i32, i32, i32, i32
  }
}

module attributes {stable_mosaic.version = 11 : i64} {
  func.func @_kl_kernel(%arg0: i32, %arg1: memref<8x128xf32, #tpu.memory_space<vmem>>, %arg2: memref<8x128xf32, #tpu.memory_space<vmem>>, %arg3: memref<1x1xf32, #tpu.memory_space<vmem>>) attributes {dimension_semantics = [#tpu.dimension_semantics<arbitrary>], iteration_bounds = array<i64: 1>, scalar_prefetch = 0 : i64, scratch_operands = 0 : i64, tpu.core_type = #tpu.core_type<tc>, window_params = [{transform_indices = @transform_0, window_bounds = array<i64: 8, 128>}, {transform_indices = @transform_1, window_bounds = array<i64: 8, 128>}, {pipeline_mode = #tpu.pipeline_mode<synchronous>, transform_indices = @transform_2, window_bounds = array<i64: 1, 1>}]} {
    %c0 = arith.constant 0 : index
    %c0_0 = arith.constant 0 : index
    %0 = vector.load %arg1[%c0, %c0_0] : memref<8x128xf32, #tpu.memory_space<vmem>>, vector<8x128xf32>
    %c0_1 = arith.constant 0 : index
    %c0_2 = arith.constant 0 : index
    %1 = vector.load %arg2[%c0_1, %c0_2] : memref<8x128xf32, #tpu.memory_space<vmem>>, vector<8x128xf32>
    %2 = arith.mulf %0, %0 : vector<8x128xf32>
    %3 = math.exp %1 : vector<8x128xf32>
    %4 = arith.addf %2, %3 : vector<8x128xf32>
    %5 = arith.subf %4, %1 : vector<8x128xf32>
    %cst = arith.constant 1.000000e+00 : f32
    %6 = vector.broadcast %cst : f32 to vector<8x128xf32>
    %7 = arith.subf %5, %6 : vector<8x128xf32>
    %8 = vector.shape_cast %7 : vector<8x128xf32> to vector<1x8x128xf32>
    %cst_3 = arith.constant dense<0.000000e+00> : vector<1xf32>
    %9 = vector.multi_reduction <add>, %8, %cst_3 [1, 2] : vector<1x8x128xf32> to vector<1xf32>
    %10 = vector.shape_cast %9 : vector<1xf32> to vector<1x1x1xf32>
    %11 = vector.extract %10[0, 0, 0] : f32 from vector<1x1x1xf32>
    %12 = vector.broadcast %11 : f32 to vector<1x1xf32>
    %c0_i32 = arith.constant 0 : i32
    %13 = arith.cmpi eq, %arg0, %c0_i32 : i32
    %14 = arith.extui %13 : i1 to i32
    %c0_i32_4 = arith.constant 0 : i32
    %15 = arith.cmpi ne, %14, %c0_i32_4 : i32
    scf.if %15 {
      %cst_9 = arith.constant 0.000000e+00 : f32
      %19 = vector.broadcast %cst_9 : f32 to vector<1x1xf32>
      %c0_10 = arith.constant 0 : index
      %c0_11 = arith.constant 0 : index
      %20 = vector.load %arg3[%c0_10, %c0_11] : memref<1x1xf32, #tpu.memory_space<vmem>>, vector<1x1xf32>
      tpu.vector_store %arg3[%c0_10, %c0_11], %19 {strides = array<i32>} : memref<1x1xf32, #tpu.memory_space<vmem>>, vector<1x1xf32>,
    } else {
    }
    %c0_5 = arith.constant 0 : index
    %c0_6 = arith.constant 0 : index
    %16 = vector.load %arg3[%c0_5, %c0_6] : memref<1x1xf32, #tpu.memory_space<vmem>>, vector<1x1xf32>
    %17 = arith.addf %16, %12 : vector<1x1xf32>
    %c0_7 = arith.constant 0 : index
    %c0_8 = arith.constant 0 : index
    %18 = vector.load %arg3[%c0_7, %c0_8] : memref<1x1xf32, #tpu.memory_space<vmem>>, vector<1x1xf32>
    tpu.vector_store %arg3[%c0_7, %c0_8], %17 {strides = array<i32>} : memref<1x1xf32, #tpu.memory_space<vmem>>, vector<1x1xf32>,
    return
  }
  func.func @transform_0(%arg0: i32) -> (i32, i32) {
    %c0_i32 = arith.constant 0 : i32
    %c0_i32_0 = arith.constant 0 : i32
    return %arg0, %c0_i32 : i32, i32
  }
  func.func @transform_1(%arg0: i32) -> (i32, i32) {
    %c0_i32 = arith.constant 0 : i32
    %c0_i32_0 = arith.constant 0 : i32
    return %arg0, %c0_i32 : i32, i32
  }
  func.func @transform_2(%arg0: i32) -> (i32, i32) {
    %c0_i32 = arith.constant 0 : i32
    %c0_i32_0 = arith.constant 0 : i32
    %c0_i32_1 = arith.constant 0 : i32
    return %c0_i32, %c0_i32_0 : i32, i32
  }
}

</mosaic_0001>

<llo_original>
// kernel: vae_loss.3
$region0: #{vae_loss.3}
  #allocation0 [shape = 'u32[]', space=smem, size = 0x4, offset = 0x4, fixed_abs, tag = 'smem constant byte address 0x4 - core index']
  #allocation1 [shape = 'u32[144,128]{1,0:T(1,128)}', space=vmem, size = 0x12000, scoped, tag = 'internal scratch']
  %s0 = inlined_call_operand.vmem [shape: f32[8,128], index: 0, kind: input, shape index: {}]
  %s1 = inlined_call_operand.vmem [shape: f32[8,128], index: 1, kind: input, shape index: {}]
  %s2 = inlined_call_operand.hbm [shape: f32[1,1], index: 2, kind: output, shape index: {}]
  %s3 = sld [smem:[#allocation0]]
  $region22: #{vae_loss.3} parent=0
    _
  %s5 = ssub.s32 1, %s3
  %s6 = scalar_select 0, %s5, %s3
  $region1: #{vae_loss.3} parent=0
    #allocation2 [shape = 'u8[512]{0}', space=vmem, size = 0x400, scoped, tag = 'output window, operand 0, single buffered']
    #allocation3 [shape = 's32[1]{0}', space=sflag, size = 0x4, scoped, tag = 'scoped memory for vae_loss.3']
    %7 = vsyncpa [#allocation3], 0
    // Predicated region
    $region2: #{vae_loss.3} parent=1 // pred_check
      _
    $region3: #{vae_loss.3} parent=1 // pred_check_branch
      %9 = sbr.rel (0) target = $region5
    $region4: #{vae_loss.3} parent=1 // pred_region
      _
    $region5: #{vae_loss.3} parent=1 // pred_fallthru
      _
    // Predicated region
    $region6: #{vae_loss.3} parent=1 // pred_check
      _
    $region7: #{vae_loss.3} parent=1 // pred_check_branch
      %11 = sbr.rel (0) target = $region9
    $region8: #{vae_loss.3} parent=1 // pred_region
      _
    $region9: #{vae_loss.3} parent=1 // pred_fallthru
      _
    %v12 = vld [vmem:[%s0] sm:$0xff]
    %v13 = vld [vmem:[%s1] sm:$0xff]
    %v14 = vmul.f32 %v12, %v12
    %v15 = vmul.f32 %v13, 1.442695
    %v16 = vpow.pop %v15
    %v17 = vadd.f32 %v14, %v16
    %v18 = vsub.f32 %v17, %v13
    %v19 = vsub.f32 %v18, 1.0
    %20 = vadd.xlane.f32.xlu0 %v19
    %v21 = vpop.xlane.xlu0 %20
    %v22 = vrot.slane %v21, 4
    %v23 = vadd.f32 %v21, %v22
    %v24 = vrot.slane %v23, 2
    %v25 = vadd.f32 %v23, %v24
    %v26 = vrot.slane %v25, 1
    %v27 = vadd.f32 %v25, %v26
    %s28 = vtos %v27
    %v29 = vstv %s28
    %p30 = scmp.eq.s32.totalorder 0, 0
    // Predicated region
    $region10: #{vae_loss.3} parent=1 // pred_check
      %p31 = pneg %p30
    $region11: #{vae_loss.3} parent=1 // pred_check_branch
      %33 = sbr.rel (%p31) target = $region13
    $region12: #{vae_loss.3} parent=1 // pred_region
      %vm34 = vcmask 0
      %35 = vst.msk [vmem:[#allocation2] sm:$0x1] %vm34, 0.0
    $region13: #{vae_loss.3} parent=1 // pred_fallthru
      _
    %v36 = vld [vmem:[#allocation2] sm:$0x1]
    %v37 = vadd.f32 %v36, %v29
    %vm38 = vcmask 0
    %39 = vst.msk [vmem:[#allocation2] sm:$0x1] %vm38, %v37
    // Predicated region
    $region14: #{vae_loss.3} parent=1 // pred_check
      _
    $region15: #{vae_loss.3} parent=1 // pred_check_branch
      %41 = sbr.rel (0) target = $region17
    $region16: #{vae_loss.3} parent=1 // pred_region
      %s43 = ssub.s32 16, 16
      %44 = vsyncadd [#allocation3], %s43
      %s46 = sshll.u32 [#allocation2], 4
      %s47 = int_to_ptr.vmem [resolvable:$true] %s46
      %49 = dma.vmem_to_hbm [thread:$0]  %s47, 16, %s2, [#allocation3]
    $region17: #{vae_loss.3} parent=1 // pred_fallthru
      _
    // Predicated region
    $region18: #{vae_loss.3} parent=1 // pred_check
      _
    $region19: #{vae_loss.3} parent=1 // pred_check_branch
      %51 = sbr.rel (0) target = $region21
    $region20: #{vae_loss.3} parent=1 // pred_region
      %52 = dma.done [#allocation3], 16
    $region21: #{vae_loss.3} parent=1 // pred_fallthru
      _
    %53 = vsyncpa [#allocation3], 1

// kernel: vae_loss.2
$region0: #{vae_loss.2}
  #allocation0 [shape = 'u32[]', space=smem, size = 0x4, offset = 0x4, fixed_abs, tag = 'smem constant byte address 0x4 - core index']
  #allocation1 [shape = 'u32[144,128]{1,0:T(1,128)}', space=vmem, size = 0x12000, scoped, tag = 'internal scratch']
  %s0 = inlined_call_operand.vmem [shape: f32[2,3,512], index: 0, kind: input, shape index: {}]
  %s1 = inlined_call_operand.vmem [shape: f32[2,3,512], index: 1, kind: input, shape index: {}]
  %s2 = inlined_call_operand.vmem [shape: f32[128,3], index: 2, kind: input, shape index: {}]
  %s3 = inlined_call_operand.vmem [shape: f32[2,128], index: 3, kind: input, shape index: {}]
  %s4 = inlined_call_operand.vmem [shape: f32[2,1,1,1], index: 4, kind: output, shape index: {0}]
  %s5 = inlined_call_operand.vmem [shape: f32[2,1,1,1], index: 5, kind: output, shape index: {1}]
  %6 = xla_tuple %s4, %s5
  %s7 = sld [smem:[#allocation0]]
  $region61: #{vae_loss.2} parent=0
    _
  %s9 = ssub.s32 1, %s7
  %s10 = scalar_select 0, %s9, %s7
  loop: start=0, step=1, limit=4
  $region2: #{vae_loss.2} parent=0 // loop_pre_header
    _
  $region3: #{vae_loss.2} parent=0 // loop_header
    %s12 = sphi 0, %s16
    %p13 = scmp.ge.s32.totalorder %s12, 4
    %s19 = sphi 0, %s38
    %s20 = sphi 0, %s34
    %s21 = sphi 0, %s30
    %s22 = sphi 0, %s19
    %s23 = sphi 0, %s20
    %s24 = sphi 0, %s21
    %s25 = sphi 0, %s22
    %s26 = sphi 0, %s23
    %s27 = sphi 0, %s24
    %s45 = sphi 0, %s47
    %s48 = sphi 0, %s45
    %s49 = sphi 0, %s48
    %s65 = sphi 0, %s49
    %s75 = sphi 0, %s77
    %s78 = sphi 0, %s75
    %s79 = sphi 0, %s78
    %s95 = sphi 0, %s79
    %s99 = sphi 0, %s99
    %s101 = sphi 0, %s99
    %s102 = sphi 0, %s101
    %s116 = sphi 0, %s102
    %s120 = sphi 0, %s120
    %s122 = sphi 0, %s120
    %s123 = sphi 0, %s122
    %s137 = sphi 0, %s123
    %s145 = sphi 0, %s147
    %s148 = sphi 0, %s145
    %s149 = sphi 0, %s148
    %s165 = sphi 0, %s149
    %s173 = sphi 0, %s175
    %s176 = sphi 0, %s173
    %s177 = sphi 0, %s176
    %s193 = sphi 0, %s177
  $region4: #{vae_loss.2} parent=0 // loop_header_branch
    %15 = sbr.rel (%p13) target = $region8
  $region5: #{vae_loss.2} parent=0 // loop_body
    %s17 = ssub.s32 %s12, 1
    %s18 = ssub.s32 %s12, 2
    %s28 = sadd.s32 1, %s21
    %p29 = scmp.ge.s32.totalorder %s28, 1
    %s30 = scalar_select %p29, 0, %s28
    %s31 = sadd.s32 1, %s20
    %s32 = scalar_select %p29, %s31, %s20
    %p33 = scmp.ge.s32.totalorder %s32, 1
    %s34 = scalar_select %p33, 0, %s32
    %s35 = sadd.s32 1, %s19
    %s36 = scalar_select %p33, %s35, %s19
    %p37 = scmp.ge.s32.totalorder %s36, 2
    %s38 = scalar_select %p37, 0, %s36
    %s39 = sadd.s32 %s20, %s21
    %s40 = sadd.s32 %s34, %s30
    %s41 = ssub.s32 %s19, %s38
    %s42 = ssub.s32 %s39, %s40
    %s43 = sor.u32 %s41, %s42
    %p44 = scmp.eq.s32.totalorder %s43, 0
    %s46 = sadd.s32 %s45, 1
    %s47 = scalar_select %p44, %s45, %s46
    %p50 = pneg %p44
    %p51 = scmp.eq.s32.totalorder %s12, 1
    %p52 = por %p50, %p51
    %p53 = scmp.ne.s32.totalorder %s45, %s48
    %p54 = scmp.eq.s32.totalorder %s12, 0
    %p55 = por %p53, %p54
    %p56 = scmp.ne.s32.totalorder %s45, %s48
    %p57 = scmp.eq.s32.totalorder %s17, 1
    %p58 = por %p56, %p57
    %p59 = scmp.ne.s32.totalorder %s48, %s49
    %p60 = scmp.eq.s32.totalorder %s17, 0
    %p61 = por %p59, %p60
    %p62 = scmp.ne.s32.totalorder %s48, %s49
    %p63 = scmp.eq.s32.totalorder %s18, 1
    %p64 = por %p62, %p63
    %p66 = scmp.ne.s32.totalorder %s49, %s65
    %p67 = scmp.eq.s32.totalorder %s18, 0
    %p68 = por %p66, %p67
    %s69 = sadd.s32 %s20, %s21
    %s70 = sadd.s32 %s34, %s30
    %s71 = ssub.s32 %s19, %s38
    %s72 = ssub.s32 %s69, %s70
    %s73 = sor.u32 %s71, %s72
    %p74 = scmp.eq.s32.totalorder %s73, 0
    %s76 = sadd.s32 %s75, 1
    %s77 = scalar_select %p74, %s75, %s76
    %p80 = pneg %p74
    %p81 = scmp.eq.s32.totalorder %s12, 1
    %p82 = por %p80, %p81
    %p83 = scmp.ne.s32.totalorder %s75, %s78
    %p84 = scmp.eq.s32.totalorder %s12, 0
    %p85 = por %p83, %p84
    %p86 = scmp.ne.s32.totalorder %s75, %s78
    %p87 = scmp.eq.s32.totalorder %s17, 1
    %p88 = por %p86, %p87
    %p89 = scmp.ne.s32.totalorder %s78, %s79
    %p90 = scmp.eq.s32.totalorder %s17, 0
    %p91 = por %p89, %p90
    %p92 = scmp.ne.s32.totalorder %s78, %s79
    %p93 = scmp.eq.s32.totalorder %s18, 1
    %p94 = por %p92, %p93
    %p96 = scmp.ne.s32.totalorder %s79, %s95
    %p97 = scmp.eq.s32.totalorder %s18, 0
    %p98 = por %p96, %p97
    %s100 = sadd.s32 %s99, 1
    %p103 = scmp.eq.s32.totalorder %s12, 1
    %p104 = scmp.ne.s32.totalorder %s99, %s101
    %p105 = scmp.eq.s32.totalorder %s12, 0
    %p106 = por %p104, %p105
    %p107 = scmp.ne.s32.totalorder %s99, %s101
    %p108 = scmp.eq.s32.totalorder %s17, 1
    %p109 = por %p107, %p108
    %p110 = scmp.ne.s32.totalorder %s101, %s102
    %p111 = scmp.eq.s32.totalorder %s17, 0
    %p112 = por %p110, %p111
    %p113 = scmp.ne.s32.totalorder %s101, %s102
    %p114 = scmp.eq.s32.totalorder %s18, 1
    %p115 = por %p113, %p114
    %p117 = scmp.ne.s32.totalorder %s102, %s116
    %p118 = scmp.eq.s32.totalorder %s18, 0
    %p119 = por %p117, %p118
    %s121 = sadd.s32 %s120, 1
    %p124 = scmp.eq.s32.totalorder %s12, 1
    %p125 = scmp.ne.s32.totalorder %s120, %s122
    %p126 = scmp.eq.s32.totalorder %s12, 0
    %p127 = por %p125, %p126
    %p128 = scmp.ne.s32.totalorder %s120, %s122
    %p129 = scmp.eq.s32.totalorder %s17, 1
    %p130 = por %p128, %p129
    %p131 = scmp.ne.s32.totalorder %s122, %s123
    %p132 = scmp.eq.s32.totalorder %s17, 0
    %p133 = por %p131, %p132
    %p134 = scmp.ne.s32.totalorder %s122, %s123
    %p135 = scmp.eq.s32.totalorder %s18, 1
    %p136 = por %p134, %p135
    %p138 = scmp.ne.s32.totalorder %s123, %s137
    %p139 = scmp.eq.s32.totalorder %s18, 0
    %p140 = por %p138, %p139
    %s141 = ssub.s32 %s19, %s38
    %s142 = ssub.s32 %s20, %s34
    %s143 = sor.u32 %s141, %s142
    %p144 = scmp.eq.s32.totalorder %s143, 0
    %s146 = sadd.s32 %s145, 1
    %s147 = scalar_select %p144, %s145, %s146
    %p150 = pneg %p144
    %p151 = scmp.eq.s32.totalorder %s12, 1
    %p152 = por %p150, %p151
    %p153 = scmp.ne.s32.totalorder %s145, %s148
    %p154 = scmp.eq.s32.totalorder %s12, 0
    %p155 = por %p153, %p154
    %p156 = scmp.ne.s32.totalorder %s145, %s148
    %p157 = scmp.eq.s32.totalorder %s17, 1
    %p158 = por %p156, %p157
    %p159 = scmp.ne.s32.totalorder %s148, %s149
    %p160 = scmp.eq.s32.totalorder %s17, 0
    %p161 = por %p159, %p160
    %p162 = scmp.ne.s32.totalorder %s148, %s149
    %p163 = scmp.eq.s32.totalorder %s18, 1
    %p164 = por %p162, %p163
    %p166 = scmp.ne.s32.totalorder %s149, %s165
    %p167 = scmp.eq.s32.totalorder %s18, 0
    %p168 = por %p166, %p167
    %s169 = ssub.s32 %s19, %s38
    %s170 = ssub.s32 %s20, %s34
    %s171 = sor.u32 %s169, %s170
    %p172 = scmp.eq.s32.totalorder %s171, 0
    %s174 = sadd.s32 %s173, 1
    %s175 = scalar_select %p172, %s173, %s174
    %p178 = pneg %p172
    %p179 = scmp.eq.s32.totalorder %s12, 1
    %p180 = por %p178, %p179
    %p181 = scmp.ne.s32.totalorder %s173, %s176
    %p182 = scmp.eq.s32.totalorder %s12, 0
    %p183 = por %p181, %p182
    %p184 = scmp.ne.s32.totalorder %s173, %s176
    %p185 = scmp.eq.s32.totalorder %s17, 1
    %p186 = por %p184, %p185
    %p187 = scmp.ne.s32.totalorder %s176, %s177
    %p188 = scmp.eq.s32.totalorder %s17, 0
    %p189 = por %p187, %p188
    %p190 = scmp.ne.s32.totalorder %s176, %s177
    %p191 = scmp.eq.s32.totalorder %s18, 1
    %p192 = por %p190, %p191
    %p194 = scmp.ne.s32.totalorder %s177, %s193
    %p195 = scmp.eq.s32.totalorder %s18, 0
    %p196 = por %p194, %p195
    %p197 = scmp.le.s32.totalorder 1, %s12
    %p198 = scmp.lt.s32.totalorder %s12, 3
    %p199 = pnand %p197, %p198
    %p200 = pneg %p199
    // Predicated region
    $region9: #{vae_loss.2} parent=5 // pred_check
      _
    $region10: #{vae_loss.2} parent=5 // pred_check_branch
      %202 = sbr.rel (%p199) target = $region12
    $region11: #{vae_loss.2} parent=5 // pred_region
      %s203 = ssub.s32 %s12, 1
      // Predicated region
      $region13: #{vae_loss.2} parent=11 // pred_check
        %p204 = pneg %p112
      $region14: #{vae_loss.2} parent=11 // pred_check_branch
        %206 = sbr.rel (%p204) target = $region16
      $region15: #{vae_loss.2} parent=11 // pred_region
        _
      $region16: #{vae_loss.2} parent=11 // pred_fallthru
        _
      // Predicated region
      $region17: #{vae_loss.2} parent=11 // pred_check
        %p207 = pneg %p133
      $region18: #{vae_loss.2} parent=11 // pred_check_branch
        %209 = sbr.rel (%p207) target = $region20
      $region19: #{vae_loss.2} parent=11 // pred_region
        _
      $region20: #{vae_loss.2} parent=11 // pred_fallthru
        _
    $region12: #{vae_loss.2} parent=5 // pred_fallthru
      _
    %p210 = scmp.lt.s32.totalorder %s12, 2
    // Predicated region
    $region21: #{vae_loss.2} parent=5 // pred_check
      %p211 = pneg %p210
    $region22: #{vae_loss.2} parent=5 // pred_check_branch
      %213 = sbr.rel (%p211) target = $region24
    $region23: #{vae_loss.2} parent=5 // pred_region
      // Predicated region
      $region25: #{vae_loss.2} parent=23 // pred_check
        %p214 = pneg %p55
      $region26: #{vae_loss.2} parent=23 // pred_check_branch
        %216 = sbr.rel (%p214) target = $region28
      $region27: #{vae_loss.2} parent=23 // pred_region
        %s217 = sadd.s32 %s20, %s21
        %s218 = smul.u32 4, %s217
        %p219 = scmp.lt.s32.totalorder %s19, 1
        %s220 = scalar_select %p219, %s19, 1
        %p221 = scmp.lt.s32.totalorder %s218, 3
        %s222 = scalar_select %p221, %s218, 3
        %s223 = smul.addr %s220, 4
        %s224 = sadd.s32 %s222, %s223
        %s225 = smul.addr %s224, 4
        %s226 = scalar_lea.vmem %s0, %s225
        %s227 = sadd.s32 %s20, %s21
        %s228 = smul.u32 4, %s227
      $region28: #{vae_loss.2} parent=23 // pred_fallthru
        _
      // Predicated region
      $region29: #{vae_loss.2} parent=23 // pred_check
        %p229 = pneg %p85
      $region30: #{vae_loss.2} parent=23 // pred_check_branch
        %231 = sbr.rel (%p229) target = $region32
      $region31: #{vae_loss.2} parent=23 // pred_region
        %s232 = sadd.s32 %s20, %s21
        %s233 = smul.u32 4, %s232
        %p234 = scmp.lt.s32.totalorder %s19, 1
        %s235 = scalar_select %p234, %s19, 1
        %p236 = scmp.lt.s32.totalorder %s233, 3
        %s237 = scalar_select %p236, %s233, 3
        %s238 = smul.addr %s235, 4
        %s239 = sadd.s32 %s237, %s238
        %s240 = smul.addr %s239, 4
        %s241 = scalar_lea.vmem %s1, %s240
        %s242 = sadd.s32 %s20, %s21
        %s243 = smul.u32 4, %s242
      $region32: #{vae_loss.2} parent=23 // pred_fallthru
        _
    $region24: #{vae_loss.2} parent=5 // pred_fallthru
      _
    %p244 = scmp.le.s32.totalorder 1, %s12
    %p245 = scmp.lt.s32.totalorder %s12, 3
    %p246 = pnand %p244, %p245
    %p247 = pneg %p246
    // Predicated region
    $region33: #{vae_loss.2} parent=5 // pred_check
      _
    $region34: #{vae_loss.2} parent=5 // pred_check_branch
      %249 = sbr.rel (%p246) target = $region36
    $region35: #{vae_loss.2} parent=5 // pred_region
      %s250 = ssub.s32 %s12, 1
      %s251 = sadd.s32 %s23, %s24
      %s252 = smul.u32 4, %s251
      %p253 = scmp.lt.s32.totalorder %s22, 1
      %s254 = scalar_select %p253, %s22, 1
      %p255 = scmp.lt.s32.totalorder %s252, 3
      %s256 = scalar_select %p255, %s252, 3
      %s257 = smul.addr %s254, 4
      %s258 = sadd.s32 %s256, %s257
      %s259 = smul.addr %s258, 4
      %s260 = scalar_lea.vmem %s0, %s259
      %p261 = pneg %p61
      %p262 = pneg %p58
      %s263 = sadd.s32 %s23, %s24
      %s264 = smul.u32 4, %s263
      %p265 = scmp.lt.s32.totalorder %s22, 1
      %s266 = scalar_select %p265, %s22, 1
      %p267 = scmp.lt.s32.totalorder %s264, 3
      %s268 = scalar_select %p267, %s264, 3
      %s269 = smul.addr %s266, 4
      %s270 = sadd.s32 %s268, %s269
      %s271 = smul.addr %s270, 4
      %s272 = scalar_lea.vmem %s1, %s271
      %p273 = pneg %p91
      %p274 = pneg %p88
      %p275 = pneg %p112
      %p276 = pneg %p109
      %p277 = pneg %p133
      %p278 = pneg %p130
      %p279 = pneg %p161
      %p280 = pneg %p158
      %p281 = scmp.lt.s32.totalorder %s22, 1
      %s282 = scalar_select %p281, %s22, 1
      %p283 = scmp.lt.s32.totalorder %s23, 0
      %s284 = scalar_select %p283, %s23, 0
      %s285 = sadd.s32 %s284, %s282
      %s286 = scalar_lea.vmem %s4, %s285
      %p287 = pneg %p189
      %p288 = pneg %p186
      %p289 = scmp.lt.s32.totalorder %s22, 1
      %s290 = scalar_select %p289, %s22, 1
      %p291 = scmp.lt.s32.totalorder %s23, 0
      %s292 = scalar_select %p291, %s23, 0
      %s293 = sadd.s32 %s292, %s290
      %s294 = scalar_lea.vmem %s5, %s293
      %s295 = sadd.s32 %s23, %s24
      %s296 = smul.u32 4, %s295
      %p297 = scmp.lt.s32.totalorder %s22, 1
      %s298 = scalar_select %p297, %s22, 1
      %p299 = scmp.lt.s32.totalorder %s296, 3
      %s300 = scalar_select %p299, %s296, 3
      %s301 = smul.addr %s298, 4
      %s302 = sadd.s32 %s300, %s301
      %s303 = smul.addr %s302, 4
      %s304 = scalar_lea.vmem %s0, %s303
      %s305 = sadd.s32 %s23, %s24
      %s306 = smul.u32 4, %s305
      %s307 = sadd.s32 %s23, %s24
      %s308 = smul.u32 4, %s307
      %p309 = scmp.lt.s32.totalorder %s22, 1
      %s310 = scalar_select %p309, %s22, 1
      %p311 = scmp.lt.s32.totalorder %s308, 3
      %s312 = scalar_select %p311, %s308, 3
      %s313 = smul.addr %s310, 4
      %s314 = sadd.s32 %s312, %s313
      %s315 = smul.addr %s314, 4
      %s316 = scalar_lea.vmem %s1, %s315
      %s317 = sadd.s32 %s23, %s24
      %s318 = smul.u32 4, %s317
      %p319 = scmp.lt.s32.totalorder %s22, 1
      %s320 = scalar_select %p319, %s22, 1
      %p321 = scmp.lt.s32.totalorder %s23, 0
      %s322 = scalar_select %p321, %s23, 0
      %s323 = sadd.s32 %s322, %s320
      %s324 = scalar_lea.vmem %s4, %s323
      %p325 = scmp.lt.s32.totalorder %s22, 1
      %s326 = scalar_select %p325, %s22, 1
      %p327 = scmp.lt.s32.totalorder %s23, 0
      %s328 = scalar_select %p327, %s23, 0
      %s329 = sadd.s32 %s328, %s326
      %s330 = scalar_lea.vmem %s5, %s329
      %v331 = vld [vmem:[%s2] sm:$0xff]
      %v332 = vld [vmem:[%s2 + $0x8] sm:$0xff]
      %v333 = vld [vmem:[%s2 + $0x10] sm:$0xff]
      %v334 = vld [vmem:[%s2 + $0x18] sm:$0xff]
      %v335 = vld [vmem:[%s2 + $0x20] sm:$0xff]
      %v336 = vld [vmem:[%s2 + $0x28] sm:$0xff]
      %v337 = vld [vmem:[%s2 + $0x30] sm:$0xff]
      %v338 = vld [vmem:[%s2 + $0x38] sm:$0xff]
      %v339 = vld [vmem:[%s2 + $0x40] sm:$0xff]
      %v340 = vld [vmem:[%s2 + $0x48] sm:$0xff]
      %v341 = vld [vmem:[%s2 + $0x50] sm:$0xff]
      %v342 = vld [vmem:[%s2 + $0x58] sm:$0xff]
      %v343 = vld [vmem:[%s2 + $0x60] sm:$0xff]
      %v344 = vld [vmem:[%s2 + $0x68] sm:$0xff]
      %v345 = vld [vmem:[%s2 + $0x70] sm:$0xff]
      %v346 = vld [vmem:[%s2 + $0x78] sm:$0xff]
      %v347 = vld [vmem:[%s3] sm:$0x3]
      %v348 = vld [vmem:[%s304] sm:$0x7]
      %v349 = vld [vmem:[%s316] sm:$0x7]
      %v350 = vsub.f32 %v348, %v349
      %v351 = vand.u32 2147483647, %v350
      %vm352 = vcmask 1042432
      %v353 = vsel %vm352, %v351, 0.0
      %v354 = vrot.slane %v353, 4
      %v355 = vadd.f32 %v353, %v354
      %v356 = vrot.slane %v355, 2
      %v357 = vadd.f32 %v355, %v356
      %v358 = vrot.slane %v357, 1
      %v359 = vadd.f32 %v357, %v358
      %v360 = vadd.f32 %v359, 0.0
      %vm361 = vcmask 23552
      %v363 = vsel %vm361, %v331, 0
      %v366 = vsel %vm361, %v332, 0
      %v369 = vsel %vm361, %v333, 0
      %v372 = vsel %vm361, %v334, 0
      %v375 = vsel %vm361, %v335, 0
      %v378 = vsel %vm361, %v336, 0
      %v381 = vsel %vm361, %v337, 0
      %v384 = vsel %vm361, %v338, 0
      %v387 = vsel %vm361, %v339, 0
      %v390 = vsel %vm361, %v340, 0
      %v393 = vsel %vm361, %v341, 0
      %v396 = vsel %vm361, %v342, 0
      %v399 = vsel %vm361, %v343, 0
      %v402 = vsel %vm361, %v344, 0
      %v405 = vsel %vm361, %v345, 0
      %v408 = vsel %vm361, %v346, 0
      %v411 = vsel %vm352, %v348, 0
      %413 = vmatprep.subr.mxu0 0.0
      %414 = vmatpush1.msra.mxu0 0.0
      %415 = vmatprep.subr.mxu0 0.0
      %416 = vmatpush1.msra.mxu0 0.0
      %417 = vmatprep.subr.mxu0 0.0
      %418 = vmatpush1.msra.mxu0 0.0
      %419 = vmatprep.subr.mxu0 0.0
      %420 = vmatpush1.msra.mxu0 0.0
      %421 = vmatprep.subr.mxu0 0.0
      %422 = vmatpush1.msra.mxu0 0.0
      %423 = vmatprep.subr.mxu0 0.0
      %424 = vmatpush1.msra.mxu0 0.0
      %425 = vmatprep.subr.mxu0 0.0
      %426 = vmatpush1.msra.mxu0 0.0
      %427 = vmatprep.subr.mxu0 0.0
      %428 = vmatpush1.msra.mxu0 0.0
      %429 = vmatprep.subr.mxu0 0.0
      %430 = vmatpush1.msra.mxu0 0.0
      %431 = vmatprep.subr.mxu0 0.0
      %432 = vmatpush1.msra.mxu0 0.0
      %433 = vmatprep.subr.mxu0 0.0
      %434 = vmatpush1.msra.mxu0 0.0
      %435 = vmatprep.subr.mxu0 0.0
      %436 = vmatpush1.msra.mxu0 0.0
      %437 = vmatprep.subr.mxu0 0.0
      %438 = vmatpush1.msra.mxu0 0.0
      %439 = vmatprep.subr.mxu0 0.0
      %440 = vmatpush1.msra.mxu0 0.0
      %441 = vmatprep.subr.mxu0 0.0
      %442 = vmatpush1.msra.mxu0 0.0
      %443 = vmatprep.subr.mxu0 0.0
      %444 = vmatpush1.msra.mxu0 %v411
      %445 = vmatprep.subr.mxu0 0.0
      %446 = vmatpush2.msra.mxu0 0.0
      %447 = vmatprep.subr.mxu0 0.0
      %448 = vmatpush2.msra.mxu0 0.0
      %449 = vmatprep.subr.mxu0 0.0
      %450 = vmatpush2.msra.mxu0 0.0
      %451 = vmatprep.subr.mxu0 0.0
      %452 = vmatpush2.msra.mxu0 0.0
      %453 = vmatprep.subr.mxu0 0.0
      %454 = vmatpush2.msra.mxu0 0.0
      %455 = vmatprep.subr.mxu0 0.0
      %456 = vmatpush2.msra.mxu0 0.0
      %457 = vmatprep.subr.mxu0 0.0
      %458 = vmatpush2.msra.mxu0 0.0
      %459 = vmatprep.subr.mxu0 0.0
      %460 = vmatpush2.msra.mxu0 0.0
      %461 = vmatprep.subr.mxu0 0.0
      %462 = vmatpush2.msra.mxu0 0.0
      %463 = vmatprep.subr.mxu0 0.0
      %464 = vmatpush2.msra.mxu0 0.0
      %465 = vmatprep.subr.mxu0 0.0
      %466 = vmatpush2.msra.mxu0 0.0
      %467 = vmatprep.subr.mxu0 0.0
      %468 = vmatpush2.msra.mxu0 0.0
      %469 = vmatprep.subr.mxu0 0.0
      %470 = vmatpush2.msra.mxu0 0.0
      %471 = vmatprep.subr.mxu0 0.0
      %472 = vmatpush2.msra.mxu0 0.0
      %473 = vmatprep.subr.mxu0 0.0
      %474 = vmatpush2.msra.mxu0 0.0
      %475 = vmatprep.subr.mxu0 0.0
      %476 = vmatpush2.msra.mxu0 0.0
      %477 = vmatprep.mubr.f32.mxu0 0.0
      %478 = vmatmul.mubr.f32.gmra.mxu0 %v363
      %v479 = vpop.f32.mrf.mxu0
      %v480 = vadd.f32 0.0, %v479
      %v481 = vpop.f32.mrf.mxu0
      %482 = vmatprep.mubr.f32.mxu0 0.0
      %483 = vmatmul.mubr.f32.gmra.mxu0 %v366
      %v484 = vpop.f32.mrf.mxu0
      %v485 = vadd.f32 0.0, %v484
      %v486 = vpop.f32.mrf.mxu0
      %487 = vmatprep.mubr.f32.mxu0 0.0
      %488 = vmatmul.mubr.f32.gmra.mxu0 %v369
      %v489 = vpop.f32.mrf.mxu0
      %v490 = vadd.f32 0.0, %v489
      %v491 = vpop.f32.mrf.mxu0
      %492 = vmatprep.mubr.f32.mxu0 0.0
      %493 = vmatmul.mubr.f32.gmra.mxu0 %v372
      %v494 = vpop.f32.mrf.mxu0
      %v495 = vadd.f32 0.0, %v494
      %v496 = vpop.f32.mrf.mxu0
      %497 = vmatprep.mubr.f32.mxu0 0.0
      %498 = vmatmul.mubr.f32.gmra.mxu0 %v375
      %v499 = vpop.f32.mrf.mxu0
      %v500 = vadd.f32 0.0, %v499
      %v501 = vpop.f32.mrf.mxu0
      %502 = vmatprep.mubr.f32.mxu0 0.0
      %503 = vmatmul.mubr.f32.gmra.mxu0 %v378
      %v504 = vpop.f32.mrf.mxu0
      %v505 = vadd.f32 0.0, %v504
      %v506 = vpop.f32.mrf.mxu0
      %507 = vmatprep.mubr.f32.mxu0 0.0
      %508 = vmatmul.mubr.f32.gmra.mxu0 %v381
      %v509 = vpop.f32.mrf.mxu0
      %v510 = vadd.f32 0.0, %v509
      %v511 = vpop.f32.mrf.mxu0
      %512 = vmatprep.mubr.f32.mxu0 0.0
      %513 = vmatmul.mubr.f32.gmra.mxu0 %v384
      %v514 = vpop.f32.mrf.mxu0
      %v515 = vadd.f32 0.0, %v514
      %v516 = vpop.f32.mrf.mxu0
      %517 = vmatprep.mubr.f32.mxu0 0.0
      %518 = vmatmul.mubr.f32.gmra.mxu0 %v387
      %v519 = vpop.f32.mrf.mxu0
      %v520 = vadd.f32 0.0, %v519
      %v521 = vpop.f32.mrf.mxu0
      %522 = vmatprep.mubr.f32.mxu0 0.0
      %523 = vmatmul.mubr.f32.gmra.mxu0 %v390
      %v524 = vpop.f32.mrf.mxu0
      %v525 = vadd.f32 0.0, %v524
      %v526 = vpop.f32.mrf.mxu0
      %527 = vmatprep.mubr.f32.mxu0 0.0
      %528 = vmatmul.mubr.f32.gmra.mxu0 %v393
      %v529 = vpop.f32.mrf.mxu0
      %v530 = vadd.f32 0.0, %v529
      %v531 = vpop.f32.mrf.mxu0
      %532 = vmatprep.mubr.f32.mxu0 0.0
      %533 = vmatmul.mubr.f32.gmra.mxu0 %v396
      %v534 = vpop.f32.mrf.mxu0
      %v535 = vadd.f32 0.0, %v534
      %v536 = vpop.f32.mrf.mxu0
      %537 = vmatprep.mubr.f32.mxu0 0.0
      %538 = vmatmul.mubr.f32.gmra.mxu0 %v399
      %v539 = vpop.f32.mrf.mxu0
      %v540 = vadd.f32 0.0, %v539
      %v541 = vpop.f32.mrf.mxu0
      %542 = vmatprep.mubr.f32.mxu0 0.0
      %543 = vmatmul.mubr.f32.gmra.mxu0 %v402
      %v544 = vpop.f32.mrf.mxu0
      %v545 = vadd.f32 0.0, %v544
      %v546 = vpop.f32.mrf.mxu0
      %547 = vmatprep.mubr.f32.mxu0 0.0
      %548 = vmatmul.mubr.f32.gmra.mxu0 %v405
      %v549 = vpop.f32.mrf.mxu0
      %v550 = vadd.f32 0.0, %v549
      %v551 = vpop.f32.mrf.mxu0
      %552 = vmatprep.mubr.f32.mxu0 0.0
      %553 = vmatmul.mubr.f32.gmra.mxu0 %v408
      %v554 = vpop.f32.mrf.mxu0
      %v555 = vadd.f32 0.0, %v554
      %v556 = vpop.f32.mrf.mxu0
      %557 = vdwg.mxu0
      %v558 = vmax.f32 %v480, 0.0
      %v559 = vmax.f32 %v485, 0.0
      %v560 = vmax.f32 %v490, 0.0
      %v561 = vmax.f32 %v495, 0.0
      %v562 = vmax.f32 %v500, 0.0
      %v563 = vmax.f32 %v505, 0.0
      %v564 = vmax.f32 %v510, 0.0
      %v565 = vmax.f32 %v515, 0.0
      %v566 = vmax.f32 %v520, 0.0
      %v567 = vmax.f32 %v525, 0.0
      %v568 = vmax.f32 %v530, 0.0
      %v569 = vmax.f32 %v535, 0.0
      %v570 = vmax.f32 %v540, 0.0
      %v571 = vmax.f32 %v545, 0.0
      %v572 = vmax.f32 %v550, 0.0
      %v573 = vmax.f32 %v555, 0.0
      %v575 = vsel %vm352, %v349, 0
      %577 = vmatprep.subr.mxu0 0.0
      %578 = vmatpush1.msra.mxu0 0.0
      %579 = vmatprep.subr.mxu0 0.0
      %580 = vmatpush1.msra.mxu0 0.0
      %581 = vmatprep.subr.mxu0 0.0
      %582 = vmatpush1.msra.mxu0 0.0
      %583 = vmatprep.subr.mxu0 0.0
      %584 = vmatpush1.msra.mxu0 0.0
      %585 = vmatprep.subr.mxu0 0.0
      %586 = vmatpush1.msra.mxu0 0.0
      %587 = vmatprep.subr.mxu0 0.0
      %588 = vmatpush1.msra.mxu0 0.0
      %589 = vmatprep.subr.mxu0 0.0
      %590 = vmatpush1.msra.mxu0 0.0
      %591 = vmatprep.subr.mxu0 0.0
      %592 = vmatpush1.msra.mxu0 0.0
      %593 = vmatprep.subr.mxu0 0.0
      %594 = vmatpush1.msra.mxu0 0.0
      %595 = vmatprep.subr.mxu0 0.0
      %596 = vmatpush1.msra.mxu0 0.0
      %597 = vmatprep.subr.mxu0 0.0
      %598 = vmatpush1.msra.mxu0 0.0
      %599 = vmatprep.subr.mxu0 0.0
      %600 = vmatpush1.msra.mxu0 0.0
      %601 = vmatprep.subr.mxu0 0.0
      %602 = vmatpush1.msra.mxu0 0.0
      %603 = vmatprep.subr.mxu0 0.0
      %604 = vmatpush1.msra.mxu0 0.0
      %605 = vmatprep.subr.mxu0 0.0
      %606 = vmatpush1.msra.mxu0 0.0
      %607 = vmatprep.subr.mxu0 0.0
      %608 = vmatpush1.msra.mxu0 %v575
      %609 = vmatprep.subr.mxu0 0.0
      %610 = vmatpush2.msra.mxu0 0.0
      %611 = vmatprep.subr.mxu0 0.0
      %612 = vmatpush2.msra.mxu0 0.0
      %613 = vmatprep.subr.mxu0 0.0
      %614 = vmatpush2.msra.mxu0 0.0
      %615 = vmatprep.subr.mxu0 0.0
      %616 = vmatpush2.msra.mxu0 0.0
      %617 = vmatprep.subr.mxu0 0.0
      %618 = vmatpush2.msra.mxu0 0.0
      %619 = vmatprep.subr.mxu0 0.0
      %620 = vmatpush2.msra.mxu0 0.0
      %621 = vmatprep.subr.mxu0 0.0
      %622 = vmatpush2.msra.mxu0 0.0
      %623 = vmatprep.subr.mxu0 0.0
      %624 = vmatpush2.msra.mxu0 0.0
      %625 = vmatprep.subr.mxu0 0.0
      %626 = vmatpush2.msra.mxu0 0.0
      %627 = vmatprep.subr.mxu0 0.0
      %628 = vmatpush2.msra.mxu0 0.0
      %629 = vmatprep.subr.mxu0 0.0
      %630 = vmatpush2.msra.mxu0 0.0
      %631 = vmatprep.subr.mxu0 0.0
      %632 = vmatpush2.msra.mxu0 0.0
      %633 = vmatprep.subr.mxu0 0.0
      %634 = vmatpush2.msra.mxu0 0.0
      %635 = vmatprep.subr.mxu0 0.0
      %636 = vmatpush2.msra.mxu0 0.0
      %637 = vmatprep.subr.mxu0 0.0
      %638 = vmatpush2.msra.mxu0 0.0
      %639 = vmatprep.subr.mxu0 0.0
      %640 = vmatpush2.msra.mxu0 0.0
      %641 = vmatprep.mubr.f32.mxu0 0.0
      %642 = vmatmul.mubr.f32.gmra.mxu0 %v363
      %v643 = vpop.f32.mrf.mxu0
      %v644 = vadd.f32 0.0, %v643
      %v645 = vpop.f32.mrf.mxu0
      %646 = vmatprep.mubr.f32.mxu0 0.0
      %647 = vmatmul.mubr.f32.gmra.mxu0 %v366
      %v648 = vpop.f32.mrf.mxu0
      %v649 = vadd.f32 0.0, %v648
      %v650 = vpop.f32.mrf.mxu0
      %651 = vmatprep.mubr.f32.mxu0 0.0
      %652 = vmatmul.mubr.f32.gmra.mxu0 %v369
      %v653 = vpop.f32.mrf.mxu0
      %v654 = vadd.f32 0.0, %v653
      %v655 = vpop.f32.mrf.mxu0
      %656 = vmatprep.mubr.f32.mxu0 0.0
      %657 = vmatmul.mubr.f32.gmra.mxu0 %v372
      %v658 = vpop.f32.mrf.mxu0
      %v659 = vadd.f32 0.0, %v658
      %v660 = vpop.f32.mrf.mxu0
      %661 = vmatprep.mubr.f32.mxu0 0.0
      %662 = vmatmul.mubr.f32.gmra.mxu0 %v375
      %v663 = vpop.f32.mrf.mxu0
      %v664 = vadd.f32 0.0, %v663
      %v665 = vpop.f32.mrf.mxu0
      %666 = vmatprep.mubr.f32.mxu0 0.0
      %667 = vmatmul.mubr.f32.gmra.mxu0 %v378
      %v668 = vpop.f32.mrf.mxu0
      %v669 = vadd.f32 0.0, %v668
      %v670 = vpop.f32.mrf.mxu0
      %671 = vmatprep.mubr.f32.mxu0 0.0
      %672 = vmatmul.mubr.f32.gmra.mxu0 %v381
      %v673 = vpop.f32.mrf.mxu0
      %v674 = vadd.f32 0.0, %v673
      %v675 = vpop.f32.mrf.mxu0
      %676 = vmatprep.mubr.f32.mxu0 0.0
      %677 = vmatmul.mubr.f32.gmra.mxu0 %v384
      %v678 = vpop.f32.mrf.mxu0
      %v679 = vadd.f32 0.0, %v678
      %v680 = vpop.f32.mrf.mxu0
      %681 = vmatprep.mubr.f32.mxu0 0.0
      %682 = vmatmul.mubr.f32.gmra.mxu0 %v387
      %v683 = vpop.f32.mrf.mxu0
      %v684 = vadd.f32 0.0, %v683
      %v685 = vpop.f32.mrf.mxu0
      %686 = vmatprep.mubr.f32.mxu0 0.0
      %687 = vmatmul.mubr.f32.gmra.mxu0 %v390
      %v688 = vpop.f32.mrf.mxu0
      %v689 = vadd.f32 0.0, %v688
      %v690 = vpop.f32.mrf.mxu0
      %691 = vmatprep.mubr.f32.mxu0 0.0
      %692 = vmatmul.mubr.f32.gmra.mxu0 %v393
      %v693 = vpop.f32.mrf.mxu0
      %v694 = vadd.f32 0.0, %v693
      %v695 = vpop.f32.mrf.mxu0
      %696 = vmatprep.mubr.f32.mxu0 0.0
      %697 = vmatmul.mubr.f32.gmra.mxu0 %v396
      %v698 = vpop.f32.mrf.mxu0
      %v699 = vadd.f32 0.0, %v698
      %v700 = vpop.f32.mrf.mxu0
      %701 = vmatprep.mubr.f32.mxu0 0.0
      %702 = vmatmul.mubr.f32.gmra.mxu0 %v399
      %v703 = vpop.f32.mrf.mxu0
      %v704 = vadd.f32 0.0, %v703
      %v705 = vpop.f32.mrf.mxu0
      %706 = vmatprep.mubr.f32.mxu0 0.0
      %707 = vmatmul.mubr.f32.gmra.mxu0 %v402
      %v708 = vpop.f32.mrf.mxu0
      %v709 = vadd.f32 0.0, %v708
      %v710 = vpop.f32.mrf.mxu0
      %711 = vmatprep.mubr.f32.mxu0 0.0
      %712 = vmatmul.mubr.f32.gmra.mxu0 %v405
      %v713 = vpop.f32.mrf.mxu0
      %v714 = vadd.f32 0.0, %v713
      %v715 = vpop.f32.mrf.mxu0
      %716 = vmatprep.mubr.f32.mxu0 0.0
      %717 = vmatmul.mubr.f32.gmra.mxu0 %v408
      %v718 = vpop.f32.mrf.mxu0
      %v719 = vadd.f32 0.0, %v718
      %v720 = vpop.f32.mrf.mxu0
      %721 = vdwg.mxu0
      %v722 = vmax.f32 %v644, 0.0
      %v723 = vmax.f32 %v649, 0.0
      %v724 = vmax.f32 %v654, 0.0
      %v725 = vmax.f32 %v659, 0.0
      %v726 = vmax.f32 %v664, 0.0
      %v727 = vmax.f32 %v669, 0.0
      %v728 = vmax.f32 %v674, 0.0
      %v729 = vmax.f32 %v679, 0.0
      %v730 = vmax.f32 %v684, 0.0
      %v731 = vmax.f32 %v689, 0.0
      %v732 = vmax.f32 %v694, 0.0
      %v733 = vmax.f32 %v699, 0.0
      %v734 = vmax.f32 %v704, 0.0
      %v735 = vmax.f32 %v709, 0.0
      %v736 = vmax.f32 %v714, 0.0
      %v737 = vmax.f32 %v719, 0.0
      %v738 = vmul.f32 %v558, %v558
      %v739 = vmul.f32 %v559, %v559
      %v740 = vmul.f32 %v560, %v560
      %v741 = vmul.f32 %v561, %v561
      %v742 = vmul.f32 %v562, %v562
      %v743 = vmul.f32 %v563, %v563
      %v744 = vmul.f32 %v564, %v564
      %v745 = vmul.f32 %v565, %v565
      %v746 = vmul.f32 %v566, %v566
      %v747 = vmul.f32 %v567, %v567
      %v748 = vmul.f32 %v568, %v568
      %v749 = vmul.f32 %v569, %v569
      %v750 = vmul.f32 %v570, %v570
      %v751 = vmul.f32 %v571, %v571
      %v752 = vmul.f32 %v572, %v572
      %v753 = vmul.f32 %v573, %v573
      %754 = vmatprep.subr.mxu0 0.0
      %755 = vmatpush1.msra.mxu0 %v753
      %756 = vmatprep.subr.mxu0 0.0
      %757 = vmatpush1.msra.mxu0 %v752
      %758 = vmatprep.subr.mxu0 0.0
      %759 = vmatpush1.msra.mxu0 %v751
      %760 = vmatprep.subr.mxu0 0.0
      %761 = vmatpush1.msra.mxu0 %v750
      %762 = vmatprep.subr.mxu0 0.0
      %763 = vmatpush1.msra.mxu0 %v749
      %764 = vmatprep.subr.mxu0 0.0
      %765 = vmatpush1.msra.mxu0 %v748
      %766 = vmatprep.subr.mxu0 0.0
      %767 = vmatpush1.msra.mxu0 %v747
      %768 = vmatprep.subr.mxu0 0.0
      %769 = vmatpush1.msra.mxu0 %v746
      %770 = vmatprep.subr.mxu0 0.0
      %771 = vmatpush1.msra.mxu0 %v745
      %772 = vmatprep.subr.mxu0 0.0
      %773 = vmatpush1.msra.mxu0 %v744
      %774 = vmatprep.subr.mxu0 0.0
      %775 = vmatpush1.msra.mxu0 %v743
      %776 = vmatprep.subr.mxu0 0.0
      %777 = vmatpush1.msra.mxu0 %v742
      %778 = vmatprep.subr.mxu0 0.0
      %779 = vmatpush1.msra.mxu0 %v741
      %780 = vmatprep.subr.mxu0 0.0
      %781 = vmatpush1.msra.mxu0 %v740
      %782 = vmatprep.subr.mxu0 0.0
      %783 = vmatpush1.msra.mxu0 %v739
      %784 = vmatprep.subr.mxu0 0.0
      %785 = vmatpush1.msra.mxu0 %v738
      %786 = vmatprep.subr.mxu0 0.0
      %787 = vmatpush2.msra.mxu0 0.0
      %788 = vmatprep.subr.mxu0 0.0
      %789 = vmatpush2.msra.mxu0 0.0
      %790 = vmatprep.subr.mxu0 0.0
      %791 = vmatpush2.msra.mxu0 0.0
      %792 = vmatprep.subr.mxu0 0.0
      %793 = vmatpush2.msra.mxu0 0.0
      %794 = vmatprep.subr.mxu0 0.0
      %795 = vmatpush2.msra.mxu0 0.0
      %796 = vmatprep.subr.mxu0 0.0
      %797 = vmatpush2.msra.mxu0 0.0
      %798 = vmatprep.subr.mxu0 0.0
      %799 = vmatpush2.msra.mxu0 0.0
      %800 = vmatprep.subr.mxu0 0.0
      %801 = vmatpush2.msra.mxu0 0.0
      %802 = vmatprep.subr.mxu0 0.0
      %803 = vmatpush2.msra.mxu0 0.0
      %804 = vmatprep.subr.mxu0 0.0
      %805 = vmatpush2.msra.mxu0 0.0
      %806 = vmatprep.subr.mxu0 0.0
      %807 = vmatpush2.msra.mxu0 0.0
      %808 = vmatprep.subr.mxu0 0.0
      %809 = vmatpush2.msra.mxu0 0.0
      %810 = vmatprep.subr.mxu0 0.0
      %811 = vmatpush2.msra.mxu0 0.0
      %812 = vmatprep.subr.mxu0 0.0
      %813 = vmatpush2.msra.mxu0 0.0
      %814 = vmatprep.subr.mxu0 0.0
      %815 = vmatpush2.msra.mxu0 0.0
      %816 = vmatprep.subr.mxu0 0.0
      %817 = vmatpush2.msra.mxu0 0.0
      %818 = vmatprep.mubr.f32.mxu0 0.0
      %819 = vmatmul.mubr.f32.gmra.mxu0 %v347
      %v820 = vpop.f32.mrf.mxu0
      %v821 = vadd.f32 0.0, %v820
      %v822 = vpop.f32.mrf.mxu0
      %823 = vdwg.mxu0
      %v824 = vmul.f32 %v722, %v722
      %v825 = vmul.f32 %v723, %v723
      %v826 = vmul.f32 %v724, %v724
      %v827 = vmul.f32 %v725, %v725
      %v828 = vmul.f32 %v726, %v726
      %v829 = vmul.f32 %v727, %v727
      %v830 = vmul.f32 %v728, %v728
      %v831 = vmul.f32 %v729, %v729
      %v832 = vmul.f32 %v730, %v730
      %v833 = vmul.f32 %v731, %v731
      %v834 = vmul.f32 %v732, %v732
      %v835 = vmul.f32 %v733, %v733
      %v836 = vmul.f32 %v734, %v734
      %v837 = vmul.f32 %v735, %v735
      %v838 = vmul.f32 %v736, %v736
      %v839 = vmul.f32 %v737, %v737
      %840 = vmatprep.subr.mxu0 0.0
      %841 = vmatpush1.msra.mxu0 %v839
      %842 = vmatprep.subr.mxu0 0.0
      %843 = vmatpush1.msra.mxu0 %v838
      %844 = vmatprep.subr.mxu0 0.0
      %845 = vmatpush1.msra.mxu0 %v837
      %846 = vmatprep.subr.mxu0 0.0
      %847 = vmatpush1.msra.mxu0 %v836
      %848 = vmatprep.subr.mxu0 0.0
      %849 = vmatpush1.msra.mxu0 %v835
      %850 = vmatprep.subr.mxu0 0.0
      %851 = vmatpush1.msra.mxu0 %v834
      %852 = vmatprep.subr.mxu0 0.0
      %853 = vmatpush1.msra.mxu0 %v833
      %854 = vmatprep.subr.mxu0 0.0
      %855 = vmatpush1.msra.mxu0 %v832
      %856 = vmatprep.subr.mxu0 0.0
      %857 = vmatpush1.msra.mxu0 %v831
      %858 = vmatprep.subr.mxu0 0.0
      %859 = vmatpush1.msra.mxu0 %v830
      %860 = vmatprep.subr.mxu0 0.0
      %861 = vmatpush1.msra.mxu0 %v829
      %862 = vmatprep.subr.mxu0 0.0
      %863 = vmatpush1.msra.mxu0 %v828
      %864 = vmatprep.subr.mxu0 0.0
      %865 = vmatpush1.msra.mxu0 %v827
      %866 = vmatprep.subr.mxu0 0.0
      %867 = vmatpush1.msra.mxu0 %v826
      %868 = vmatprep.subr.mxu0 0.0
      %869 = vmatpush1.msra.mxu0 %v825
      %870 = vmatprep.subr.mxu0 0.0
      %871 = vmatpush1.msra.mxu0 %v824
      %872 = vmatprep.subr.mxu0 0.0
      %873 = vmatpush2.msra.mxu0 0.0
      %874 = vmatprep.subr.mxu0 0.0
      %875 = vmatpush2.msra.mxu0 0.0
      %876 = vmatprep.subr.mxu0 0.0
      %877 = vmatpush2.msra.mxu0 0.0
      %878 = vmatprep.subr.mxu0 0.0
      %879 = vmatpush2.msra.mxu0 0.0
      %880 = vmatprep.subr.mxu0 0.0
      %881 = vmatpush2.msra.mxu0 0.0
      %882 = vmatprep.subr.mxu0 0.0
      %883 = vmatpush2.msra.mxu0 0.0
      %884 = vmatprep.subr.mxu0 0.0
      %885 = vmatpush2.msra.mxu0 0.0
      %886 = vmatprep.subr.mxu0 0.0
      %887 = vmatpush2.msra.mxu0 0.0
      %888 = vmatprep.subr.mxu0 0.0
      %889 = vmatpush2.msra.mxu0 0.0
      %890 = vmatprep.subr.mxu0 0.0
      %891 = vmatpush2.msra.mxu0 0.0
      %892 = vmatprep.subr.mxu0 0.0
      %893 = vmatpush2.msra.mxu0 0.0
      %894 = vmatprep.subr.mxu0 0.0
      %895 = vmatpush2.msra.mxu0 0.0
      %896 = vmatprep.subr.mxu0 0.0
      %897 = vmatpush2.msra.mxu0 0.0
      %898 = vmatprep.subr.mxu0 0.0
      %899 = vmatpush2.msra.mxu0 0.0
      %900 = vmatprep.subr.mxu0 0.0
      %901 = vmatpush2.msra.mxu0 0.0
      %902 = vmatprep.subr.mxu0 0.0
      %903 = vmatpush2.msra.mxu0 0.0
      %904 = vmatprep.mubr.f32.mxu0 0.0
      %905 = vmatmul.mubr.f32.gmra.mxu0 %v347
      %v906 = vpop.f32.mrf.mxu0
      %v907 = vadd.f32 0.0, %v906
      %v908 = vpop.f32.mrf.mxu0
      %909 = vdwg.mxu0
      %v910 = vmul.f32 %v558, %v722
      %v911 = vmul.f32 %v559, %v723
      %v912 = vmul.f32 %v560, %v724
      %v913 = vmul.f32 %v561, %v725
      %v914 = vmul.f32 %v562, %v726
      %v915 = vmul.f32 %v563, %v727
      %v916 = vmul.f32 %v564, %v728
      %v917 = vmul.f32 %v565, %v729
      %v918 = vmul.f32 %v566, %v730
      %v919 = vmul.f32 %v567, %v731
      %v920 = vmul.f32 %v568, %v732
      %v921 = vmul.f32 %v569, %v733
      %v922 = vmul.f32 %v570, %v734
      %v923 = vmul.f32 %v571, %v735
      %v924 = vmul.f32 %v572, %v736
      %v925 = vmul.f32 %v573, %v737
      %926 = vmatprep.subr.mxu0 0.0
      %927 = vmatpush1.msra.mxu0 %v925
      %928 = vmatprep.subr.mxu0 0.0
      %929 = vmatpush1.msra.mxu0 %v924
      %930 = vmatprep.subr.mxu0 0.0
      %931 = vmatpush1.msra.mxu0 %v923
      %932 = vmatprep.subr.mxu0 0.0
      %933 = vmatpush1.msra.mxu0 %v922
      %934 = vmatprep.subr.mxu0 0.0
      %935 = vmatpush1.msra.mxu0 %v921
      %936 = vmatprep.subr.mxu0 0.0
      %937 = vmatpush1.msra.mxu0 %v920
      %938 = vmatprep.subr.mxu0 0.0
      %939 = vmatpush1.msra.mxu0 %v919
      %940 = vmatprep.subr.mxu0 0.0
      %941 = vmatpush1.msra.mxu0 %v918
      %942 = vmatprep.subr.mxu0 0.0
      %943 = vmatpush1.msra.mxu0 %v917
      %944 = vmatprep.subr.mxu0 0.0
      %945 = vmatpush1.msra.mxu0 %v916
      %946 = vmatprep.subr.mxu0 0.0
      %947 = vmatpush1.msra.mxu0 %v915
      %948 = vmatprep.subr.mxu0 0.0
      %949 = vmatpush1.msra.mxu0 %v914
      %950 = vmatprep.subr.mxu0 0.0
      %951 = vmatpush1.msra.mxu0 %v913
      %952 = vmatprep.subr.mxu0 0.0
      %953 = vmatpush1.msra.mxu0 %v912
      %954 = vmatprep.subr.mxu0 0.0
      %955 = vmatpush1.msra.mxu0 %v911
      %956 = vmatprep.subr.mxu0 0.0
      %957 = vmatpush1.msra.mxu0 %v910
      %958 = vmatprep.subr.mxu0 0.0
      %959 = vmatpush2.msra.mxu0 0.0
      %960 = vmatprep.subr.mxu0 0.0
      %961 = vmatpush2.msra.mxu0 0.0
      %962 = vmatprep.subr.mxu0 0.0
      %963 = vmatpush2.msra.mxu0 0.0
      %964 = vmatprep.subr.mxu0 0.0
      %965 = vmatpush2.msra.mxu0 0.0
      %966 = vmatprep.subr.mxu0 0.0
      %967 = vmatpush2.msra.mxu0 0.0
      %968 = vmatprep.subr.mxu0 0.0
      %969 = vmatpush2.msra.mxu0 0.0
      %970 = vmatprep.subr.mxu0 0.0
      %971 = vmatpush2.msra.mxu0 0.0
      %972 = vmatprep.subr.mxu0 0.0
      %973 = vmatpush2.msra.mxu0 0.0
      %974 = vmatprep.subr.mxu0 0.0
      %975 = vmatpush2.msra.mxu0 0.0
      %976 = vmatprep.subr.mxu0 0.0
      %977 = vmatpush2.msra.mxu0 0.0
      %978 = vmatprep.subr.mxu0 0.0
      %979 = vmatpush2.msra.mxu0 0.0
      %980 = vmatprep.subr.mxu0 0.0
      %981 = vmatpush2.msra.mxu0 0.0
      %982 = vmatprep.subr.mxu0 0.0
      %983 = vmatpush2.msra.mxu0 0.0
      %984 = vmatprep.subr.mxu0 0.0
      %985 = vmatpush2.msra.mxu0 0.0
      %986 = vmatprep.subr.mxu0 0.0
      %987 = vmatpush2.msra.mxu0 0.0
      %988 = vmatprep.subr.mxu0 0.0
      %989 = vmatpush2.msra.mxu0 0.0
      %990 = vmatprep.mubr.f32.mxu0 0.0
      %991 = vmatmul.mubr.f32.gmra.mxu0 %v347
      %v992 = vpop.f32.mrf.mxu0
      %v993 = vadd.f32 0.0, %v992
      %v994 = vpop.f32.mrf.mxu0
      %995 = vdwg.mxu0
      %v996 = vadd.f32 %v821, 1e-10
      %v997 = vrsqrt.pop %v996
      %v998 = vadd.f32 %v907, 1e-10
      %v999 = vrsqrt.pop %v998
      %v1000 = vmul.f32 %v997, %v997
      %v1002 = vrot.slane %v1000, 7
      %v1004 = vmul.f32 %v821, %v1002
      %v1005 = vmul.f32 %v999, %v999
      %v1007 = vrot.slane %v1005, 7
      %v1009 = vmul.f32 %v907, %v1007
      %v1010 = vadd.f32 %v1004, %v1009
      %v1011 = vmul.f32 %v997, %v999
      %v1013 = vrot.slane %v1011, 7
      %v1015 = vmul.f32 %v993, %v1013
      %v1016 = vmul.f32 %v1015, 2.0
      %v1017 = vsub.f32 %v1010, %v1016
      %v1018 = vadd.f32 %v1017, 0.0
      %v1019 = vld [vmem:[%s304 + $0x4] sm:$0x7]
      %v1020 = vld [vmem:[%s316 + $0x4] sm:$0x7]
      %v1021 = vsub.f32 %v1019, %v1020
      %v1022 = vand.u32 2147483647, %v1021
      %v1023 = vsel %vm352, %v1022, 0.0
      %v1024 = vrot.slane %v1023, 4
      %v1025 = vadd.f32 %v1023, %v1024
      %v1026 = vrot.slane %v1025, 2
      %v1027 = vadd.f32 %v1025, %v1026
      %v1028 = vrot.slane %v1027, 1
      %v1029 = vadd.f32 %v1027, %v1028
      %v1030 = vadd.f32 %v360, %v1029
      %v1032 = vsel %vm352, %v1019, 0
      %1034 = vmatprep.subr.mxu0 0.0
      %1035 = vmatpush1.msra.mxu0 0.0
      %1036 = vmatprep.subr.mxu0 0.0
      %1037 = vmatpush1.msra.mxu0 0.0
      %1038 = vmatprep.subr.mxu0 0.0
      %1039 = vmatpush1.msra.mxu0 0.0
      %1040 = vmatprep.subr.mxu0 0.0
      %1041 = vmatpush1.msra.mxu0 0.0
      %1042 = vmatprep.subr.mxu0 0.0
      %1043 = vmatpush1.msra.mxu0 0.0
      %1044 = vmatprep.subr.mxu0 0.0
      %1045 = vmatpush1.msra.mxu0 0.0
      %1046 = vmatprep.subr.mxu0 0.0
      %1047 = vmatpush1.msra.mxu0 0.0
      %1048 = vmatprep.subr.mxu0 0.0
      %1049 = vmatpush1.msra.mxu0 0.0
      %1050 = vmatprep.subr.mxu0 0.0
      %1051 = vmatpush1.msra.mxu0 0.0
      %1052 = vmatprep.subr.mxu0 0.0
      %1053 = vmatpush1.msra.mxu0 0.0
      %1054 = vmatprep.subr.mxu0 0.0
      %1055 = vmatpush1.msra.mxu0 0.0
      %1056 = vmatprep.subr.mxu0 0.0
      %1057 = vmatpush1.msra.mxu0 0.0
      %1058 = vmatprep.subr.mxu0 0.0
      %1059 = vmatpush1.msra.mxu0 0.0
      %1060 = vmatprep.subr.mxu0 0.0
      %1061 = vmatpush1.msra.mxu0 0.0
      %1062 = vmatprep.subr.mxu0 0.0
      %1063 = vmatpush1.msra.mxu0 0.0
      %1064 = vmatprep.subr.mxu0 0.0
      %1065 = vmatpush1.msra.mxu0 %v1032
      %1066 = vmatprep.subr.mxu0 0.0
      %1067 = vmatpush2.msra.mxu0 0.0
      %1068 = vmatprep.subr.mxu0 0.0
      %1069 = vmatpush2.msra.mxu0 0.0
      %1070 = vmatprep.subr.mxu0 0.0
      %1071 = vmatpush2.msra.mxu0 0.0
      %1072 = vmatprep.subr.mxu0 0.0
      %1073 = vmatpush2.msra.mxu0 0.0
      %1074 = vmatprep.subr.mxu0 0.0
      %1075 = vmatpush2.msra.mxu0 0.0
      %1076 = vmatprep.subr.mxu0 0.0
      %1077 = vmatpush2.msra.mxu0 0.0
      %1078 = vmatprep.subr.mxu0 0.0
      %1079 = vmatpush2.msra.mxu0 0.0
      %1080 = vmatprep.subr.mxu0 0.0
      %1081 = vmatpush2.msra.mxu0 0.0
      %1082 = vmatprep.subr.mxu0 0.0
      %1083 = vmatpush2.msra.mxu0 0.0
      %1084 = vmatprep.subr.mxu0 0.0
      %1085 = vmatpush2.msra.mxu0 0.0
      %1086 = vmatprep.subr.mxu0 0.0
      %1087 = vmatpush2.msra.mxu0 0.0
      %1088 = vmatprep.subr.mxu0 0.0
      %1089 = vmatpush2.msra.mxu0 0.0
      %1090 = vmatprep.subr.mxu0 0.0
      %1091 = vmatpush2.msra.mxu0 0.0
      %1092 = vmatprep.subr.mxu0 0.0
      %1093 = vmatpush2.msra.mxu0 0.0
      %1094 = vmatprep.subr.mxu0 0.0
      %1095 = vmatpush2.msra.mxu0 0.0
      %1096 = vmatprep.subr.mxu0 0.0
      %1097 = vmatpush2.msra.mxu0 0.0
      %1098 = vmatprep.mubr.f32.mxu0 0.0
      %1099 = vmatmul.mubr.f32.gmra.mxu0 %v363
      %v1100 = vpop.f32.mrf.mxu0
      %v1101 = vadd.f32 0.0, %v1100
      %v1102 = vpop.f32.mrf.mxu0
      %1103 = vmatprep.mubr.f32.mxu0 0.0
      %1104 = vmatmul.mubr.f32.gmra.mxu0 %v366
      %v1105 = vpop.f32.mrf.mxu0
      %v1106 = vadd.f32 0.0, %v1105
      %v1107 = vpop.f32.mrf.mxu0
      %1108 = vmatprep.mubr.f32.mxu0 0.0
      %1109 = vmatmul.mubr.f32.gmra.mxu0 %v369
      %v1110 = vpop.f32.mrf.mxu0
      %v1111 = vadd.f32 0.0, %v1110
      %v1112 = vpop.f32.mrf.mxu0
      %1113 = vmatprep.mubr.f32.mxu0 0.0
      %1114 = vmatmul.mubr.f32.gmra.mxu0 %v372
      %v1115 = vpop.f32.mrf.mxu0
      %v1116 = vadd.f32 0.0, %v1115
      %v1117 = vpop.f32.mrf.mxu0
      %1118 = vmatprep.mubr.f32.mxu0 0.0
      %1119 = vmatmul.mubr.f32.gmra.mxu0 %v375
      %v1120 = vpop.f32.mrf.mxu0
      %v1121 = vadd.f32 0.0, %v1120
      %v1122 = vpop.f32.mrf.mxu0
      %1123 = vmatprep.mubr.f32.mxu0 0.0
      %1124 = vmatmul.mubr.f32.gmra.mxu0 %v378
      %v1125 = vpop.f32.mrf.mxu0
      %v1126 = vadd.f32 0.0, %v1125
      %v1127 = vpop.f32.mrf.mxu0
      %1128 = vmatprep.mubr.f32.mxu0 0.0
      %1129 = vmatmul.mubr.f32.gmra.mxu0 %v381
      %v1130 = vpop.f32.mrf.mxu0
      %v1131 = vadd.f32 0.0, %v1130
      %v1132 = vpop.f32.mrf.mxu0
      %1133 = vmatprep.mubr.f32.mxu0 0.0
      %1134 = vmatmul.mubr.f32.gmra.mxu0 %v384
      %v1135 = vpop.f32.mrf.mxu0
      %v1136 = vadd.f32 0.0, %v1135
      %v1137 = vpop.f32.mrf.mxu0
      %1138 = vmatprep.mubr.f32.mxu0 0.0
      %1139 = vmatmul.mubr.f32.gmra.mxu0 %v387
      %v1140 = vpop.f32.mrf.mxu0
      %v1141 = vadd.f32 0.0, %v1140
      %v1142 = vpop.f32.mrf.mxu0
      %1143 = vmatprep.mubr.f32.mxu0 0.0
      %1144 = vmatmul.mubr.f32.gmra.mxu0 %v390
      %v1145 = vpop.f32.mrf.mxu0
      %v1146 = vadd.f32 0.0, %v1145
      %v1147 = vpop.f32.mrf.mxu0
      %1148 = vmatprep.mubr.f32.mxu0 0.0
      %1149 = vmatmul.mubr.f32.gmra.mxu0 %v393
      %v1150 = vpop.f32.mrf.mxu0
      %v1151 = vadd.f32 0.0, %v1150
      %v1152 = vpop.f32.mrf.mxu0
      %1153 = vmatprep.mubr.f32.mxu0 0.0
      %1154 = vmatmul.mubr.f32.gmra.mxu0 %v396
      %v1155 = vpop.f32.mrf.mxu0
      %v1156 = vadd.f32 0.0, %v1155
      %v1157 = vpop.f32.mrf.mxu0
      %1158 = vmatprep.mubr.f32.mxu0 0.0
      %1159 = vmatmul.mubr.f32.gmra.mxu0 %v399
      %v1160 = vpop.f32.mrf.mxu0
      %v1161 = vadd.f32 0.0, %v1160
      %v1162 = vpop.f32.mrf.mxu0
      %1163 = vmatprep.mubr.f32.mxu0 0.0
      %1164 = vmatmul.mubr.f32.gmra.mxu0 %v402
      %v1165 = vpop.f32.mrf.mxu0
      %v1166 = vadd.f32 0.0, %v1165
      %v1167 = vpop.f32.mrf.mxu0
      %1168 = vmatprep.mubr.f32.mxu0 0.0
      %1169 = vmatmul.mubr.f32.gmra.mxu0 %v405
      %v1170 = vpop.f32.mrf.mxu0
      %v1171 = vadd.f32 0.0, %v1170
      %v1172 = vpop.f32.mrf.mxu0
      %1173 = vmatprep.mubr.f32.mxu0 0.0
      %1174 = vmatmul.mubr.f32.gmra.mxu0 %v408
      %v1175 = vpop.f32.mrf.mxu0
      %v1176 = vadd.f32 0.0, %v1175
      %v1177 = vpop.f32.mrf.mxu0
      %1178 = vdwg.mxu0
      %v1179 = vmax.f32 %v1101, 0.0
      %v1180 = vmax.f32 %v1106, 0.0
      %v1181 = vmax.f32 %v1111, 0.0
      %v1182 = vmax.f32 %v1116, 0.0
      %v1183 = vmax.f32 %v1121, 0.0
      %v1184 = vmax.f32 %v1126, 0.0
      %v1185 = vmax.f32 %v1131, 0.0
      %v1186 = vmax.f32 %v1136, 0.0
      %v1187 = vmax.f32 %v1141, 0.0
      %v1188 = vmax.f32 %v1146, 0.0
      %v1189 = vmax.f32 %v1151, 0.0
      %v1190 = vmax.f32 %v1156, 0.0
      %v1191 = vmax.f32 %v1161, 0.0
      %v1192 = vmax.f32 %v1166, 0.0
      %v1193 = vmax.f32 %v1171, 0.0
      %v1194 = vmax.f32 %v1176, 0.0
      %v1196 = vsel %vm352, %v1020, 0
      %1198 = vmatprep.subr.mxu0 0.0
      %1199 = vmatpush1.msra.mxu0 0.0
      %1200 = vmatprep.subr.mxu0 0.0
      %1201 = vmatpush1.msra.mxu0 0.0
      %1202 = vmatprep.subr.mxu0 0.0
      %1203 = vmatpush1.msra.mxu0 0.0
      %1204 = vmatprep.subr.mxu0 0.0
      %1205 = vmatpush1.msra.mxu0 0.0
      %1206 = vmatprep.subr.mxu0 0.0
      %1207 = vmatpush1.msra.mxu0 0.0
      %1208 = vmatprep.subr.mxu0 0.0
      %1209 = vmatpush1.msra.mxu0 0.0
      %1210 = vmatprep.subr.mxu0 0.0
      %1211 = vmatpush1.msra.mxu0 0.0
      %1212 = vmatprep.subr.mxu0 0.0
      %1213 = vmatpush1.msra.mxu0 0.0
      %1214 = vmatprep.subr.mxu0 0.0
      %1215 = vmatpush1.msra.mxu0 0.0
      %1216 = vmatprep.subr.mxu0 0.0
      %1217 = vmatpush1.msra.mxu0 0.0
      %1218 = vmatprep.subr.mxu0 0.0
      %1219 = vmatpush1.msra.mxu0 0.0
      %1220 = vmatprep.subr.mxu0 0.0
      %1221 = vmatpush1.msra.mxu0 0.0
      %1222 = vmatprep.subr.mxu0 0.0
      %1223 = vmatpush1.msra.mxu0 0.0
      %1224 = vmatprep.subr.mxu0 0.0
      %1225 = vmatpush1.msra.mxu0 0.0
      %1226 = vmatprep.subr.mxu0 0.0
      %1227 = vmatpush1.msra.mxu0 0.0
      %1228 = vmatprep.subr.mxu0 0.0
      %1229 = vmatpush1.msra.mxu0 %v1196
      %1230 = vmatprep.subr.mxu0 0.0
      %1231 = vmatpush2.msra.mxu0 0.0
      %1232 = vmatprep.subr.mxu0 0.0
      %1233 = vmatpush2.msra.mxu0 0.0
      %1234 = vmatprep.subr.mxu0 0.0
      %1235 = vmatpush2.msra.mxu0 0.0
      %1236 = vmatprep.subr.mxu0 0.0
      %1237 = vmatpush2.msra.mxu0 0.0
      %1238 = vmatprep.subr.mxu0 0.0
      %1239 = vmatpush2.msra.mxu0 0.0
      %1240 = vmatprep.subr.mxu0 0.0
      %1241 = vmatpush2.msra.mxu0 0.0
      %1242 = vmatprep.subr.mxu0 0.0
      %1243 = vmatpush2.msra.mxu0 0.0
      %1244 = vmatprep.subr.mxu0 0.0
      %1245 = vmatpush2.msra.mxu0 0.0
      %1246 = vmatprep.subr.mxu0 0.0
      %1247 = vmatpush2.msra.mxu0 0.0
      %1248 = vmatprep.subr.mxu0 0.0
      %1249 = vmatpush2.msra.mxu0 0.0
      %1250 = vmatprep.subr.mxu0 0.0
      %1251 = vmatpush2.msra.mxu0 0.0
      %1252 = vmatprep.subr.mxu0 0.0
      %1253 = vmatpush2.msra.mxu0 0.0
      %1254 = vmatprep.subr.mxu0 0.0
      %1255 = vmatpush2.msra.mxu0 0.0
      %1256 = vmatprep.subr.mxu0 0.0
      %1257 = vmatpush2.msra.mxu0 0.0
      %1258 = vmatprep.subr.mxu0 0.0
      %1259 = vmatpush2.msra.mxu0 0.0
      %1260 = vmatprep.subr.mxu0 0.0
      %1261 = vmatpush2.msra.mxu0 0.0
      %1262 = vmatprep.mubr.f32.mxu0 0.0
      %1263 = vmatmul.mubr.f32.gmra.mxu0 %v363
      %v1264 = vpop.f32.mrf.mxu0
      %v1265 = vadd.f32 0.0, %v1264
      %v1266 = vpop.f32.mrf.mxu0
      %1267 = vmatprep.mubr.f32.mxu0 0.0
      %1268 = vmatmul.mubr.f32.gmra.mxu0 %v366
      %v1269 = vpop.f32.mrf.mxu0
      %v1270 = vadd.f32 0.0, %v1269
      %v1271 = vpop.f32.mrf.mxu0
      %1272 = vmatprep.mubr.f32.mxu0 0.0
      %1273 = vmatmul.mubr.f32.gmra.mxu0 %v369
      %v1274 = vpop.f32.mrf.mxu0
      %v1275 = vadd.f32 0.0, %v1274
      %v1276 = vpop.f32.mrf.mxu0
      %1277 = vmatprep.mubr.f32.mxu0 0.0
      %1278 = vmatmul.mubr.f32.gmra.mxu0 %v372
      %v1279 = vpop.f32.mrf.mxu0
      %v1280 = vadd.f32 0.0, %v1279
      %v1281 = vpop.f32.mrf.mxu0
      %1282 = vmatprep.mubr.f32.mxu0 0.0
      %1283 = vmatmul.mubr.f32.gmra.mxu0 %v375
      %v1284 = vpop.f32.mrf.mxu0
      %v1285 = vadd.f32 0.0, %v1284
      %v1286 = vpop.f32.mrf.mxu0
      %1287 = vmatprep.mubr.f32.mxu0 0.0
      %1288 = vmatmul.mubr.f32.gmra.mxu0 %v378
      %v1289 = vpop.f32.mrf.mxu0
      %v1290 = vadd.f32 0.0, %v1289
      %v1291 = vpop.f32.mrf.mxu0
      %1292 = vmatprep.mubr.f32.mxu0 0.0
      %1293 = vmatmul.mubr.f32.gmra.mxu0 %v381
      %v1294 = vpop.f32.mrf.mxu0
      %v1295 = vadd.f32 0.0, %v1294
      %v1296 = vpop.f32.mrf.mxu0
      %1297 = vmatprep.mubr.f32.mxu0 0.0
      %1298 = vmatmul.mubr.f32.gmra.mxu0 %v384
      %v1299 = vpop.f32.mrf.mxu0
      %v1300 = vadd.f32 0.0, %v1299
      %v1301 = vpop.f32.mrf.mxu0
      %1302 = vmatprep.mubr.f32.mxu0 0.0
      %1303 = vmatmul.mubr.f32.gmra.mxu0 %v387
      %v1304 = vpop.f32.mrf.mxu0
      %v1305 = vadd.f32 0.0, %v1304
      %v1306 = vpop.f32.mrf.mxu0
      %1307 = vmatprep.mubr.f32.mxu0 0.0
      %1308 = vmatmul.mubr.f32.gmra.mxu0 %v390
      %v1309 = vpop.f32.mrf.mxu0
      %v1310 = vadd.f32 0.0, %v1309
      %v1311 = vpop.f32.mrf.mxu0
      %1312 = vmatprep.mubr.f32.mxu0 0.0
      %1313 = vmatmul.mubr.f32.gmra.mxu0 %v393
      %v1314 = vpop.f32.mrf.mxu0
      %v1315 = vadd.f32 0.0, %v1314
      %v1316 = vpop.f32.mrf.mxu0
      %1317 = vmatprep.mubr.f32.mxu0 0.0
      %1318 = vmatmul.mubr.f32.gmra.mxu0 %v396
      %v1319 = vpop.f32.mrf.mxu0
      %v1320 = vadd.f32 0.0, %v1319
      %v1321 = vpop.f32.mrf.mxu0
      %1322 = vmatprep.mubr.f32.mxu0 0.0
      %1323 = vmatmul.mubr.f32.gmra.mxu0 %v399
      %v1324 = vpop.f32.mrf.mxu0
      %v1325 = vadd.f32 0.0, %v1324
      %v1326 = vpop.f32.mrf.mxu0
      %1327 = vmatprep.mubr.f32.mxu0 0.0
      %1328 = vmatmul.mubr.f32.gmra.mxu0 %v402
      %v1329 = vpop.f32.mrf.mxu0
      %v1330 = vadd.f32 0.0, %v1329
      %v1331 = vpop.f32.mrf.mxu0
      %1332 = vmatprep.mubr.f32.mxu0 0.0
      %1333 = vmatmul.mubr.f32.gmra.mxu0 %v405
      %v1334 = vpop.f32.mrf.mxu0
      %v1335 = vadd.f32 0.0, %v1334
      %v1336 = vpop.f32.mrf.mxu0
      %1337 = vmatprep.mubr.f32.mxu0 0.0
      %1338 = vmatmul.mubr.f32.gmra.mxu0 %v408
      %v1339 = vpop.f32.mrf.mxu0
      %v1340 = vadd.f32 0.0, %v1339
      %v1341 = vpop.f32.mrf.mxu0
      %1342 = vdwg.mxu0
      %v1343 = vmax.f32 %v1265, 0.0
      %v1344 = vmax.f32 %v1270, 0.0
      %v1345 = vmax.f32 %v1275, 0.0
      %v1346 = vmax.f32 %v1280, 0.0
      %v1347 = vmax.f32 %v1285, 0.0
      %v1348 = vmax.f32 %v1290, 0.0
      %v1349 = vmax.f32 %v1295, 0.0
      %v1350 = vmax.f32 %v1300, 0.0
      %v1351 = vmax.f32 %v1305, 0.0
      %v1352 = vmax.f32 %v1310, 0.0
      %v1353 = vmax.f32 %v1315, 0.0
      %v1354 = vmax.f32 %v1320, 0.0
      %v1355 = vmax.f32 %v1325, 0.0
      %v1356 = vmax.f32 %v1330, 0.0
      %v1357 = vmax.f32 %v1335, 0.0
      %v1358 = vmax.f32 %v1340, 0.0
      %v1359 = vmul.f32 %v1179, %v1179
      %v1360 = vmul.f32 %v1180, %v1180
      %v1361 = vmul.f32 %v1181, %v1181
      %v1362 = vmul.f32 %v1182, %v1182
      %v1363 = vmul.f32 %v1183, %v1183
      %v1364 = vmul.f32 %v1184, %v1184
      %v1365 = vmul.f32 %v1185, %v1185
      %v1366 = vmul.f32 %v1186, %v1186
      %v1367 = vmul.f32 %v1187, %v1187
      %v1368 = vmul.f32 %v1188, %v1188
      %v1369 = vmul.f32 %v1189, %v1189
      %v1370 = vmul.f32 %v1190, %v1190
      %v1371 = vmul.f32 %v1191, %v1191
      %v1372 = vmul.f32 %v1192, %v1192
      %v1373 = vmul.f32 %v1193, %v1193
      %v1374 = vmul.f32 %v1194, %v1194
      %1375 = vmatprep.subr.mxu0 0.0
      %1376 = vmatpush1.msra.mxu0 %v1374
      %1377 = vmatprep.subr.mxu0 0.0
      %1378 = vmatpush1.msra.mxu0 %v1373
      %1379 = vmatprep.subr.mxu0 0.0
      %1380 = vmatpush1.msra.mxu0 %v1372
      %1381 = vmatprep.subr.mxu0 0.0
      %1382 = vmatpush1.msra.mxu0 %v1371
      %1383 = vmatprep.subr.mxu0 0.0
      %1384 = vmatpush1.msra.mxu0 %v1370
      %1385 = vmatprep.subr.mxu0 0.0
      %1386 = vmatpush1.msra.mxu0 %v1369
      %1387 = vmatprep.subr.mxu0 0.0
      %1388 = vmatpush1.msra.mxu0 %v1368
      %1389 = vmatprep.subr.mxu0 0.0
      %1390 = vmatpush1.msra.mxu0 %v1367
      %1391 = vmatprep.subr.mxu0 0.0
      %1392 = vmatpush1.msra.mxu0 %v1366
      %1393 = vmatprep.subr.mxu0 0.0
      %1394 = vmatpush1.msra.mxu0 %v1365
      %1395 = vmatprep.subr.mxu0 0.0
      %1396 = vmatpush1.msra.mxu0 %v1364
      %1397 = vmatprep.subr.mxu0 0.0
      %1398 = vmatpush1.msra.mxu0 %v1363
      %1399 = vmatprep.subr.mxu0 0.0
      %1400 = vmatpush1.msra.mxu0 %v1362
      %1401 = vmatprep.subr.mxu0 0.0
      %1402 = vmatpush1.msra.mxu0 %v1361
      %1403 = vmatprep.subr.mxu0 0.0
      %1404 = vmatpush1.msra.mxu0 %v1360
      %1405 = vmatprep.subr.mxu0 0.0
      %1406 = vmatpush1.msra.mxu0 %v1359
      %1407 = vmatprep.subr.mxu0 0.0
      %1408 = vmatpush2.msra.mxu0 0.0
      %1409 = vmatprep.subr.mxu0 0.0
      %1410 = vmatpush2.msra.mxu0 0.0
      %1411 = vmatprep.subr.mxu0 0.0
      %1412 = vmatpush2.msra.mxu0 0.0
      %1413 = vmatprep.subr.mxu0 0.0
      %1414 = vmatpush2.msra.mxu0 0.0
      %1415 = vmatprep.subr.mxu0 0.0
      %1416 = vmatpush2.msra.mxu0 0.0
      %1417 = vmatprep.subr.mxu0 0.0
      %1418 = vmatpush2.msra.mxu0 0.0
      %1419 = vmatprep.subr.mxu0 0.0
      %1420 = vmatpush2.msra.mxu0 0.0
      %1421 = vmatprep.subr.mxu0 0.0
      %1422 = vmatpush2.msra.mxu0 0.0
      %1423 = vmatprep.subr.mxu0 0.0
      %1424 = vmatpush2.msra.mxu0 0.0
      %1425 = vmatprep.subr.mxu0 0.0
      %1426 = vmatpush2.msra.mxu0 0.0
      %1427 = vmatprep.subr.mxu0 0.0
      %1428 = vmatpush2.msra.mxu0 0.0
      %1429 = vmatprep.subr.mxu0 0.0
      %1430 = vmatpush2.msra.mxu0 0.0
      %1431 = vmatprep.subr.mxu0 0.0
      %1432 = vmatpush2.msra.mxu0 0.0
      %1433 = vmatprep.subr.mxu0 0.0
      %1434 = vmatpush2.msra.mxu0 0.0
      %1435 = vmatprep.subr.mxu0 0.0
      %1436 = vmatpush2.msra.mxu0 0.0
      %1437 = vmatprep.subr.mxu0 0.0
      %1438 = vmatpush2.msra.mxu0 0.0
      %1439 = vmatprep.mubr.f32.mxu0 0.0
      %1440 = vmatmul.mubr.f32.gmra.mxu0 %v347
      %v1441 = vpop.f32.mrf.mxu0
      %v1442 = vadd.f32 0.0, %v1441
      %v1443 = vpop.f32.mrf.mxu0
      %1444 = vdwg.mxu0
      %v1445 = vmul.f32 %v1343, %v1343
      %v1446 = vmul.f32 %v1344, %v1344
      %v1447 = vmul.f32 %v1345, %v1345
      %v1448 = vmul.f32 %v1346, %v1346
      %v1449 = vmul.f32 %v1347, %v1347
      %v1450 = vmul.f32 %v1348, %v1348
      %v1451 = vmul.f32 %v1349, %v1349
      %v1452 = vmul.f32 %v1350, %v1350
      %v1453 = vmul.f32 %v1351, %v1351
      %v1454 = vmul.f32 %v1352, %v1352
      %v1455 = vmul.f32 %v1353, %v1353
      %v1456 = vmul.f32 %v1354, %v1354
      %v1457 = vmul.f32 %v1355, %v1355
      %v1458 = vmul.f32 %v1356, %v1356
      %v1459 = vmul.f32 %v1357, %v1357
      %v1460 = vmul.f32 %v1358, %v1358
      %1461 = vmatprep.subr.mxu0 0.0
      %1462 = vmatpush1.msra.mxu0 %v1460
      %1463 = vmatprep.subr.mxu0 0.0
      %1464 = vmatpush1.msra.mxu0 %v1459
      %1465 = vmatprep.subr.mxu0 0.0
      %1466 = vmatpush1.msra.mxu0 %v1458
      %1467 = vmatprep.subr.mxu0 0.0
      %1468 = vmatpush1.msra.mxu0 %v1457
      %1469 = vmatprep.subr.mxu0 0.0
      %1470 = vmatpush1.msra.mxu0 %v1456
      %1471 = vmatprep.subr.mxu0 0.0
      %1472 = vmatpush1.msra.mxu0 %v1455
      %1473 = vmatprep.subr.mxu0 0.0
      %1474 = vmatpush1.msra.mxu0 %v1454
      %1475 = vmatprep.subr.mxu0 0.0
      %1476 = vmatpush1.msra.mxu0 %v1453
      %1477 = vmatprep.subr.mxu0 0.0
      %1478 = vmatpush1.msra.mxu0 %v1452
      %1479 = vmatprep.subr.mxu0 0.0
      %1480 = vmatpush1.msra.mxu0 %v1451
      %1481 = vmatprep.subr.mxu0 0.0
      %1482 = vmatpush1.msra.mxu0 %v1450
      %1483 = vmatprep.subr.mxu0 0.0
      %1484 = vmatpush1.msra.mxu0 %v1449
      %1485 = vmatprep.subr.mxu0 0.0
      %1486 = vmatpush1.msra.mxu0 %v1448
      %1487 = vmatprep.subr.mxu0 0.0
      %1488 = vmatpush1.msra.mxu0 %v1447
      %1489 = vmatprep.subr.mxu0 0.0
      %1490 = vmatpush1.msra.mxu0 %v1446
      %1491 = vmatprep.subr.mxu0 0.0
      %1492 = vmatpush1.msra.mxu0 %v1445
      %1493 = vmatprep.subr.mxu0 0.0
      %1494 = vmatpush2.msra.mxu0 0.0
      %1495 = vmatprep.subr.mxu0 0.0
      %1496 = vmatpush2.msra.mxu0 0.0
      %1497 = vmatprep.subr.mxu0 0.0
      %1498 = vmatpush2.msra.mxu0 0.0
      %1499 = vmatprep.subr.mxu0 0.0
      %1500 = vmatpush2.msra.mxu0 0.0
      %1501 = vmatprep.subr.mxu0 0.0
      %1502 = vmatpush2.msra.mxu0 0.0
      %1503 = vmatprep.subr.mxu0 0.0
      %1504 = vmatpush2.msra.mxu0 0.0
      %1505 = vmatprep.subr.mxu0 0.0
      %1506 = vmatpush2.msra.mxu0 0.0
      %1507 = vmatprep.subr.mxu0 0.0
      %1508 = vmatpush2.msra.mxu0 0.0
      %1509 = vmatprep.subr.mxu0 0.0
      %1510 = vmatpush2.msra.mxu0 0.0
      %1511 = vmatprep.subr.mxu0 0.0
      %1512 = vmatpush2.msra.mxu0 0.0
      %1513 = vmatprep.subr.mxu0 0.0
      %1514 = vmatpush2.msra.mxu0 0.0
      %1515 = vmatprep.subr.mxu0 0.0
      %1516 = vmatpush2.msra.mxu0 0.0
      %1517 = vmatprep.subr.mxu0 0.0
      %1518 = vmatpush2.msra.mxu0 0.0
      %1519 = vmatprep.subr.mxu0 0.0
      %1520 = vmatpush2.msra.mxu0 0.0
      %1521 = vmatprep.subr.mxu0 0.0
      %1522 = vmatpush2.msra.mxu0 0.0
      %1523 = vmatprep.subr.mxu0 0.0
      %1524 = vmatpush2.msra.mxu0 0.0
      %1525 = vmatprep.mubr.f32.mxu0 0.0
      %1526 = vmatmul.mubr.f32.gmra.mxu0 %v347
      %v1527 = vpop.f32.mrf.mxu0
      %v1528 = vadd.f32 0.0, %v1527
      %v1529 = vpop.f32.mrf.mxu0
      %1530 = vdwg.mxu0
      %v1531 = vmul.f32 %v1179, %v1343
      %v1532 = vmul.f32 %v1180, %v1344
      %v1533 = vmul.f32 %v1181, %v1345
      %v1534 = vmul.f32 %v1182, %v1346
      %v1535 = vmul.f32 %v1183, %v1347
      %v1536 = vmul.f32 %v1184, %v1348
      %v1537 = vmul.f32 %v1185, %v1349
      %v1538 = vmul.f32 %v1186, %v1350
      %v1539 = vmul.f32 %v1187, %v1351
      %v1540 = vmul.f32 %v1188, %v1352
      %v1541 = vmul.f32 %v1189, %v1353
      %v1542 = vmul.f32 %v1190, %v1354
      %v1543 = vmul.f32 %v1191, %v1355
      %v1544 = vmul.f32 %v1192, %v1356
      %v1545 = vmul.f32 %v1193, %v1357
      %v1546 = vmul.f32 %v1194, %v1358
      %1547 = vmatprep.subr.mxu0 0.0
      %1548 = vmatpush1.msra.mxu0 %v1546
      %1549 = vmatprep.subr.mxu0 0.0
      %1550 = vmatpush1.msra.mxu0 %v1545
      %1551 = vmatprep.subr.mxu0 0.0
      %1552 = vmatpush1.msra.mxu0 %v1544
      %1553 = vmatprep.subr.mxu0 0.0
      %1554 = vmatpush1.msra.mxu0 %v1543
      %1555 = vmatprep.subr.mxu0 0.0
      %1556 = vmatpush1.msra.mxu0 %v1542
      %1557 = vmatprep.subr.mxu0 0.0
      %1558 = vmatpush1.msra.mxu0 %v1541
      %1559 = vmatprep.subr.mxu0 0.0
      %1560 = vmatpush1.msra.mxu0 %v1540
      %1561 = vmatprep.subr.mxu0 0.0
      %1562 = vmatpush1.msra.mxu0 %v1539
      %1563 = vmatprep.subr.mxu0 0.0
      %1564 = vmatpush1.msra.mxu0 %v1538
      %1565 = vmatprep.subr.mxu0 0.0
      %1566 = vmatpush1.msra.mxu0 %v1537
      %1567 = vmatprep.subr.mxu0 0.0
      %1568 = vmatpush1.msra.mxu0 %v1536
      %1569 = vmatprep.subr.mxu0 0.0
      %1570 = vmatpush1.msra.mxu0 %v1535
      %1571 = vmatprep.subr.mxu0 0.0
      %1572 = vmatpush1.msra.mxu0 %v1534
      %1573 = vmatprep.subr.mxu0 0.0
      %1574 = vmatpush1.msra.mxu0 %v1533
      %1575 = vmatprep.subr.mxu0 0.0
      %1576 = vmatpush1.msra.mxu0 %v1532
      %1577 = vmatprep.subr.mxu0 0.0
      %1578 = vmatpush1.msra.mxu0 %v1531
      %1579 = vmatprep.subr.mxu0 0.0
      %1580 = vmatpush2.msra.mxu0 0.0
      %1581 = vmatprep.subr.mxu0 0.0
      %1582 = vmatpush2.msra.mxu0 0.0
      %1583 = vmatprep.subr.mxu0 0.0
      %1584 = vmatpush2.msra.mxu0 0.0
      %1585 = vmatprep.subr.mxu0 0.0
      %1586 = vmatpush2.msra.mxu0 0.0
      %1587 = vmatprep.subr.mxu0 0.0
      %1588 = vmatpush2.msra.mxu0 0.0
      %1589 = vmatprep.subr.mxu0 0.0
      %1590 = vmatpush2.msra.mxu0 0.0
      %1591 = vmatprep.subr.mxu0 0.0
      %1592 = vmatpush2.msra.mxu0 0.0
      %1593 = vmatprep.subr.mxu0 0.0
      %1594 = vmatpush2.msra.mxu0 0.0
      %1595 = vmatprep.subr.mxu0 0.0
      %1596 = vmatpush2.msra.mxu0 0.0
      %1597 = vmatprep.subr.mxu0 0.0
      %1598 = vmatpush2.msra.mxu0 0.0
      %1599 = vmatprep.subr.mxu0 0.0
      %1600 = vmatpush2.msra.mxu0 0.0
      %1601 = vmatprep.subr.mxu0 0.0
      %1602 = vmatpush2.msra.mxu0 0.0
      %1603 = vmatprep.subr.mxu0 0.0
      %1604 = vmatpush2.msra.mxu0 0.0
      %1605 = vmatprep.subr.mxu0 0.0
      %1606 = vmatpush2.msra.mxu0 0.0
      %1607 = vmatprep.subr.mxu0 0.0
      %1608 = vmatpush2.msra.mxu0 0.0
      %1609 = vmatprep.subr.mxu0 0.0
      %1610 = vmatpush2.msra.mxu0 0.0
      %1611 = vmatprep.mubr.f32.mxu0 0.0
      %1612 = vmatmul.mubr.f32.gmra.mxu0 %v347
      %v1613 = vpop.f32.mrf.mxu0
      %v1614 = vadd.f32 0.0, %v1613
      %v1615 = vpop.f32.mrf.mxu0
      %1616 = vdwg.mxu0
      %v1617 = vadd.f32 %v1442, 1e-10
      %v1618 = vrsqrt.pop %v1617
      %v1619 = vadd.f32 %v1528, 1e-10
      %v1620 = vrsqrt.pop %v1619
      %v1621 = vmul.f32 %v1618, %v1618
      %v1623 = vrot.slane %v1621, 7
      %v1625 = vmul.f32 %v1442, %v1623
      %v1626 = vmul.f32 %v1620, %v1620
      %v1628 = vrot.slane %v1626, 7
      %v1630 = vmul.f32 %v1528, %v1628
      %v1631 = vadd.f32 %v1625, %v1630
      %v1632 = vmul.f32 %v1618, %v1620
      %v1634 = vrot.slane %v1632, 7
      %v1636 = vmul.f32 %v1614, %v1634
      %v1637 = vmul.f32 %v1636, 2.0
      %v1638 = vsub.f32 %v1631, %v1637
      %v1639 = vadd.f32 %v1018, %v1638
      %v1640 = vld [vmem:[%s304 + $0x8] sm:$0x7]
      %v1641 = vld [vmem:[%s316 + $0x8] sm:$0x7]
      %v1642 = vsub.f32 %v1640, %v1641
      %v1643 = vand.u32 2147483647, %v1642
      %v1644 = vsel %vm352, %v1643, 0.0
      %v1645 = vrot.slane %v1644, 4
      %v1646 = vadd.f32 %v1644, %v1645
      %v1647 = vrot.slane %v1646, 2
      %v1648 = vadd.f32 %v1646, %v1647
      %v1649 = vrot.slane %v1648, 1
      %v1650 = vadd.f32 %v1648, %v1649
      %v1651 = vadd.f32 %v1030, %v1650
      %v1653 = vsel %vm352, %v1640, 0
      %1655 = vmatprep.subr.mxu0 0.0
      %1656 = vmatpush1.msra.mxu0 0.0
      %1657 = vmatprep.subr.mxu0 0.0
      %1658 = vmatpush1.msra.mxu0 0.0
      %1659 = vmatprep.subr.mxu0 0.0
      %1660 = vmatpush1.msra.mxu0 0.0
      %1661 = vmatprep.subr.mxu0 0.0
      %1662 = vmatpush1.msra.mxu0 0.0
      %1663 = vmatprep.subr.mxu0 0.0
      %1664 = vmatpush1.msra.mxu0 0.0
      %1665 = vmatprep.subr.mxu0 0.0
      %1666 = vmatpush1.msra.mxu0 0.0
      %1667 = vmatprep.subr.mxu0 0.0
      %1668 = vmatpush1.msra.mxu0 0.0
      %1669 = vmatprep.subr.mxu0 0.0
      %1670 = vmatpush1.msra.mxu0 0.0
      %1671 = vmatprep.subr.mxu0 0.0
      %1672 = vmatpush1.msra.mxu0 0.0
      %1673 = vmatprep.subr.mxu0 0.0
      %1674 = vmatpush1.msra.mxu0 0.0
      %1675 = vmatprep.subr.mxu0 0.0
      %1676 = vmatpush1.msra.mxu0 0.0
      %1677 = vmatprep.subr.mxu0 0.0
      %1678 = vmatpush1.msra.mxu0 0.0
      %1679 = vmatprep.subr.mxu0 0.0
      %1680 = vmatpush1.msra.mxu0 0.0
      %1681 = vmatprep.subr.mxu0 0.0
      %1682 = vmatpush1.msra.mxu0 0.0
      %1683 = vmatprep.subr.mxu0 0.0
      %1684 = vmatpush1.msra.mxu0 0.0
      %1685 = vmatprep.subr.mxu0 0.0
      %1686 = vmatpush1.msra.mxu0 %v1653
      %1687 = vmatprep.subr.mxu0 0.0
      %1688 = vmatpush2.msra.mxu0 0.0
      %1689 = vmatprep.subr.mxu0 0.0
      %1690 = vmatpush2.msra.mxu0 0.0
      %1691 = vmatprep.subr.mxu0 0.0
      %1692 = vmatpush2.msra.mxu0 0.0
      %1693 = vmatprep.subr.mxu0 0.0
      %1694 = vmatpush2.msra.mxu0 0.0
      %1695 = vmatprep.subr.mxu0 0.0
      %1696 = vmatpush2.msra.mxu0 0.0
      %1697 = vmatprep.subr.mxu0 0.0
      %1698 = vmatpush2.msra.mxu0 0.0
      %1699 = vmatprep.subr.mxu0 0.0
      %1700 = vmatpush2.msra.mxu0 0.0
      %1701 = vmatprep.subr.mxu0 0.0
      %1702 = vmatpush2.msra.mxu0 0.0
      %1703 = vmatprep.subr.mxu0 0.0
      %1704 = vmatpush2.msra.mxu0 0.0
      %1705 = vmatprep.subr.mxu0 0.0
      %1706 = vmatpush2.msra.mxu0 0.0
      %1707 = vmatprep.subr.mxu0 0.0
      %1708 = vmatpush2.msra.mxu0 0.0
      %1709 = vmatprep.subr.mxu0 0.0
      %1710 = vmatpush2.msra.mxu0 0.0
      %1711 = vmatprep.subr.mxu0 0.0
      %1712 = vmatpush2.msra.mxu0 0.0
      %1713 = vmatprep.subr.mxu0 0.0
      %1714 = vmatpush2.msra.mxu0 0.0
      %1715 = vmatprep.subr.mxu0 0.0
      %1716 = vmatpush2.msra.mxu0 0.0
      %1717 = vmatprep.subr.mxu0 0.0
      %1718 = vmatpush2.msra.mxu0 0.0
      %1719 = vmatprep.mubr.f32.mxu0 0.0
      %1720 = vmatmul.mubr.f32.gmra.mxu0 %v363
      %v1721 = vpop.f32.mrf.mxu0
      %v1722 = vadd.f32 0.0, %v1721
      %v1723 = vpop.f32.mrf.mxu0
      %1724 = vmatprep.mubr.f32.mxu0 0.0
      %1725 = vmatmul.mubr.f32.gmra.mxu0 %v366
      %v1726 = vpop.f32.mrf.mxu0
      %v1727 = vadd.f32 0.0, %v1726
      %v1728 = vpop.f32.mrf.mxu0
      %1729 = vmatprep.mubr.f32.mxu0 0.0
      %1730 = vmatmul.mubr.f32.gmra.mxu0 %v369
      %v1731 = vpop.f32.mrf.mxu0
      %v1732 = vadd.f32 0.0, %v1731
      %v1733 = vpop.f32.mrf.mxu0
      %1734 = vmatprep.mubr.f32.mxu0 0.0
      %1735 = vmatmul.mubr.f32.gmra.mxu0 %v372
      %v1736 = vpop.f32.mrf.mxu0
      %v1737 = vadd.f32 0.0, %v1736
      %v1738 = vpop.f32.mrf.mxu0
      %1739 = vmatprep.mubr.f32.mxu0 0.0
      %1740 = vmatmul.mubr.f32.gmra.mxu0 %v375
      %v1741 = vpop.f32.mrf.mxu0
      %v1742 = vadd.f32 0.0, %v1741
      %v1743 = vpop.f32.mrf.mxu0
      %1744 = vmatprep.mubr.f32.mxu0 0.0
      %1745 = vmatmul.mubr.f32.gmra.mxu0 %v378
      %v1746 = vpop.f32.mrf.mxu0
      %v1747 = vadd.f32 0.0, %v1746
      %v1748 = vpop.f32.mrf.mxu0
      %1749 = vmatprep.mubr.f32.mxu0 0.0
      %1750 = vmatmul.mubr.f32.gmra.mxu0 %v381
      %v1751 = vpop.f32.mrf.mxu0
      %v1752 = vadd.f32 0.0, %v1751
      %v1753 = vpop.f32.mrf.mxu0
      %1754 = vmatprep.mubr.f32.mxu0 0.0
      %1755 = vmatmul.mubr.f32.gmra.mxu0 %v384
      %v1756 = vpop.f32.mrf.mxu0
      %v1757 = vadd.f32 0.0, %v1756
      %v1758 = vpop.f32.mrf.mxu0
      %1759 = vmatprep.mubr.f32.mxu0 0.0
      %1760 = vmatmul.mubr.f32.gmra.mxu0 %v387
      %v1761 = vpop.f32.mrf.mxu0
      %v1762 = vadd.f32 0.0, %v1761
      %v1763 = vpop.f32.mrf.mxu0
      %1764 = vmatprep.mubr.f32.mxu0 0.0
      %1765 = vmatmul.mubr.f32.gmra.mxu0 %v390
      %v1766 = vpop.f32.mrf.mxu0
      %v1767 = vadd.f32 0.0, %v1766
      %v1768 = vpop.f32.mrf.mxu0
      %1769 = vmatprep.mubr.f32.mxu0 0.0
      %1770 = vmatmul.mubr.f32.gmra.mxu0 %v393
      %v1771 = vpop.f32.mrf.mxu0
      %v1772 = vadd.f32 0.0, %v1771
      %v1773 = vpop.f32.mrf.mxu0
      %1774 = vmatprep.mubr.f32.mxu0 0.0
      %1775 = vmatmul.mubr.f32.gmra.mxu0 %v396
      %v1776 = vpop.f32.mrf.mxu0
      %v1777 = vadd.f32 0.0, %v1776
      %v1778 = vpop.f32.mrf.mxu0
      %1779 = vmatprep.mubr.f32.mxu0 0.0
      %1780 = vmatmul.mubr.f32.gmra.mxu0 %v399
      %v1781 = vpop.f32.mrf.mxu0
      %v1782 = vadd.f32 0.0, %v1781
      %v1783 = vpop.f32.mrf.mxu0
      %1784 = vmatprep.mubr.f32.mxu0 0.0
      %1785 = vmatmul.mubr.f32.gmra.mxu0 %v402
      %v1786 = vpop.f32.mrf.mxu0
      %v1787 = vadd.f32 0.0, %v1786
      %v1788 = vpop.f32.mrf.mxu0
      %1789 = vmatprep.mubr.f32.mxu0 0.0
      %1790 = vmatmul.mubr.f32.gmra.mxu0 %v405
      %v1791 = vpop.f32.mrf.mxu0
      %v1792 = vadd.f32 0.0, %v1791
      %v1793 = vpop.f32.mrf.mxu0
      %1794 = vmatprep.mubr.f32.mxu0 0.0
      %1795 = vmatmul.mubr.f32.gmra.mxu0 %v408
      %v1796 = vpop.f32.mrf.mxu0
      %v1797 = vadd.f32 0.0, %v1796
      %v1798 = vpop.f32.mrf.mxu0
      %1799 = vdwg.mxu0
      %v1800 = vmax.f32 %v1722, 0.0
      %v1801 = vmax.f32 %v1727, 0.0
      %v1802 = vmax.f32 %v1732, 0.0
      %v1803 = vmax.f32 %v1737, 0.0
      %v1804 = vmax.f32 %v1742, 0.0
      %v1805 = vmax.f32 %v1747, 0.0
      %v1806 = vmax.f32 %v1752, 0.0
      %v1807 = vmax.f32 %v1757, 0.0
      %v1808 = vmax.f32 %v1762, 0.0
      %v1809 = vmax.f32 %v1767, 0.0
      %v1810 = vmax.f32 %v1772, 0.0
      %v1811 = vmax.f32 %v1777, 0.0
      %v1812 = vmax.f32 %v1782, 0.0
      %v1813 = vmax.f32 %v1787, 0.0
      %v1814 = vmax.f32 %v1792, 0.0
      %v1815 = vmax.f32 %v1797, 0.0
      %v1817 = vsel %vm352, %v1641, 0
      %1819 = vmatprep.subr.mxu0 0.0
      %1820 = vmatpush1.msra.mxu0 0.0
      %1821 = vmatprep.subr.mxu0 0.0
      %1822 = vmatpush1.msra.mxu0 0.0
      %1823 = vmatprep.subr.mxu0 0.0
      %1824 = vmatpush1.msra.mxu0 0.0
      %1825 = vmatprep.subr.mxu0 0.0
      %1826 = vmatpush1.msra.mxu0 0.0
      %1827 = vmatprep.subr.mxu0 0.0
      %1828 = vmatpush1.msra.mxu0 0.0
      %1829 = vmatprep.subr.mxu0 0.0
      %1830 = vmatpush1.msra.mxu0 0.0
      %1831 = vmatprep.subr.mxu0 0.0
      %1832 = vmatpush1.msra.mxu0 0.0
      %1833 = vmatprep.subr.mxu0 0.0
      %1834 = vmatpush1.msra.mxu0 0.0
      %1835 = vmatprep.subr.mxu0 0.0
      %1836 = vmatpush1.msra.mxu0 0.0
      %1837 = vmatprep.subr.mxu0 0.0
      %1838 = vmatpush1.msra.mxu0 0.0
      %1839 = vmatprep.subr.mxu0 0.0
      %1840 = vmatpush1.msra.mxu0 0.0
      %1841 = vmatprep.subr.mxu0 0.0
      %1842 = vmatpush1.msra.mxu0 0.0
      %1843 = vmatprep.subr.mxu0 0.0
      %1844 = vmatpush1.msra.mxu0 0.0
      %1845 = vmatprep.subr.mxu0 0.0
      %1846 = vmatpush1.msra.mxu0 0.0
      %1847 = vmatprep.subr.mxu0 0.0
      %1848 = vmatpush1.msra.mxu0 0.0
      %1849 = vmatprep.subr.mxu0 0.0
      %1850 = vmatpush1.msra.mxu0 %v1817
      %1851 = vmatprep.subr.mxu0 0.0
      %1852 = vmatpush2.msra.mxu0 0.0
      %1853 = vmatprep.subr.mxu0 0.0
      %1854 = vmatpush2.msra.mxu0 0.0
      %1855 = vmatprep.subr.mxu0 0.0
      %1856 = vmatpush2.msra.mxu0 0.0
      %1857 = vmatprep.subr.mxu0 0.0
      %1858 = vmatpush2.msra.mxu0 0.0
      %1859 = vmatprep.subr.mxu0 0.0
      %1860 = vmatpush2.msra.mxu0 0.0
      %1861 = vmatprep.subr.mxu0 0.0
      %1862 = vmatpush2.msra.mxu0 0.0
      %1863 = vmatprep.subr.mxu0 0.0
      %1864 = vmatpush2.msra.mxu0 0.0
      %1865 = vmatprep.subr.mxu0 0.0
      %1866 = vmatpush2.msra.mxu0 0.0
      %1867 = vmatprep.subr.mxu0 0.0
      %1868 = vmatpush2.msra.mxu0 0.0
      %1869 = vmatprep.subr.mxu0 0.0
      %1870 = vmatpush2.msra.mxu0 0.0
      %1871 = vmatprep.subr.mxu0 0.0
      %1872 = vmatpush2.msra.mxu0 0.0
      %1873 = vmatprep.subr.mxu0 0.0
      %1874 = vmatpush2.msra.mxu0 0.0
      %1875 = vmatprep.subr.mxu0 0.0
      %1876 = vmatpush2.msra.mxu0 0.0
      %1877 = vmatprep.subr.mxu0 0.0
      %1878 = vmatpush2.msra.mxu0 0.0
      %1879 = vmatprep.subr.mxu0 0.0
      %1880 = vmatpush2.msra.mxu0 0.0
      %1881 = vmatprep.subr.mxu0 0.0
      %1882 = vmatpush2.msra.mxu0 0.0
      %1883 = vmatprep.mubr.f32.mxu0 0.0
      %1884 = vmatmul.mubr.f32.gmra.mxu0 %v363
      %v1885 = vpop.f32.mrf.mxu0
      %v1886 = vadd.f32 0.0, %v1885
      %v1887 = vpop.f32.mrf.mxu0
      %1888 = vmatprep.mubr.f32.mxu0 0.0
      %1889 = vmatmul.mubr.f32.gmra.mxu0 %v366
      %v1890 = vpop.f32.mrf.mxu0
      %v1891 = vadd.f32 0.0, %v1890
      %v1892 = vpop.f32.mrf.mxu0
      %1893 = vmatprep.mubr.f32.mxu0 0.0
      %1894 = vmatmul.mubr.f32.gmra.mxu0 %v369
      %v1895 = vpop.f32.mrf.mxu0
      %v1896 = vadd.f32 0.0, %v1895
      %v1897 = vpop.f32.mrf.mxu0
      %1898 = vmatprep.mubr.f32.mxu0 0.0
      %1899 = vmatmul.mubr.f32.gmra.mxu0 %v372
      %v1900 = vpop.f32.mrf.mxu0
      %v1901 = vadd.f32 0.0, %v1900
      %v1902 = vpop.f32.mrf.mxu0
      %1903 = vmatprep.mubr.f32.mxu0 0.0
      %1904 = vmatmul.mubr.f32.gmra.mxu0 %v375
      %v1905 = vpop.f32.mrf.mxu0
      %v1906 = vadd.f32 0.0, %v1905
      %v1907 = vpop.f32.mrf.mxu0
      %1908 = vmatprep.mubr.f32.mxu0 0.0
      %1909 = vmatmul.mubr.f32.gmra.mxu0 %v378
      %v1910 = vpop.f32.mrf.mxu0
      %v1911 = vadd.f32 0.0, %v1910
      %v1912 = vpop.f32.mrf.mxu0
      %1913 = vmatprep.mubr.f32.mxu0 0.0
      %1914 = vmatmul.mubr.f32.gmra.mxu0 %v381
      %v1915 = vpop.f32.mrf.mxu0
      %v1916 = vadd.f32 0.0, %v1915
      %v1917 = vpop.f32.mrf.mxu0
      %1918 = vmatprep.mubr.f32.mxu0 0.0
      %1919 = vmatmul.mubr.f32.gmra.mxu0 %v384
      %v1920 = vpop.f32.mrf.mxu0
      %v1921 = vadd.f32 0.0, %v1920
      %v1922 = vpop.f32.mrf.mxu0
      %1923 = vmatprep.mubr.f32.mxu0 0.0
      %1924 = vmatmul.mubr.f32.gmra.mxu0 %v387
      %v1925 = vpop.f32.mrf.mxu0
      %v1926 = vadd.f32 0.0, %v1925
      %v1927 = vpop.f32.mrf.mxu0
      %1928 = vmatprep.mubr.f32.mxu0 0.0
      %1929 = vmatmul.mubr.f32.gmra.mxu0 %v390
      %v1930 = vpop.f32.mrf.mxu0
      %v1931 = vadd.f32 0.0, %v1930
      %v1932 = vpop.f32.mrf.mxu0
      %1933 = vmatprep.mubr.f32.mxu0 0.0
      %1934 = vmatmul.mubr.f32.gmra.mxu0 %v393
      %v1935 = vpop.f32.mrf.mxu0
      %v1936 = vadd.f32 0.0, %v1935
      %v1937 = vpop.f32.mrf.mxu0
      %1938 = vmatprep.mubr.f32.mxu0 0.0
      %1939 = vmatmul.mubr.f32.gmra.mxu0 %v396
      %v1940 = vpop.f32.mrf.mxu0
      %v1941 = vadd.f32 0.0, %v1940
      %v1942 = vpop.f32.mrf.mxu0
      %1943 = vmatprep.mubr.f32.mxu0 0.0
      %1944 = vmatmul.mubr.f32.gmra.mxu0 %v399
      %v1945 = vpop.f32.mrf.mxu0
      %v1946 = vadd.f32 0.0, %v1945
      %v1947 = vpop.f32.mrf.mxu0
      %1948 = vmatprep.mubr.f32.mxu0 0.0
      %1949 = vmatmul.mubr.f32.gmra.mxu0 %v402
      %v1950 = vpop.f32.mrf.mxu0
      %v1951 = vadd.f32 0.0, %v1950
      %v1952 = vpop.f32.mrf.mxu0
      %1953 = vmatprep.mubr.f32.mxu0 0.0
      %1954 = vmatmul.mubr.f32.gmra.mxu0 %v405
      %v1955 = vpop.f32.mrf.mxu0
      %v1956 = vadd.f32 0.0, %v1955
      %v1957 = vpop.f32.mrf.mxu0
      %1958 = vmatprep.mubr.f32.mxu0 0.0
      %1959 = vmatmul.mubr.f32.gmra.mxu0 %v408
      %v1960 = vpop.f32.mrf.mxu0
      %v1961 = vadd.f32 0.0, %v1960
      %v1962 = vpop.f32.mrf.mxu0
      %1963 = vdwg.mxu0
      %v1964 = vmax.f32 %v1886, 0.0
      %v1965 = vmax.f32 %v1891, 0.0
      %v1966 = vmax.f32 %v1896, 0.0
      %v1967 = vmax.f32 %v1901, 0.0
      %v1968 = vmax.f32 %v1906, 0.0
      %v1969 = vmax.f32 %v1911, 0.0
      %v1970 = vmax.f32 %v1916, 0.0
      %v1971 = vmax.f32 %v1921, 0.0
      %v1972 = vmax.f32 %v1926, 0.0
      %v1973 = vmax.f32 %v1931, 0.0
      %v1974 = vmax.f32 %v1936, 0.0
      %v1975 = vmax.f32 %v1941, 0.0
      %v1976 = vmax.f32 %v1946, 0.0
      %v1977 = vmax.f32 %v1951, 0.0
      %v1978 = vmax.f32 %v1956, 0.0
      %v1979 = vmax.f32 %v1961, 0.0
      %v1980 = vmul.f32 %v1800, %v1800
      %v1981 = vmul.f32 %v1801, %v1801
      %v1982 = vmul.f32 %v1802, %v1802
      %v1983 = vmul.f32 %v1803, %v1803
      %v1984 = vmul.f32 %v1804, %v1804
      %v1985 = vmul.f32 %v1805, %v1805
      %v1986 = vmul.f32 %v1806, %v1806
      %v1987 = vmul.f32 %v1807, %v1807
      %v1988 = vmul.f32 %v1808, %v1808
      %v1989 = vmul.f32 %v1809, %v1809
      %v1990 = vmul.f32 %v1810, %v1810
      %v1991 = vmul.f32 %v1811, %v1811
      %v1992 = vmul.f32 %v1812, %v1812
      %v1993 = vmul.f32 %v1813, %v1813
      %v1994 = vmul.f32 %v1814, %v1814
      %v1995 = vmul.f32 %v1815, %v1815
      %1996 = vmatprep.subr.mxu0 0.0
      %1997 = vmatpush1.msra.mxu0 %v1995
      %1998 = vmatprep.subr.mxu0 0.0
      %1999 = vmatpush1.msra.mxu0 %v1994
      %2000 = vmatprep.subr.mxu0 0.0
      %2001 = vmatpush1.msra.mxu0 %v1993
      %2002 = vmatprep.subr.mxu0 0.0
      %2003 = vmatpush1.msra.mxu0 %v1992
      %2004 = vmatprep.subr.mxu0 0.0
      %2005 = vmatpush1.msra.mxu0 %v1991
      %2006 = vmatprep.subr.mxu0 0.0
      %2007 = vmatpush1.msra.mxu0 %v1990
      %2008 = vmatprep.subr.mxu0 0.0
      %2009 = vmatpush1.msra.mxu0 %v1989
      %2010 = vmatprep.subr.mxu0 0.0
      %2011 = vmatpush1.msra.mxu0 %v1988
      %2012 = vmatprep.subr.mxu0 0.0
      %2013 = vmatpush1.msra.mxu0 %v1987
      %2014 = vmatprep.subr.mxu0 0.0
      %2015 = vmatpush1.msra.mxu0 %v1986
      %2016 = vmatprep.subr.mxu0 0.0
      %2017 = vmatpush1.msra.mxu0 %v1985
      %2018 = vmatprep.subr.mxu0 0.0
      %2019 = vmatpush1.msra.mxu0 %v1984
      %2020 = vmatprep.subr.mxu0 0.0
      %2021 = vmatpush1.msra.mxu0 %v1983
      %2022 = vmatprep.subr.mxu0 0.0
      %2023 = vmatpush1.msra.mxu0 %v1982
      %2024 = vmatprep.subr.mxu0 0.0
      %2025 = vmatpush1.msra.mxu0 %v1981
      %2026 = vmatprep.subr.mxu0 0.0
      %2027 = vmatpush1.msra.mxu0 %v1980
      %2028 = vmatprep.subr.mxu0 0.0
      %2029 = vmatpush2.msra.mxu0 0.0
      %2030 = vmatprep.subr.mxu0 0.0
      %2031 = vmatpush2.msra.mxu0 0.0
      %2032 = vmatprep.subr.mxu0 0.0
      %2033 = vmatpush2.msra.mxu0 0.0
      %2034 = vmatprep.subr.mxu0 0.0
      %2035 = vmatpush2.msra.mxu0 0.0
      %2036 = vmatprep.subr.mxu0 0.0
      %2037 = vmatpush2.msra.mxu0 0.0
      %2038 = vmatprep.subr.mxu0 0.0
      %2039 = vmatpush2.msra.mxu0 0.0
      %2040 = vmatprep.subr.mxu0 0.0
      %2041 = vmatpush2.msra.mxu0 0.0
      %2042 = vmatprep.subr.mxu0 0.0
      %2043 = vmatpush2.msra.mxu0 0.0
      %2044 = vmatprep.subr.mxu0 0.0
      %2045 = vmatpush2.msra.mxu0 0.0
      %2046 = vmatprep.subr.mxu0 0.0
      %2047 = vmatpush2.msra.mxu0 0.0
      %2048 = vmatprep.subr.mxu0 0.0
      %2049 = vmatpush2.msra.mxu0 0.0
      %2050 = vmatprep.subr.mxu0 0.0
      %2051 = vmatpush2.msra.mxu0 0.0
      %2052 = vmatprep.subr.mxu0 0.0
      %2053 = vmatpush2.msra.mxu0 0.0
      %2054 = vmatprep.subr.mxu0 0.0
      %2055 = vmatpush2.msra.mxu0 0.0
      %2056 = vmatprep.subr.mxu0 0.0
      %2057 = vmatpush2.msra.mxu0 0.0
      %2058 = vmatprep.subr.mxu0 0.0
      %2059 = vmatpush2.msra.mxu0 0.0
      %2060 = vmatprep.mubr.f32.mxu0 0.0
      %2061 = vmatmul.mubr.f32.gmra.mxu0 %v347
      %v2062 = vpop.f32.mrf.mxu0
      %v2063 = vadd.f32 0.0, %v2062
      %v2064 = vpop.f32.mrf.mxu0
      %2065 = vdwg.mxu0
      %v2066 = vmul.f32 %v1964, %v1964
      %v2067 = vmul.f32 %v1965, %v1965
      %v2068 = vmul.f32 %v1966, %v1966
      %v2069 = vmul.f32 %v1967, %v1967
      %v2070 = vmul.f32 %v1968, %v1968
      %v2071 = vmul.f32 %v1969, %v1969
      %v2072 = vmul.f32 %v1970, %v1970
      %v2073 = vmul.f32 %v1971, %v1971
      %v2074 = vmul.f32 %v1972, %v1972
      %v2075 = vmul.f32 %v1973, %v1973
      %v2076 = vmul.f32 %v1974, %v1974
      %v2077 = vmul.f32 %v1975, %v1975
      %v2078 = vmul.f32 %v1976, %v1976
      %v2079 = vmul.f32 %v1977, %v1977
      %v2080 = vmul.f32 %v1978, %v1978
      %v2081 = vmul.f32 %v1979, %v1979
      %2082 = vmatprep.subr.mxu0 0.0
      %2083 = vmatpush1.msra.mxu0 %v2081
      %2084 = vmatprep.subr.mxu0 0.0
      %2085 = vmatpush1.msra.mxu0 %v2080
      %2086 = vmatprep.subr.mxu0 0.0
      %2087 = vmatpush1.msra.mxu0 %v2079
      %2088 = vmatprep.subr.mxu0 0.0
      %2089 = vmatpush1.msra.mxu0 %v2078
      %2090 = vmatprep.subr.mxu0 0.0
      %2091 = vmatpush1.msra.mxu0 %v2077
      %2092 = vmatprep.subr.mxu0 0.0
      %2093 = vmatpush1.msra.mxu0 %v2076
      %2094 = vmatprep.subr.mxu0 0.0
      %2095 = vmatpush1.msra.mxu0 %v2075
      %2096 = vmatprep.subr.mxu0 0.0
      %2097 = vmatpush1.msra.mxu0 %v2074
      %2098 = vmatprep.subr.mxu0 0.0
      %2099 = vmatpush1.msra.mxu0 %v2073
      %2100 = vmatprep.subr.mxu0 0.0
      %2101 = vmatpush1.msra.mxu0 %v2072
      %2102 = vmatprep.subr.mxu0 0.0
      %2103 = vmatpush1.msra.mxu0 %v2071
      %2104 = vmatprep.subr.mxu0 0.0
      %2105 = vmatpush1.msra.mxu0 %v2070
      %2106 = vmatprep.subr.mxu0 0.0
      %2107 = vmatpush1.msra.mxu0 %v2069
      %2108 = vmatprep.subr.mxu0 0.0
      %2109 = vmatpush1.msra.mxu0 %v2068
      %2110 = vmatprep.subr.mxu0 0.0
      %2111 = vmatpush1.msra.mxu0 %v2067
      %2112 = vmatprep.subr.mxu0 0.0
      %2113 = vmatpush1.msra.mxu0 %v2066
      %2114 = vmatprep.subr.mxu0 0.0
      %2115 = vmatpush2.msra.mxu0 0.0
      %2116 = vmatprep.subr.mxu0 0.0
      %2117 = vmatpush2.msra.mxu0 0.0
      %2118 = vmatprep.subr.mxu0 0.0
      %2119 = vmatpush2.msra.mxu0 0.0
      %2120 = vmatprep.subr.mxu0 0.0
      %2121 = vmatpush2.msra.mxu0 0.0
      %2122 = vmatprep.subr.mxu0 0.0
      %2123 = vmatpush2.msra.mxu0 0.0
      %2124 = vmatprep.subr.mxu0 0.0
      %2125 = vmatpush2.msra.mxu0 0.0
      %2126 = vmatprep.subr.mxu0 0.0
      %2127 = vmatpush2.msra.mxu0 0.0
      %2128 = vmatprep.subr.mxu0 0.0
      %2129 = vmatpush2.msra.mxu0 0.0
      %2130 = vmatprep.subr.mxu0 0.0
      %2131 = vmatpush2.msra.mxu0 0.0
      %2132 = vmatprep.subr.mxu0 0.0
      %2133 = vmatpush2.msra.mxu0 0.0
      %2134 = vmatprep.subr.mxu0 0.0
      %2135 = vmatpush2.msra.mxu0 0.0
      %2136 = vmatprep.subr.mxu0 0.0
      %2137 = vmatpush2.msra.mxu0 0.0
      %2138 = vmatprep.subr.mxu0 0.0
      %2139 = vmatpush2.msra.mxu0 0.0
      %2140 = vmatprep.subr.mxu0 0.0
      %2141 = vmatpush2.msra.mxu0 0.0
      %2142 = vmatprep.subr.mxu0 0.0
      %2143 = vmatpush2.msra.mxu0 0.0
      %2144 = vmatprep.subr.mxu0 0.0
      %2145 = vmatpush2.msra.mxu0 0.0
      %2146 = vmatprep.mubr.f32.mxu0 0.0
      %2147 = vmatmul.mubr.f32.gmra.mxu0 %v347
      %v2148 = vpop.f32.mrf.mxu0
      %v2149 = vadd.f32 0.0, %v2148
      %v2150 = vpop.f32.mrf.mxu0
      %2151 = vdwg.mxu0
      %v2152 = vmul.f32 %v1800, %v1964
      %v2153 = vmul.f32 %v1801, %v1965
      %v2154 = vmul.f32 %v1802, %v1966
      %v2155 = vmul.f32 %v1803, %v1967
      %v2156 = vmul.f32 %v1804, %v1968
      %v2157 = vmul.f32 %v1805, %v1969
      %v2158 = vmul.f32 %v1806, %v1970
      %v2159 = vmul.f32 %v1807, %v1971
      %v2160 = vmul.f32 %v1808, %v1972
      %v2161 = vmul.f32 %v1809, %v1973
      %v2162 = vmul.f32 %v1810, %v1974
      %v2163 = vmul.f32 %v1811, %v1975
      %v2164 = vmul.f32 %v1812, %v1976
      %v2165 = vmul.f32 %v1813, %v1977
      %v2166 = vmul.f32 %v1814, %v1978
      %v2167 = vmul.f32 %v1815, %v1979
      %2168 = vmatprep.subr.mxu0 0.0
      %2169 = vmatpush1.msra.mxu0 %v2167
      %2170 = vmatprep.subr.mxu0 0.0
      %2171 = vmatpush1.msra.mxu0 %v2166
      %2172 = vmatprep.subr.mxu0 0.0
      %2173 = vmatpush1.msra.mxu0 %v2165
      %2174 = vmatprep.subr.mxu0 0.0
      %2175 = vmatpush1.msra.mxu0 %v2164
      %2176 = vmatprep.subr.mxu0 0.0
      %2177 = vmatpush1.msra.mxu0 %v2163
      %2178 = vmatprep.subr.mxu0 0.0
      %2179 = vmatpush1.msra.mxu0 %v2162
      %2180 = vmatprep.subr.mxu0 0.0
      %2181 = vmatpush1.msra.mxu0 %v2161
      %2182 = vmatprep.subr.mxu0 0.0
      %2183 = vmatpush1.msra.mxu0 %v2160
      %2184 = vmatprep.subr.mxu0 0.0
      %2185 = vmatpush1.msra.mxu0 %v2159
      %2186 = vmatprep.subr.mxu0 0.0
      %2187 = vmatpush1.msra.mxu0 %v2158
      %2188 = vmatprep.subr.mxu0 0.0
      %2189 = vmatpush1.msra.mxu0 %v2157
      %2190 = vmatprep.subr.mxu0 0.0
      %2191 = vmatpush1.msra.mxu0 %v2156
      %2192 = vmatprep.subr.mxu0 0.0
      %2193 = vmatpush1.msra.mxu0 %v2155
      %2194 = vmatprep.subr.mxu0 0.0
      %2195 = vmatpush1.msra.mxu0 %v2154
      %2196 = vmatprep.subr.mxu0 0.0
      %2197 = vmatpush1.msra.mxu0 %v2153
      %2198 = vmatprep.subr.mxu0 0.0
      %2199 = vmatpush1.msra.mxu0 %v2152
      %2200 = vmatprep.subr.mxu0 0.0
      %2201 = vmatpush2.msra.mxu0 0.0
      %2202 = vmatprep.subr.mxu0 0.0
      %2203 = vmatpush2.msra.mxu0 0.0
      %2204 = vmatprep.subr.mxu0 0.0
      %2205 = vmatpush2.msra.mxu0 0.0
      %2206 = vmatprep.subr.mxu0 0.0
      %2207 = vmatpush2.msra.mxu0 0.0
      %2208 = vmatprep.subr.mxu0 0.0
      %2209 = vmatpush2.msra.mxu0 0.0
      %2210 = vmatprep.subr.mxu0 0.0
      %2211 = vmatpush2.msra.mxu0 0.0
      %2212 = vmatprep.subr.mxu0 0.0
      %2213 = vmatpush2.msra.mxu0 0.0
      %2214 = vmatprep.subr.mxu0 0.0
      %2215 = vmatpush2.msra.mxu0 0.0
      %2216 = vmatprep.subr.mxu0 0.0
      %2217 = vmatpush2.msra.mxu0 0.0
      %2218 = vmatprep.subr.mxu0 0.0
      %2219 = vmatpush2.msra.mxu0 0.0
      %2220 = vmatprep.subr.mxu0 0.0
      %2221 = vmatpush2.msra.mxu0 0.0
      %2222 = vmatprep.subr.mxu0 0.0
      %2223 = vmatpush2.msra.mxu0 0.0
      %2224 = vmatprep.subr.mxu0 0.0
      %2225 = vmatpush2.msra.mxu0 0.0
      %2226 = vmatprep.subr.mxu0 0.0
      %2227 = vmatpush2.msra.mxu0 0.0
      %2228 = vmatprep.subr.mxu0 0.0
      %2229 = vmatpush2.msra.mxu0 0.0
      %2230 = vmatprep.subr.mxu0 0.0
      %2231 = vmatpush2.msra.mxu0 0.0
      %2232 = vmatprep.mubr.f32.mxu0 0.0
      %2233 = vmatmul.mubr.f32.gmra.mxu0 %v347
      %v2234 = vpop.f32.mrf.mxu0
      %v2235 = vadd.f32 0.0, %v2234
      %v2236 = vpop.f32.mrf.mxu0
      %2237 = vdwg.mxu0
      %v2238 = vadd.f32 %v2063, 1e-10
      %v2239 = vrsqrt.pop %v2238
      %v2240 = vadd.f32 %v2149, 1e-10
      %v2241 = vrsqrt.pop %v2240
      %v2242 = vmul.f32 %v2239, %v2239
      %v2244 = vrot.slane %v2242, 7
      %v2246 = vmul.f32 %v2063, %v2244
      %v2247 = vmul.f32 %v2241, %v2241
      %v2249 = vrot.slane %v2247, 7
      %v2251 = vmul.f32 %v2149, %v2249
      %v2252 = vadd.f32 %v2246, %v2251
      %v2253 = vmul.f32 %v2239, %v2241
      %v2255 = vrot.slane %v2253, 7
      %v2257 = vmul.f32 %v2235, %v2255
      %v2258 = vmul.f32 %v2257, 2.0
      %v2259 = vsub.f32 %v2252, %v2258
      %v2260 = vadd.f32 %v1639, %v2259
      %v2261 = vld [vmem:[%s304 + $0xc] sm:$0x7]
      %v2262 = vld [vmem:[%s316 + $0xc] sm:$0x7]
      %v2263 = vsub.f32 %v2261, %v2262
      %v2264 = vand.u32 2147483647, %v2263
      %v2265 = vsel %vm352, %v2264, 0.0
      %v2266 = vrot.slane %v2265, 4
      %v2267 = vadd.f32 %v2265, %v2266
      %v2268 = vrot.slane %v2267, 2
      %v2269 = vadd.f32 %v2267, %v2268
      %v2270 = vrot.slane %v2269, 1
      %v2271 = vadd.f32 %v2269, %v2270
      %v2272 = vadd.f32 %v1651, %v2271
      %v2274 = vsel %vm352, %v2261, 0
      %2276 = vmatprep.subr.mxu0 0.0
      %2277 = vmatpush1.msra.mxu0 0.0
      %2278 = vmatprep.subr.mxu0 0.0
      %2279 = vmatpush1.msra.mxu0 0.0
      %2280 = vmatprep.subr.mxu0 0.0
      %2281 = vmatpush1.msra.mxu0 0.0
      %2282 = vmatprep.subr.mxu0 0.0
      %2283 = vmatpush1.msra.mxu0 0.0
      %2284 = vmatprep.subr.mxu0 0.0
      %2285 = vmatpush1.msra.mxu0 0.0
      %2286 = vmatprep.subr.mxu0 0.0
      %2287 = vmatpush1.msra.mxu0 0.0
      %2288 = vmatprep.subr.mxu0 0.0
      %2289 = vmatpush1.msra.mxu0 0.0
      %2290 = vmatprep.subr.mxu0 0.0
      %2291 = vmatpush1.msra.mxu0 0.0
      %2292 = vmatprep.subr.mxu0 0.0
      %2293 = vmatpush1.msra.mxu0 0.0
      %2294 = vmatprep.subr.mxu0 0.0
      %2295 = vmatpush1.msra.mxu0 0.0
      %2296 = vmatprep.subr.mxu0 0.0
      %2297 = vmatpush1.msra.mxu0 0.0
      %2298 = vmatprep.subr.mxu0 0.0
      %2299 = vmatpush1.msra.mxu0 0.0
      %2300 = vmatprep.subr.mxu0 0.0
      %2301 = vmatpush1.msra.mxu0 0.0
      %2302 = vmatprep.subr.mxu0 0.0
      %2303 = vmatpush1.msra.mxu0 0.0
      %2304 = vmatprep.subr.mxu0 0.0
      %2305 = vmatpush1.msra.mxu0 0.0
      %2306 = vmatprep.subr.mxu0 0.0
      %2307 = vmatpush1.msra.mxu0 %v2274
      %2308 = vmatprep.subr.mxu0 0.0
      %2309 = vmatpush2.msra.mxu0 0.0
      %2310 = vmatprep.subr.mxu0 0.0
      %2311 = vmatpush2.msra.mxu0 0.0
      %2312 = vmatprep.subr.mxu0 0.0
      %2313 = vmatpush2.msra.mxu0 0.0
      %2314 = vmatprep.subr.mxu0 0.0
      %2315 = vmatpush2.msra.mxu0 0.0
      %2316 = vmatprep.subr.mxu0 0.0
      %2317 = vmatpush2.msra.mxu0 0.0
      %2318 = vmatprep.subr.mxu0 0.0
      %2319 = vmatpush2.msra.mxu0 0.0
      %2320 = vmatprep.subr.mxu0 0.0
      %2321 = vmatpush2.msra.mxu0 0.0
      %2322 = vmatprep.subr.mxu0 0.0
      %2323 = vmatpush2.msra.mxu0 0.0
      %2324 = vmatprep.subr.mxu0 0.0
      %2325 = vmatpush2.msra.mxu0 0.0
      %2326 = vmatprep.subr.mxu0 0.0
      %2327 = vmatpush2.msra.mxu0 0.0
      %2328 = vmatprep.subr.mxu0 0.0
      %2329 = vmatpush2.msra.mxu0 0.0
      %2330 = vmatprep.subr.mxu0 0.0
      %2331 = vmatpush2.msra.mxu0 0.0
      %2332 = vmatprep.subr.mxu0 0.0
      %2333 = vmatpush2.msra.mxu0 0.0
      %2334 = vmatprep.subr.mxu0 0.0
      %2335 = vmatpush2.msra.mxu0 0.0
      %2336 = vmatprep.subr.mxu0 0.0
      %2337 = vmatpush2.msra.mxu0 0.0
      %2338 = vmatprep.subr.mxu0 0.0
      %2339 = vmatpush2.msra.mxu0 0.0
      %2340 = vmatprep.mubr.f32.mxu0 0.0
      %2341 = vmatmul.mubr.f32.gmra.mxu0 %v363
      %v2342 = vpop.f32.mrf.mxu0
      %v2343 = vadd.f32 0.0, %v2342
      %v2344 = vpop.f32.mrf.mxu0
      %2345 = vmatprep.mubr.f32.mxu0 0.0
      %2346 = vmatmul.mubr.f32.gmra.mxu0 %v366
      %v2347 = vpop.f32.mrf.mxu0
      %v2348 = vadd.f32 0.0, %v2347
      %v2349 = vpop.f32.mrf.mxu0
      %2350 = vmatprep.mubr.f32.mxu0 0.0
      %2351 = vmatmul.mubr.f32.gmra.mxu0 %v369
      %v2352 = vpop.f32.mrf.mxu0
      %v2353 = vadd.f32 0.0, %v2352
      %v2354 = vpop.f32.mrf.mxu0
      %2355 = vmatprep.mubr.f32.mxu0 0.0
      %2356 = vmatmul.mubr.f32.gmra.mxu0 %v372
      %v2357 = vpop.f32.mrf.mxu0
      %v2358 = vadd.f32 0.0, %v2357
      %v2359 = vpop.f32.mrf.mxu0
      %2360 = vmatprep.mubr.f32.mxu0 0.0
      %2361 = vmatmul.mubr.f32.gmra.mxu0 %v375
      %v2362 = vpop.f32.mrf.mxu0
      %v2363 = vadd.f32 0.0, %v2362
      %v2364 = vpop.f32.mrf.mxu0
      %2365 = vmatprep.mubr.f32.mxu0 0.0
      %2366 = vmatmul.mubr.f32.gmra.mxu0 %v378
      %v2367 = vpop.f32.mrf.mxu0
      %v2368 = vadd.f32 0.0, %v2367
      %v2369 = vpop.f32.mrf.mxu0
      %2370 = vmatprep.mubr.f32.mxu0 0.0
      %2371 = vmatmul.mubr.f32.gmra.mxu0 %v381
      %v2372 = vpop.f32.mrf.mxu0
      %v2373 = vadd.f32 0.0, %v2372
      %v2374 = vpop.f32.mrf.mxu0
      %2375 = vmatprep.mubr.f32.mxu0 0.0
      %2376 = vmatmul.mubr.f32.gmra.mxu0 %v384
      %v2377 = vpop.f32.mrf.mxu0
      %v2378 = vadd.f32 0.0, %v2377
      %v2379 = vpop.f32.mrf.mxu0
      %2380 = vmatprep.mubr.f32.mxu0 0.0
      %2381 = vmatmul.mubr.f32.gmra.mxu0 %v387
      %v2382 = vpop.f32.mrf.mxu0
      %v2383 = vadd.f32 0.0, %v2382
      %v2384 = vpop.f32.mrf.mxu0
      %2385 = vmatprep.mubr.f32.mxu0 0.0
      %2386 = vmatmul.mubr.f32.gmra.mxu0 %v390
      %v2387 = vpop.f32.mrf.mxu0
      %v2388 = vadd.f32 0.0, %v2387
      %v2389 = vpop.f32.mrf.mxu0
      %2390 = vmatprep.mubr.f32.mxu0 0.0
      %2391 = vmatmul.mubr.f32.gmra.mxu0 %v393
      %v2392 = vpop.f32.mrf.mxu0
      %v2393 = vadd.f32 0.0, %v2392
      %v2394 = vpop.f32.mrf.mxu0
      %2395 = vmatprep.mubr.f32.mxu0 0.0
      %2396 = vmatmul.mubr.f32.gmra.mxu0 %v396
      %v2397 = vpop.f32.mrf.mxu0
      %v2398 = vadd.f32 0.0, %v2397
      %v2399 = vpop.f32.mrf.mxu0
      %2400 = vmatprep.mubr.f32.mxu0 0.0
      %2401 = vmatmul.mubr.f32.gmra.mxu0 %v399
      %v2402 = vpop.f32.mrf.mxu0
      %v2403 = vadd.f32 0.0, %v2402
      %v2404 = vpop.f32.mrf.mxu0
      %2405 = vmatprep.mubr.f32.mxu0 0.0
      %2406 = vmatmul.mubr.f32.gmra.mxu0 %v402
      %v2407 = vpop.f32.mrf.mxu0
      %v2408 = vadd.f32 0.0, %v2407
      %v2409 = vpop.f32.mrf.mxu0
      %2410 = vmatprep.mubr.f32.mxu0 0.0
      %2411 = vmatmul.mubr.f32.gmra.mxu0 %v405
      %v2412 = vpop.f32.mrf.mxu0
      %v2413 = vadd.f32 0.0, %v2412
      %v2414 = vpop.f32.mrf.mxu0
      %2415 = vmatprep.mubr.f32.mxu0 0.0
      %2416 = vmatmul.mubr.f32.gmra.mxu0 %v408
      %v2417 = vpop.f32.mrf.mxu0
      %v2418 = vadd.f32 0.0, %v2417
      %v2419 = vpop.f32.mrf.mxu0
      %2420 = vdwg.mxu0
      %v2421 = vmax.f32 %v2343, 0.0
      %v2422 = vmax.f32 %v2348, 0.0
      %v2423 = vmax.f32 %v2353, 0.0
      %v2424 = vmax.f32 %v2358, 0.0
      %v2425 = vmax.f32 %v2363, 0.0
      %v2426 = vmax.f32 %v2368, 0.0
      %v2427 = vmax.f32 %v2373, 0.0
      %v2428 = vmax.f32 %v2378, 0.0
      %v2429 = vmax.f32 %v2383, 0.0
      %v2430 = vmax.f32 %v2388, 0.0
      %v2431 = vmax.f32 %v2393, 0.0
      %v2432 = vmax.f32 %v2398, 0.0
      %v2433 = vmax.f32 %v2403, 0.0
      %v2434 = vmax.f32 %v2408, 0.0
      %v2435 = vmax.f32 %v2413, 0.0
      %v2436 = vmax.f32 %v2418, 0.0
      %v2438 = vsel %vm352, %v2262, 0
      %2440 = vmatprep.subr.mxu0 0.0
      %2441 = vmatpush1.msra.mxu0 0.0
      %2442 = vmatprep.subr.mxu0 0.0
      %2443 = vmatpush1.msra.mxu0 0.0
      %2444 = vmatprep.subr.mxu0 0.0
      %2445 = vmatpush1.msra.mxu0 0.0
      %2446 = vmatprep.subr.mxu0 0.0
      %2447 = vmatpush1.msra.mxu0 0.0
      %2448 = vmatprep.subr.mxu0 0.0
      %2449 = vmatpush1.msra.mxu0 0.0
      %2450 = vmatprep.subr.mxu0 0.0
      %2451 = vmatpush1.msra.mxu0 0.0
      %2452 = vmatprep.subr.mxu0 0.0
      %2453 = vmatpush1.msra.mxu0 0.0
      %2454 = vmatprep.subr.mxu0 0.0
      %2455 = vmatpush1.msra.mxu0 0.0
      %2456 = vmatprep.subr.mxu0 0.0
      %2457 = vmatpush1.msra.mxu0 0.0
      %2458 = vmatprep.subr.mxu0 0.0
      %2459 = vmatpush1.msra.mxu0 0.0
      %2460 = vmatprep.subr.mxu0 0.0
      %2461 = vmatpush1.msra.mxu0 0.0
      %2462 = vmatprep.subr.mxu0 0.0
      %2463 = vmatpush1.msra.mxu0 0.0
      %2464 = vmatprep.subr.mxu0 0.0
      %2465 = vmatpush1.msra.mxu0 0.0
      %2466 = vmatprep.subr.mxu0 0.0
      %2467 = vmatpush1.msra.mxu0 0.0
      %2468 = vmatprep.subr.mxu0 0.0
      %2469 = vmatpush1.msra.mxu0 0.0
      %2470 = vmatprep.subr.mxu0 0.0
      %2471 = vmatpush1.msra.mxu0 %v2438
      %2472 = vmatprep.subr.mxu0 0.0
      %2473 = vmatpush2.msra.mxu0 0.0
      %2474 = vmatprep.subr.mxu0 0.0
      %2475 = vmatpush2.msra.mxu0 0.0
      %2476 = vmatprep.subr.mxu0 0.0
      %2477 = vmatpush2.msra.mxu0 0.0
      %2478 = vmatprep.subr.mxu0 0.0
      %2479 = vmatpush2.msra.mxu0 0.0
      %2480 = vmatprep.subr.mxu0 0.0
      %2481 = vmatpush2.msra.mxu0 0.0
      %2482 = vmatprep.subr.mxu0 0.0
      %2483 = vmatpush2.msra.mxu0 0.0
      %2484 = vmatprep.subr.mxu0 0.0
      %2485 = vmatpush2.msra.mxu0 0.0
      %2486 = vmatprep.subr.mxu0 0.0
      %2487 = vmatpush2.msra.mxu0 0.0
      %2488 = vmatprep.subr.mxu0 0.0
      %2489 = vmatpush2.msra.mxu0 0.0
      %2490 = vmatprep.subr.mxu0 0.0
      %2491 = vmatpush2.msra.mxu0 0.0
      %2492 = vmatprep.subr.mxu0 0.0
      %2493 = vmatpush2.msra.mxu0 0.0
      %2494 = vmatprep.subr.mxu0 0.0
      %2495 = vmatpush2.msra.mxu0 0.0
      %2496 = vmatprep.subr.mxu0 0.0
      %2497 = vmatpush2.msra.mxu0 0.0
      %2498 = vmatprep.subr.mxu0 0.0
      %2499 = vmatpush2.msra.mxu0 0.0
      %2500 = vmatprep.subr.mxu0 0.0
      %2501 = vmatpush2.msra.mxu0 0.0
      %2502 = vmatprep.subr.mxu0 0.0
      %2503 = vmatpush2.msra.mxu0 0.0
      %2504 = vmatprep.mubr.f32.mxu0 0.0
      %2505 = vmatmul.mubr.f32.gmra.mxu0 %v363
      %v2506 = vpop.f32.mrf.mxu0
      %v2507 = vadd.f32 0.0, %v2506
      %v2508 = vpop.f32.mrf.mxu0
      %2509 = vmatprep.mubr.f32.mxu0 0.0
      %2510 = vmatmul.mubr.f32.gmra.mxu0 %v366
      %v2511 = vpop.f32.mrf.mxu0
      %v2512 = vadd.f32 0.0, %v2511
      %v2513 = vpop.f32.mrf.mxu0
      %2514 = vmatprep.mubr.f32.mxu0 0.0
      %2515 = vmatmul.mubr.f32.gmra.mxu0 %v369
      %v2516 = vpop.f32.mrf.mxu0
      %v2517 = vadd.f32 0.0, %v2516
      %v2518 = vpop.f32.mrf.mxu0
      %2519 = vmatprep.mubr.f32.mxu0 0.0
      %2520 = vmatmul.mubr.f32.gmra.mxu0 %v372
      %v2521 = vpop.f32.mrf.mxu0
      %v2522 = vadd.f32 0.0, %v2521
      %v2523 = vpop.f32.mrf.mxu0
      %2524 = vmatprep.mubr.f32.mxu0 0.0
      %2525 = vmatmul.mubr.f32.gmra.mxu0 %v375
      %v2526 = vpop.f32.mrf.mxu0
      %v2527 = vadd.f32 0.0, %v2526
      %v2528 = vpop.f32.mrf.mxu0
      %2529 = vmatprep.mubr.f32.mxu0 0.0
      %2530 = vmatmul.mubr.f32.gmra.mxu0 %v378
      %v2531 = vpop.f32.mrf.mxu0
      %v2532 = vadd.f32 0.0, %v2531
      %v2533 = vpop.f32.mrf.mxu0
      %2534 = vmatprep.mubr.f32.mxu0 0.0
      %2535 = vmatmul.mubr.f32.gmra.mxu0 %v381
      %v2536 = vpop.f32.mrf.mxu0
      %v2537 = vadd.f32 0.0, %v2536
      %v2538 = vpop.f32.mrf.mxu0
      %2539 = vmatprep.mubr.f32.mxu0 0.0
      %2540 = vmatmul.mubr.f32.gmra.mxu0 %v384
      %v2541 = vpop.f32.mrf.mxu0
      %v2542 = vadd.f32 0.0, %v2541
      %v2543 = vpop.f32.mrf.mxu0
      %2544 = vmatprep.mubr.f32.mxu0 0.0
      %2545 = vmatmul.mubr.f32.gmra.mxu0 %v387
      %v2546 = vpop.f32.mrf.mxu0
      %v2547 = vadd.f32 0.0, %v2546
      %v2548 = vpop.f32.mrf.mxu0
      %2549 = vmatprep.mubr.f32.mxu0 0.0
      %2550 = vmatmul.mubr.f32.gmra.mxu0 %v390
      %v2551 = vpop.f32.mrf.mxu0
      %v2552 = vadd.f32 0.0, %v2551
      %v2553 = vpop.f32.mrf.mxu0
      %2554 = vmatprep.mubr.f32.mxu0 0.0
      %2555 = vmatmul.mubr.f32.gmra.mxu0 %v393
      %v2556 = vpop.f32.mrf.mxu0
      %v2557 = vadd.f32 0.0, %v2556
      %v2558 = vpop.f32.mrf.mxu0
      %2559 = vmatprep.mubr.f32.mxu0 0.0
      %2560 = vmatmul.mubr.f32.gmra.mxu0 %v396
      %v2561 = vpop.f32.mrf.mxu0
      %v2562 = vadd.f32 0.0, %v2561
      %v2563 = vpop.f32.mrf.mxu0
      %2564 = vmatprep.mubr.f32.mxu0 0.0
      %2565 = vmatmul.mubr.f32.gmra.mxu0 %v399
      %v2566 = vpop.f32.mrf.mxu0
      %v2567 = vadd.f32 0.0, %v2566
      %v2568 = vpop.f32.mrf.mxu0
      %2569 = vmatprep.mubr.f32.mxu0 0.0
      %2570 = vmatmul.mubr.f32.gmra.mxu0 %v402
      %v2571 = vpop.f32.mrf.mxu0
      %v2572 = vadd.f32 0.0, %v2571
      %v2573 = vpop.f32.mrf.mxu0
      %2574 = vmatprep.mubr.f32.mxu0 0.0
      %2575 = vmatmul.mubr.f32.gmra.mxu0 %v405
      %v2576 = vpop.f32.mrf.mxu0
      %v2577 = vadd.f32 0.0, %v2576
      %v2578 = vpop.f32.mrf.mxu0
      %2579 = vmatprep.mubr.f32.mxu0 0.0
      %2580 = vmatmul.mubr.f32.gmra.mxu0 %v408
      %v2581 = vpop.f32.mrf.mxu0
      %v2582 = vadd.f32 0.0, %v2581
      %v2583 = vpop.f32.mrf.mxu0
      %2584 = vdwg.mxu0
      %v2585 = vmax.f32 %v2507, 0.0
      %v2586 = vmax.f32 %v2512, 0.0
      %v2587 = vmax.f32 %v2517, 0.0
      %v2588 = vmax.f32 %v2522, 0.0
      %v2589 = vmax.f32 %v2527, 0.0
      %v2590 = vmax.f32 %v2532, 0.0
      %v2591 = vmax.f32 %v2537, 0.0
      %v2592 = vmax.f32 %v2542, 0.0
      %v2593 = vmax.f32 %v2547, 0.0
      %v2594 = vmax.f32 %v2552, 0.0
      %v2595 = vmax.f32 %v2557, 0.0
      %v2596 = vmax.f32 %v2562, 0.0
      %v2597 = vmax.f32 %v2567, 0.0
      %v2598 = vmax.f32 %v2572, 0.0
      %v2599 = vmax.f32 %v2577, 0.0
      %v2600 = vmax.f32 %v2582, 0.0
      %v2601 = vmul.f32 %v2421, %v2421
      %v2602 = vmul.f32 %v2422, %v2422
      %v2603 = vmul.f32 %v2423, %v2423
      %v2604 = vmul.f32 %v2424, %v2424
      %v2605 = vmul.f32 %v2425, %v2425
      %v2606 = vmul.f32 %v2426, %v2426
      %v2607 = vmul.f32 %v2427, %v2427
      %v2608 = vmul.f32 %v2428, %v2428
      %v2609 = vmul.f32 %v2429, %v2429
      %v2610 = vmul.f32 %v2430, %v2430
      %v2611 = vmul.f32 %v2431, %v2431
      %v2612 = vmul.f32 %v2432, %v2432
      %v2613 = vmul.f32 %v2433, %v2433
      %v2614 = vmul.f32 %v2434, %v2434
      %v2615 = vmul.f32 %v2435, %v2435
      %v2616 = vmul.f32 %v2436, %v2436
      %2617 = vmatprep.subr.mxu0 0.0
      %2618 = vmatpush1.msra.mxu0 %v2616
      %2619 = vmatprep.subr.mxu0 0.0
      %2620 = vmatpush1.msra.mxu0 %v2615
      %2621 = vmatprep.subr.mxu0 0.0
      %2622 = vmatpush1.msra.mxu0 %v2614
      %2623 = vmatprep.subr.mxu0 0.0
      %2624 = vmatpush1.msra.mxu0 %v2613
      %2625 = vmatprep.subr.mxu0 0.0
      %2626 = vmatpush1.msra.mxu0 %v2612
      %2627 = vmatprep.subr.mxu0 0.0
      %2628 = vmatpush1.msra.mxu0 %v2611
      %2629 = vmatprep.subr.mxu0 0.0
      %2630 = vmatpush1.msra.mxu0 %v2610
      %2631 = vmatprep.subr.mxu0 0.0
      %2632 = vmatpush1.msra.mxu0 %v2609
      %2633 = vmatprep.subr.mxu0 0.0
      %2634 = vmatpush1.msra.mxu0 %v2608
      %2635 = vmatprep.subr.mxu0 0.0
      %2636 = vmatpush1.msra.mxu0 %v2607
      %2637 = vmatprep.subr.mxu0 0.0
      %2638 = vmatpush1.msra.mxu0 %v2606
      %2639 = vmatprep.subr.mxu0 0.0
      %2640 = vmatpush1.msra.mxu0 %v2605
      %2641 = vmatprep.subr.mxu0 0.0
      %2642 = vmatpush1.msra.mxu0 %v2604
      %2643 = vmatprep.subr.mxu0 0.0
      %2644 = vmatpush1.msra.mxu0 %v2603
      %2645 = vmatprep.subr.mxu0 0.0
      %2646 = vmatpush1.msra.mxu0 %v2602
      %2647 = vmatprep.subr.mxu0 0.0
      %2648 = vmatpush1.msra.mxu0 %v2601
      %2649 = vmatprep.subr.mxu0 0.0
      %2650 = vmatpush2.msra.mxu0 0.0
      %2651 = vmatprep.subr.mxu0 0.0
      %2652 = vmatpush2.msra.mxu0 0.0
      %2653 = vmatprep.subr.mxu0 0.0
      %2654 = vmatpush2.msra.mxu0 0.0
      %2655 = vmatprep.subr.mxu0 0.0
      %2656 = vmatpush2.msra.mxu0 0.0
      %2657 = vmatprep.subr.mxu0 0.0
      %2658 = vmatpush2.msra.mxu0 0.0
      %2659 = vmatprep.subr.mxu0 0.0
      %2660 = vmatpush2.msra.mxu0 0.0
      %2661 = vmatprep.subr.mxu0 0.0
      %2662 = vmatpush2.msra.mxu0 0.0
      %2663 = vmatprep.subr.mxu0 0.0
      %2664 = vmatpush2.msra.mxu0 0.0
      %2665 = vmatprep.subr.mxu0 0.0
      %2666 = vmatpush2.msra.mxu0 0.0
      %2667 = vmatprep.subr.mxu0 0.0
      %2668 = vmatpush2.msra.mxu0 0.0
      %2669 = vmatprep.subr.mxu0 0.0
      %2670 = vmatpush2.msra.mxu0 0.0
      %2671 = vmatprep.subr.mxu0 0.0
      %2672 = vmatpush2.msra.mxu0 0.0
      %2673 = vmatprep.subr.mxu0 0.0
      %2674 = vmatpush2.msra.mxu0 0.0
      %2675 = vmatprep.subr.mxu0 0.0
      %2676 = vmatpush2.msra.mxu0 0.0
      %2677 = vmatprep.subr.mxu0 0.0
      %2678 = vmatpush2.msra.mxu0 0.0
      %2679 = vmatprep.subr.mxu0 0.0
      %2680 = vmatpush2.msra.mxu0 0.0
      %2681 = vmatprep.mubr.f32.mxu0 0.0
      %2682 = vmatmul.mubr.f32.gmra.mxu0 %v347
      %v2683 = vpop.f32.mrf.mxu0
      %v2684 = vadd.f32 0.0, %v2683
      %v2685 = vpop.f32.mrf.mxu0
      %2686 = vdwg.mxu0
      %v2687 = vmul.f32 %v2585, %v2585
      %v2688 = vmul.f32 %v2586, %v2586
      %v2689 = vmul.f32 %v2587, %v2587
      %v2690 = vmul.f32 %v2588, %v2588
      %v2691 = vmul.f32 %v2589, %v2589
      %v2692 = vmul.f32 %v2590, %v2590
      %v2693 = vmul.f32 %v2591, %v2591
      %v2694 = vmul.f32 %v2592, %v2592
      %v2695 = vmul.f32 %v2593, %v2593
      %v2696 = vmul.f32 %v2594, %v2594
      %v2697 = vmul.f32 %v2595, %v2595
      %v2698 = vmul.f32 %v2596, %v2596
      %v2699 = vmul.f32 %v2597, %v2597
      %v2700 = vmul.f32 %v2598, %v2598
      %v2701 = vmul.f32 %v2599, %v2599
      %v2702 = vmul.f32 %v2600, %v2600
      %2703 = vmatprep.subr.mxu0 0.0
      %2704 = vmatpush1.msra.mxu0 %v2702
      %2705 = vmatprep.subr.mxu0 0.0
      %2706 = vmatpush1.msra.mxu0 %v2701
      %2707 = vmatprep.subr.mxu0 0.0
      %2708 = vmatpush1.msra.mxu0 %v2700
      %2709 = vmatprep.subr.mxu0 0.0
      %2710 = vmatpush1.msra.mxu0 %v2699
      %2711 = vmatprep.subr.mxu0 0.0
      %2712 = vmatpush1.msra.mxu0 %v2698
      %2713 = vmatprep.subr.mxu0 0.0
      %2714 = vmatpush1.msra.mxu0 %v2697
      %2715 = vmatprep.subr.mxu0 0.0
      %2716 = vmatpush1.msra.mxu0 %v2696
      %2717 = vmatprep.subr.mxu0 0.0
      %2718 = vmatpush1.msra.mxu0 %v2695
      %2719 = vmatprep.subr.mxu0 0.0
      %2720 = vmatpush1.msra.mxu0 %v2694
      %2721 = vmatprep.subr.mxu0 0.0
      %2722 = vmatpush1.msra.mxu0 %v2693
      %2723 = vmatprep.subr.mxu0 0.0
      %2724 = vmatpush1.msra.mxu0 %v2692
      %2725 = vmatprep.subr.mxu0 0.0
      %2726 = vmatpush1.msra.mxu0 %v2691
      %2727 = vmatprep.subr.mxu0 0.0
      %2728 = vmatpush1.msra.mxu0 %v2690
      %2729 = vmatprep.subr.mxu0 0.0
      %2730 = vmatpush1.msra.mxu0 %v2689
      %2731 = vmatprep.subr.mxu0 0.0
      %2732 = vmatpush1.msra.mxu0 %v2688
      %2733 = vmatprep.subr.mxu0 0.0
      %2734 = vmatpush1.msra.mxu0 %v2687
      %2735 = vmatprep.subr.mxu0 0.0
      %2736 = vmatpush2.msra.mxu0 0.0
      %2737 = vmatprep.subr.mxu0 0.0
      %2738 = vmatpush2.msra.mxu0 0.0
      %2739 = vmatprep.subr.mxu0 0.0
      %2740 = vmatpush2.msra.mxu0 0.0
      %2741 = vmatprep.subr.mxu0 0.0
      %2742 = vmatpush2.msra.mxu0 0.0
      %2743 = vmatprep.subr.mxu0 0.0
      %2744 = vmatpush2.msra.mxu0 0.0
      %2745 = vmatprep.subr.mxu0 0.0
      %2746 = vmatpush2.msra.mxu0 0.0
      %2747 = vmatprep.subr.mxu0 0.0
      %2748 = vmatpush2.msra.mxu0 0.0
      %2749 = vmatprep.subr.mxu0 0.0
      %2750 = vmatpush2.msra.mxu0 0.0
      %2751 = vmatprep.subr.mxu0 0.0
      %2752 = vmatpush2.msra.mxu0 0.0
      %2753 = vmatprep.subr.mxu0 0.0
      %2754 = vmatpush2.msra.mxu0 0.0
      %2755 = vmatprep.subr.mxu0 0.0
      %2756 = vmatpush2.msra.mxu0 0.0
      %2757 = vmatprep.subr.mxu0 0.0
      %2758 = vmatpush2.msra.mxu0 0.0
      %2759 = vmatprep.subr.mxu0 0.0
      %2760 = vmatpush2.msra.mxu0 0.0
      %2761 = vmatprep.subr.mxu0 0.0
      %2762 = vmatpush2.msra.mxu0 0.0
      %2763 = vmatprep.subr.mxu0 0.0
      %2764 = vmatpush2.msra.mxu0 0.0
      %2765 = vmatprep.subr.mxu0 0.0
      %2766 = vmatpush2.msra.mxu0 0.0
      %2767 = vmatprep.mubr.f32.mxu0 0.0
      %2768 = vmatmul.mubr.f32.gmra.mxu0 %v347
      %v2769 = vpop.f32.mrf.mxu0
      %v2770 = vadd.f32 0.0, %v2769
      %v2771 = vpop.f32.mrf.mxu0
      %2772 = vdwg.mxu0
      %v2773 = vmul.f32 %v2421, %v2585
      %v2774 = vmul.f32 %v2422, %v2586
      %v2775 = vmul.f32 %v2423, %v2587
      %v2776 = vmul.f32 %v2424, %v2588
      %v2777 = vmul.f32 %v2425, %v2589
      %v2778 = vmul.f32 %v2426, %v2590
      %v2779 = vmul.f32 %v2427, %v2591
      %v2780 = vmul.f32 %v2428, %v2592
      %v2781 = vmul.f32 %v2429, %v2593
      %v2782 = vmul.f32 %v2430, %v2594
      %v2783 = vmul.f32 %v2431, %v2595
      %v2784 = vmul.f32 %v2432, %v2596
      %v2785 = vmul.f32 %v2433, %v2597
      %v2786 = vmul.f32 %v2434, %v2598
      %v2787 = vmul.f32 %v2435, %v2599
      %v2788 = vmul.f32 %v2436, %v2600
      %2789 = vmatprep.subr.mxu0 0.0
      %2790 = vmatpush1.msra.mxu0 %v2788
      %2791 = vmatprep.subr.mxu0 0.0
      %2792 = vmatpush1.msra.mxu0 %v2787
      %2793 = vmatprep.subr.mxu0 0.0
      %2794 = vmatpush1.msra.mxu0 %v2786
      %2795 = vmatprep.subr.mxu0 0.0
      %2796 = vmatpush1.msra.mxu0 %v2785
      %2797 = vmatprep.subr.mxu0 0.0
      %2798 = vmatpush1.msra.mxu0 %v2784
      %2799 = vmatprep.subr.mxu0 0.0
      %2800 = vmatpush1.msra.mxu0 %v2783
      %2801 = vmatprep.subr.mxu0 0.0
      %2802 = vmatpush1.msra.mxu0 %v2782
      %2803 = vmatprep.subr.mxu0 0.0
      %2804 = vmatpush1.msra.mxu0 %v2781
      %2805 = vmatprep.subr.mxu0 0.0
      %2806 = vmatpush1.msra.mxu0 %v2780
      %2807 = vmatprep.subr.mxu0 0.0
      %2808 = vmatpush1.msra.mxu0 %v2779
      %2809 = vmatprep.subr.mxu0 0.0
      %2810 = vmatpush1.msra.mxu0 %v2778
      %2811 = vmatprep.subr.mxu0 0.0
      %2812 = vmatpush1.msra.mxu0 %v2777
      %2813 = vmatprep.subr.mxu0 0.0
      %2814 = vmatpush1.msra.mxu0 %v2776
      %2815 = vmatprep.subr.mxu0 0.0
      %2816 = vmatpush1.msra.mxu0 %v2775
      %2817 = vmatprep.subr.mxu0 0.0
      %2818 = vmatpush1.msra.mxu0 %v2774
      %2819 = vmatprep.subr.mxu0 0.0
      %2820 = vmatpush1.msra.mxu0 %v2773
      %2821 = vmatprep.subr.mxu0 0.0
      %2822 = vmatpush2.msra.mxu0 0.0
      %2823 = vmatprep.subr.mxu0 0.0
      %2824 = vmatpush2.msra.mxu0 0.0
      %2825 = vmatprep.subr.mxu0 0.0
      %2826 = vmatpush2.msra.mxu0 0.0
      %2827 = vmatprep.subr.mxu0 0.0
      %2828 = vmatpush2.msra.mxu0 0.0
      %2829 = vmatprep.subr.mxu0 0.0
      %2830 = vmatpush2.msra.mxu0 0.0
      %2831 = vmatprep.subr.mxu0 0.0
      %2832 = vmatpush2.msra.mxu0 0.0
      %2833 = vmatprep.subr.mxu0 0.0
      %2834 = vmatpush2.msra.mxu0 0.0
      %2835 = vmatprep.subr.mxu0 0.0
      %2836 = vmatpush2.msra.mxu0 0.0
      %2837 = vmatprep.subr.mxu0 0.0
      %2838 = vmatpush2.msra.mxu0 0.0
      %2839 = vmatprep.subr.mxu0 0.0
      %2840 = vmatpush2.msra.mxu0 0.0
      %2841 = vmatprep.subr.mxu0 0.0
      %2842 = vmatpush2.msra.mxu0 0.0
      %2843 = vmatprep.subr.mxu0 0.0
      %2844 = vmatpush2.msra.mxu0 0.0
      %2845 = vmatprep.subr.mxu0 0.0
      %2846 = vmatpush2.msra.mxu0 0.0
      %2847 = vmatprep.subr.mxu0 0.0
      %2848 = vmatpush2.msra.mxu0 0.0
      %2849 = vmatprep.subr.mxu0 0.0
      %2850 = vmatpush2.msra.mxu0 0.0
      %2851 = vmatprep.subr.mxu0 0.0
      %2852 = vmatpush2.msra.mxu0 0.0
      %2853 = vmatprep.mubr.f32.mxu0 0.0
      %2854 = vmatmul.mubr.f32.gmra.mxu0 %v347
      %v2855 = vpop.f32.mrf.mxu0
      %v2856 = vadd.f32 0.0, %v2855
      %v2857 = vpop.f32.mrf.mxu0
      %2858 = vdwg.mxu0
      %v2859 = vadd.f32 %v2684, 1e-10
      %v2860 = vrsqrt.pop %v2859
      %v2861 = vadd.f32 %v2770, 1e-10
      %v2862 = vrsqrt.pop %v2861
      %v2863 = vmul.f32 %v2860, %v2860
      %v2865 = vrot.slane %v2863, 7
      %v2867 = vmul.f32 %v2684, %v2865
      %v2868 = vmul.f32 %v2862, %v2862
      %v2870 = vrot.slane %v2868, 7
      %v2872 = vmul.f32 %v2770, %v2870
      %v2873 = vadd.f32 %v2867, %v2872
      %v2874 = vmul.f32 %v2860, %v2862
      %v2876 = vrot.slane %v2874, 7
      %v2878 = vmul.f32 %v2856, %v2876
      %v2879 = vmul.f32 %v2878, 2.0
      %v2880 = vsub.f32 %v2873, %v2879
      %v2881 = vadd.f32 %v2260, %v2880
      %2882 = vadd.xlane.f32.xlu0 %v2272
      %v2883 = vpop.xlane.xlu0 %2882
      %vm2884 = vcmask 1041409
      %v2885 = vsel %vm2884, %v2881, 0.0
      %2886 = vadd.xlane.f32.xlu0 %v2885
      %v2887 = vpop.xlane.xlu0 %2886
      %p2888 = scmp.eq.s32.totalorder %s24, 0
      // Predicated region
      $region37: #{vae_loss.2} parent=35 // pred_check
        %p2889 = pneg %p2888
      $region38: #{vae_loss.2} parent=35 // pred_check_branch
        %2891 = sbr.rel (%p2889) target = $region40
      $region39: #{vae_loss.2} parent=35 // pred_region
        %vm2892 = vcmask 0
        %2893 = vst.msk [vmem:[%s324] sm:$0x1] %vm2892, 0.0
        %2894 = vst.msk [vmem:[%s330] sm:$0x1] %vm2892, 0.0
      $region40: #{vae_loss.2} parent=35 // pred_fallthru
        _
      %v2895 = vld [vmem:[%s324] sm:$0x1]
      %v2896 = vadd.f32 %v2895, %v2883
      %vm2897 = vcmask 0
      %2898 = vst.msk [vmem:[%s324] sm:$0x1] %vm2897, %v2896
      %v2899 = vld [vmem:[%s330] sm:$0x1]
      %v2901 = vlaneseq
      %v2902 = vshrl.u32 %v2901, 7
      %v2903 = vsub.s32 1, %v2902
      %v2904 = vrot.slane %v2887, %v2903
      %v2906 = vadd.f32 %v2899, %v2904
      %2907 = vst.msk [vmem:[%s330] sm:$0x1] %vm2897, %v2906
      %p2908 = scmp.lt.s32.totalorder %s22, 1
      %s2909 = scalar_select %p2908, %s22, 1
      %p2910 = scmp.lt.s32.totalorder %s23, 0
      %s2911 = scalar_select %p2910, %s23, 0
      %s2912 = sadd.s32 %s2911, %s2909
      %s2913 = scalar_lea.vmem %s4, %s2912
      %p2914 = scmp.lt.s32.totalorder %s22, 1
      %s2915 = scalar_select %p2914, %s22, 1
      %p2916 = scmp.lt.s32.totalorder %s23, 0
      %s2917 = scalar_select %p2916, %s23, 0
      %s2918 = sadd.s32 %s2917, %s2915
      %s2919 = scalar_lea.vmem %s5, %s2918
      // Predicated region
      $region41: #{vae_loss.2} parent=35 // pred_check
        %p2920 = pneg %p158
      $region42: #{vae_loss.2} parent=35 // pred_check_branch
        %2922 = sbr.rel (%p2920) target = $region44
      $region43: #{vae_loss.2} parent=35 // pred_region
        _
      $region44: #{vae_loss.2} parent=35 // pred_fallthru
        _
      // Predicated region
      $region45: #{vae_loss.2} parent=35 // pred_check
        %p2923 = pneg %p186
      $region46: #{vae_loss.2} parent=35 // pred_check_branch
        %2925 = sbr.rel (%p2923) target = $region48
      $region47: #{vae_loss.2} parent=35 // pred_region
        _
      $region48: #{vae_loss.2} parent=35 // pred_fallthru
        _
    $region36: #{vae_loss.2} parent=5 // pred_fallthru
      _
    %p2926 = scmp.le.s32.totalorder 2, %s12
    // Predicated region
    $region49: #{vae_loss.2} parent=5 // pred_check
      %p2927 = pneg %p2926
    $region50: #{vae_loss.2} parent=5 // pred_check_branch
      %2929 = sbr.rel (%p2927) target = $region52
    $region51: #{vae_loss.2} parent=5 // pred_region
      %s2930 = ssub.s32 %s12, 2
      // Predicated region
      $region53: #{vae_loss.2} parent=51 // pred_check
        %p2931 = pneg %p164
      $region54: #{vae_loss.2} parent=51 // pred_check_branch
        %2933 = sbr.rel (%p2931) target = $region56
      $region55: #{vae_loss.2} parent=51 // pred_region
        %p2934 = scmp.lt.s32.totalorder %s25, 1
        %s2935 = scalar_select %p2934, %s25, 1
        %p2936 = scmp.lt.s32.totalorder %s26, 0
        %s2937 = scalar_select %p2936, %s26, 0
        %s2938 = sadd.s32 %s2937, %s2935
        %s2939 = scalar_lea.vmem %s4, %s2938
      $region56: #{vae_loss.2} parent=51 // pred_fallthru
        _
      // Predicated region
      $region57: #{vae_loss.2} parent=51 // pred_check
        %p2940 = pneg %p192
      $region58: #{vae_loss.2} parent=51 // pred_check_branch
        %2942 = sbr.rel (%p2940) target = $region60
      $region59: #{vae_loss.2} parent=51 // pred_region
        %p2943 = scmp.lt.s32.totalorder %s25, 1
        %s2944 = scalar_select %p2943, %s25, 1
        %p2945 = scmp.lt.s32.totalorder %s26, 0
        %s2946 = scalar_select %p2945, %s26, 0
        %s2947 = sadd.s32 %s2946, %s2944
        %s2948 = scalar_lea.vmem %s5, %s2947
      $region60: #{vae_loss.2} parent=51 // pred_fallthru
        _
    $region52: #{vae_loss.2} parent=5 // pred_fallthru
      _
  $region6: #{vae_loss.2} parent=0 // loop_footer
    %s16 = sadd.s32 1, %s12
  $region7: #{vae_loss.2} parent=0 // loop_footer_branch
    %11 = sbr.rel target = $region3
  $region8: #{vae_loss.2} parent=0 // loop_exit
    _

</llo_original>
